<compile_context>
chip_gen: v7x
topology: tpu7x:2x2x1
jax: 0.10.0
libtpu: 0.0.40
codegen_flags: <defaults>
</compile_context>

<pallas_src>
import math
import numpy as np
import jax
import jax.numpy as jnp
from jax.experimental import pallas as pl
from jax.experimental.pallas import tpu as pltpu

# ----------------------------- configuration -----------------------------
D_FEATURE = 4
D_MARK    = 4
D_MODEL   = 32
D_FF      = 64
MOV_AVG   = 5          # odd -> exact Autoformer-style symmetric replicate padding
N_HEADS   = 4          # heads do not change encoder AutoCorrelation math (agg is per-batch)
FACTOR    = 1
E_LAYERS  = 2
DROPOUT   = 0.1        # inference -> identity
POS       = True
BATCH     = 2
SEQ_LEN   = 8

TOP_K = max(1, int(FACTOR * math.log(SEQ_LEN)))


# ----------------------------- fused encoder kernel -----------------------------
def _gelu(x):
    # erf-based GELU matching torch.nn.functional.gelu (A&S 7.1.26 rational approx).
    # The 1/(1+p|z|) divide is pushed to the EUP (approx reciprocal) per the perf review.
    a1, a2, a3, a4, a5 = 0.254829592, -0.284496736, 1.421413741, -1.453152027, 1.061405429
    p = 0.3275911
    z = x * 0.7071067811865476
    az = jnp.abs(z)
    t = pl.reciprocal(1.0 + p * az, approx=True)
    poly = ((((a5 * t + a4) * t + a3) * t + a2) * t + a1) * t
    erf = 1.0 - poly * jnp.exp(-az * az)
    erf = jnp.where(z >= 0, erf, -erf)
    return 0.5 * x * (1.0 + erf)


def _make_encoder_kernel(B, L, D, DFF, E, top_k):
    NEG = -1e30
    BL = B * L

    def kernel(xin_ref, pe_ref, wemb_ref,
               wqkv_ref, bqkv_ref, wo_ref, bo_ref, w1_ref, w2_ref,
               dmat_ref, rcorr_ref, ragg_ref, mdiag_ref, fold_ref, expand_ref,
               bmask_ref, lanef_ref, gamma_ref, beta_ref, o_ref):
        f32 = jnp.float32

        # -------- embedding: one merged (3*Cf+Cm, D) matmul + positional encoding --------
        x = jnp.dot(xin_ref[...], wemb_ref[...], preferred_element_type=f32) + pe_ref[...]

        # host-precomputed constants (no in-kernel iota/selector builds)
        dmat   = dmat_ref[...]      # (B*L, B*L)      block-diag (I - moving_avg)
        rcorr  = rcorr_ref[...]     # (B*L*L, B*L)    [s == (t - tau) % L] per batch block
        ragg   = ragg_ref[...]      # (B*L*L, B*L)    [s == (t + tau) % L] per batch block
        mdiag  = mdiag_ref[...]     # (B*L, B*L*L)    [t' == t] per batch block
        fold   = fold_ref[...]      # (B*L*L, B*L)    folds (tau, t) rows onto tau lanes
        expand = expand_ref[...]    # (B*L, B*L*L)    spreads tau lanes over (tau, t) lanes
        lane_f = lanef_ref[...]     # (1, B*L)        global lane index as f32
        inv_d  = 1.0 / D

        for layer in range(E):
            wqkv = wqkv_ref[layer]                                  # (D, 3D)
            bqkv = bqkv_ref[layer]                                  # (1, 3D)
            wo = wo_ref[layer]                                      # (D, D)
            bo = bo_ref[layer]                                      # (1, D)
            w1 = w1_ref[layer]                                      # (D, DFF)
            w2 = w2_ref[layer]                                      # (DFF, D)

            # ---- merged Q/K/V projection: one MXU push for the whole batch ----
            qkv = jnp.dot(x, wqkv, preferred_element_type=f32) + bqkv     # (B*L, 3D)
            q = qkv[:, 0:D]
            k = qkv[:, D:2 * D]
            v = qkv[:, 2 * D:3 * D]

            # ---- AutoCorrelation mean correlation, batched over B (3 MXU pushes) ----
            # mc[b, tau] = (1/D) * sum_t <q_b[t], k_b[(t-tau)%L]>
            #            = mean over heads/channels of irfft(rfft(q)*conj(rfft(k)))
            k_exp = jnp.dot(rcorr, k, preferred_element_type=f32)          # (B*L*L, D)
            s_mat = jax.lax.dot_general(q, k_exp, (((1,), (1,)), ((), ())),
                                        preferred_element_type=f32)        # (B*L, B*L*L)
            r_row = jnp.sum(s_mat * mdiag, axis=0, keepdims=True)          # (1, B*L*L)
            mc = jnp.dot(r_row, fold, preferred_element_type=f32) * inv_d  # (1, B*L)

            # ---- per-sequence top-k delays + softmax -> per-lane weight row w_all ----
            # (iterative argmax replaces torch.topk; ties pick the largest index)
            w_all = jnp.zeros((1, BL), f32)
            cur = mc
            for b in range(B):
                bmask = bmask_ref[b:b + 1, :]                              # (1, B*L)
                vals, sels = [], []
                for _ in range(top_k):
                    cur_b = jnp.where(bmask > 0, cur, NEG)
                    m = jnp.max(cur_b, axis=1, keepdims=True)              # (1, 1)
                    idx_f = jnp.max(jnp.where(cur_b >= m, lane_f, -1.0),
                                    axis=1, keepdims=True)                 # (1, 1)
                    sel = (lane_f == idx_f).astype(f32)                    # (1, B*L) one-hot
                    vals.append(m)
                    sels.append(sel)
                    cur = jnp.where(sel > 0, NEG, cur)
                vmax = vals[0]
                for mv in vals[1:]:
                    vmax = jnp.maximum(vmax, mv)
                exps = [jnp.exp(mv - vmax) for mv in vals]
                den = exps[0]
                for e in exps[1:]:
                    den = den + e
                inv_den = pl.reciprocal(den, approx=True)                  # EUP divide
                for sel, e in zip(sels, exps):
                    w_all = w_all + sel * (e * inv_den)

            # ---- time-delay aggregation, batched over B (3 MXU pushes) ----
            # y[b, t] = sum_tau w_all[b, tau] * v_b[(t + tau) % L]
            v_exp = jnp.dot(ragg, v, preferred_element_type=f32)           # (B*L*L, D)
            wbig = jnp.dot(w_all, expand, preferred_element_type=f32)      # (1, B*L*L)
            y = jnp.dot(mdiag * wbig, v_exp, preferred_element_type=f32)   # (B*L, D)

            # ---- out projection + residual, decomp1, 1x1-conv FF, decomp2 ----
            y = jnp.dot(y, wo, preferred_element_type=f32) + bo
            s = y + x                                                      # dropout = id
            x1 = jnp.dot(dmat, s, preferred_element_type=f32)              # seasonal part
            h = _gelu(jnp.dot(x1, w1, preferred_element_type=f32))
            h = jnp.dot(h, w2, preferred_element_type=f32)
            x = jnp.dot(dmat, x1 + h, preferred_element_type=f32)

        # ---------------- final LayerNorm over the channel dim ----------------
        mu = jnp.mean(x, axis=-1, keepdims=True)
        xc = x - mu
        var = jnp.mean(xc * xc, axis=-1, keepdims=True)
        o_ref[...] = xc * jax.lax.rsqrt(var + 1e-5) * gamma_ref[...] + beta_ref[...]

    return kernel


# ----------------------------- wrapper -----------------------------
def encoder_forward(params, enc_x, enc_mark):
    B, L, Cf = enc_x.shape
    Cm = enc_mark.shape[-1]
    D = params["w_emb"].shape[1]
    DFF = params["w1"].shape[2]
    E = params["wqkv"].shape[0]

    # circular-conv taps + mark features packed along channels (layout plumbing only)
    xin = jnp.concatenate(
        [jnp.roll(enc_x, 1, axis=1), enc_x, jnp.roll(enc_x, -1, axis=1), enc_mark],
        axis=-1).reshape(B * L, 3 * Cf + Cm)

    kernel = _make_encoder_kernel(B, L, D, DFF, E, TOP_K)
    vmem = lambda: pl.BlockSpec(memory_space=pltpu.MemorySpace.VMEM)
    out_flat = pl.pallas_call(
        kernel,
        out_shape=jax.ShapeDtypeStruct((B * L, D), jnp.float32),
        in_specs=[vmem() for _ in range(19)],
        out_specs=vmem(),
    )(xin, params["pe_flat"], params["w_emb"],
      params["wqkv"], params["bqkv"], params["wo"], params["bo"],
      params["w1"], params["w2"], params["dmat_blk"],
      params["rcorr"], params["ragg"], params["mdiag"], params["fold"],
      params["expand"], params["bmask"], params["lane_f"],
      params["gamma"], params["beta"])
    return out_flat.reshape(B, L, D)


# ----------------------------- constants & params -----------------------------
def _positional_encoding(L, D):
    pe = np.zeros((L, D), np.float32)
    position = np.arange(L, dtype=np.float32)[:, None]
    div_term = np.exp(np.arange(0, D, 2, dtype=np.float32) * -(math.log(10000.0) / D))
    pe[:, 0::2] = np.sin(position * div_term)
    pe[:, 1::2] = np.cos(position * div_term)
    return pe


def _decomp_matrix(L, k):
    # seasonal = (I - A) @ x, where A is the replicate-padded moving-average operator.
    pad = (k - 1) // 2
    A = np.zeros((L, L), np.float32)
    for t in range(L):
        for j in range(k):
            s = min(max(t + j - pad, 0), L - 1)
            A[t, s] += 1.0 / k
    return np.eye(L, dtype=np.float32) - A


def _corr_constants(L):
    # Per-sequence gather/fold constants; row index j = tau*L + t.
    rcorr = np.zeros((L * L, L), np.float32)   # rcorr[j, s]   = [s  == (t - tau) % L]
    ragg = np.zeros((L * L, L), np.float32)    # ragg [j, s]   = [s  == (t + tau) % L]
    mdiag = np.zeros((L, L * L), np.float32)   # mdiag[t', j]  = [t' == t]
    fold = np.zeros((L * L, L), np.float32)    # fold [j, tau']= [tau' == tau]
    expand = np.zeros((L, L * L), np.float32)  # expand[tau, j]= 1
    for tau in range(L):
        for t in range(L):
            j = tau * L + t
            rcorr[j, (t - tau) % L] = 1.0
            ragg[j, (t + tau) % L] = 1.0
            mdiag[t, j] = 1.0
            fold[j, tau] = 1.0
            expand[tau, j] = 1.0
    return rcorr, ragg, mdiag, fold, expand


def _dense_init(key, shape, fan_in):
    return (jax.random.normal(key, shape, jnp.float32) / np.sqrt(fan_in)).astype(jnp.float32)


def init_params(key, batch):
    keys = iter(jax.random.split(key, 4 + 10 * E_LAYERS))

    conv_w = _dense_init(next(keys), (3, D_FEATURE, D_MODEL), 3 * D_FEATURE)  # [tap, Cin, D]
    w_mark = _dense_init(next(keys), (D_MARK, D_MODEL), D_MARK)
    w_emb = jnp.concatenate([conv_w[0], conv_w[1], conv_w[2], w_mark], axis=0)  # (3Cf+Cm, D)

    pe = _positional_encoding(SEQ_LEN, D_MODEL) if POS else np.zeros((SEQ_LEN, D_MODEL),
                                                                     np.float32)
    pe_flat = jnp.asarray(np.tile(pe, (batch, 1)), jnp.float32)                 # (B*L, D)

    wqkv, bqkv, wo, bo, w1, w2 = [], [], [], [], [], []
    for _ in range(E_LAYERS):
        wq = _dense_init(next(keys), (D_MODEL, D_MODEL), D_MODEL)
        wk = _dense_init(next(keys), (D_MODEL, D_MODEL), D_MODEL)
        wv = _dense_init(next(keys), (D_MODEL, D_MODEL), D_MODEL)
        wqkv.append(jnp.concatenate([wq, wk, wv], axis=1))                      # (D, 3D)
        bq = 0.02 * jax.random.normal(next(keys), (1, D_MODEL), jnp.float32)
        bk = 0.02 * jax.random.normal(next(keys), (1, D_MODEL), jnp.float32)
        bv = 0.02 * jax.random.normal(next(keys), (1, D_MODEL), jnp.float32)
        bqkv.append(jnp.concatenate([bq, bk, bv], axis=1))                      # (1, 3D)
        wo.append(_dense_init(next(keys), (D_MODEL, D_MODEL), D_MODEL))
        bo.append(0.02 * jax.random.normal(next(keys), (1, D_MODEL), jnp.float32))
        w1.append(_dense_init(next(keys), (D_MODEL, D_FF), D_MODEL))   # conv1 (1x1, no bias)
        w2.append(_dense_init(next(keys), (D_FF, D_MODEL), D_FF))      # conv2 (1x1, no bias)

    L, B = SEQ_LEN, batch
    dmat = _decomp_matrix(L, MOV_AVG)
    dmat_blk = np.kron(np.eye(B, dtype=np.float32), dmat)                       # (B*L, B*L)

    rcorr, ragg, mdiag, fold, expand = _corr_constants(L)
    eye_b = np.eye(B, dtype=np.float32)
    rcorr_blk = np.kron(eye_b, rcorr)        # (B*L*L, B*L)
    ragg_blk = np.kron(eye_b, ragg)          # (B*L*L, B*L)
    mdiag_blk = np.kron(eye_b, mdiag)        # (B*L, B*L*L)
    fold_blk = np.kron(eye_b, fold)          # (B*L*L, B*L)
    expand_blk = np.kron(eye_b, expand)      # (B*L, B*L*L)
    bmask = np.kron(eye_b, np.ones((1, L), np.float32))                         # (B, B*L)
    lane_f = np.arange(B * L, dtype=np.float32).reshape(1, B * L)               # (1, B*L)

    return {
        "w_emb": w_emb, "pe_flat": pe_flat,
        "wqkv": jnp.stack(wqkv), "bqkv": jnp.stack(bqkv),
        "wo": jnp.stack(wo), "bo": jnp.stack(bo),
        "w1": jnp.stack(w1), "w2": jnp.stack(w2),
        "dmat_blk": jnp.asarray(dmat_blk),
        "rcorr": jnp.asarray(rcorr_blk), "ragg": jnp.asarray(ragg_blk),
        "mdiag": jnp.asarray(mdiag_blk), "fold": jnp.asarray(fold_blk),
        "expand": jnp.asarray(expand_blk), "bmask": jnp.asarray(bmask),
        "lane_f": jnp.asarray(lane_f),
        "gamma": jnp.ones((1, D_MODEL), jnp.float32),
        "beta": jnp.zeros((1, D_MODEL), jnp.float32),
    }


# ----------------------------- main -----------------------------
if __name__ == "__main__":
    key = jax.random.PRNGKey(0)
    k_param, k_x, k_mark = jax.random.split(key, 3)

    params = init_params(k_param, BATCH)
    enc_x = jax.random.normal(k_x, (BATCH, SEQ_LEN, D_FEATURE), jnp.float32)
    enc_mark = jax.random.normal(k_mark, (BATCH, SEQ_LEN, D_MARK), jnp.float32)

    fwd = jax.jit(encoder_forward)
    out = jax.block_until_ready(fwd(params, enc_x, enc_mark))

    assert out.shape == (BATCH, SEQ_LEN, D_MODEL), out.shape
    assert bool(jnp.all(jnp.isfinite(out)))
    print("KERNEL_OK")
</pallas_src>

<mosaic_0001>
module attributes {stable_mosaic.version = 11 : i64} {
  func.func @kernel(%arg0: memref<16x16xf32, #tpu.memory_space<vmem>>, %arg1: memref<16x32xf32, #tpu.memory_space<vmem>>, %arg2: memref<16x32xf32, #tpu.memory_space<vmem>>, %arg3: memref<2x32x96xf32, #tpu.memory_space<vmem>>, %arg4: memref<2x1x96xf32, #tpu.memory_space<vmem>>, %arg5: memref<2x32x32xf32, #tpu.memory_space<vmem>>, %arg6: memref<2x1x32xf32, #tpu.memory_space<vmem>>, %arg7: memref<2x32x64xf32, #tpu.memory_space<vmem>>, %arg8: memref<2x64x32xf32, #tpu.memory_space<vmem>>, %arg9: memref<16x16xf32, #tpu.memory_space<vmem>>, %arg10: memref<128x16xf32, #tpu.memory_space<vmem>>, %arg11: memref<128x16xf32, #tpu.memory_space<vmem>>, %arg12: memref<16x128xf32, #tpu.memory_space<vmem>>, %arg13: memref<128x16xf32, #tpu.memory_space<vmem>>, %arg14: memref<16x128xf32, #tpu.memory_space<vmem>>, %arg15: memref<2x16xf32, #tpu.memory_space<vmem>>, %arg16: memref<1x16xf32, #tpu.memory_space<vmem>>, %arg17: memref<1x32xf32, #tpu.memory_space<vmem>>, %arg18: memref<1x32xf32, #tpu.memory_space<vmem>>, %arg19: memref<16x32xf32, #tpu.memory_space<vmem>>) attributes {dimension_semantics = [], scalar_prefetch = 0 : i64, scratch_operands = 0 : i64, tpu.core_type = #tpu.core_type<tc>} {
    %c0 = arith.constant 0 : index
    %c0_0 = arith.constant 0 : index
    %0 = vector.load %arg0[%c0, %c0_0] : memref<16x16xf32, #tpu.memory_space<vmem>>, vector<16x16xf32>
    %c0_1 = arith.constant 0 : index
    %c0_2 = arith.constant 0 : index
    %1 = vector.load %arg2[%c0_1, %c0_2] : memref<16x32xf32, #tpu.memory_space<vmem>>, vector<16x32xf32>
    %cst = arith.constant dense<0.000000e+00> : vector<16x32xf32>
    %2 = tpu.matmul %0, %1, %cst {dimension_numbers = #tpu.dot_dimension_numbers<[1], [0], [0], [1], [0, 0, 1, 1], [], []>} : vector<16x16xf32>, vector<16x32xf32>, vector<16x32xf32> -> vector<16x32xf32>
    %c0_3 = arith.constant 0 : index
    %c0_4 = arith.constant 0 : index
    %3 = vector.load %arg1[%c0_3, %c0_4] : memref<16x32xf32, #tpu.memory_space<vmem>>, vector<16x32xf32>
    %4 = arith.addf %2, %3 : vector<16x32xf32>
    %c0_5 = arith.constant 0 : index
    %c0_6 = arith.constant 0 : index
    %5 = vector.load %arg9[%c0_5, %c0_6] : memref<16x16xf32, #tpu.memory_space<vmem>>, vector<16x16xf32>
    %c0_7 = arith.constant 0 : index
    %c0_8 = arith.constant 0 : index
    %6 = vector.load %arg10[%c0_7, %c0_8] : memref<128x16xf32, #tpu.memory_space<vmem>>, vector<128x16xf32>
    %c0_9 = arith.constant 0 : index
    %c0_10 = arith.constant 0 : index
    %7 = vector.load %arg11[%c0_9, %c0_10] : memref<128x16xf32, #tpu.memory_space<vmem>>, vector<128x16xf32>
    %c0_11 = arith.constant 0 : index
    %c0_12 = arith.constant 0 : index
    %8 = vector.load %arg12[%c0_11, %c0_12] : memref<16x128xf32, #tpu.memory_space<vmem>>, vector<16x128xf32>
    %c0_13 = arith.constant 0 : index
    %c0_14 = arith.constant 0 : index
    %9 = vector.load %arg13[%c0_13, %c0_14] : memref<128x16xf32, #tpu.memory_space<vmem>>, vector<128x16xf32>
    %c0_15 = arith.constant 0 : index
    %c0_16 = arith.constant 0 : index
    %10 = vector.load %arg14[%c0_15, %c0_16] : memref<16x128xf32, #tpu.memory_space<vmem>>, vector<16x128xf32>
    %c0_17 = arith.constant 0 : index
    %c0_18 = arith.constant 0 : index
    %11 = vector.load %arg16[%c0_17, %c0_18] : memref<1x16xf32, #tpu.memory_space<vmem>>, vector<1x16xf32>
    %c0_19 = arith.constant 0 : index
    %c0_20 = arith.constant 0 : index
    %c0_21 = arith.constant 0 : index
    %12 = vector.load %arg3[%c0_19, %c0_20, %c0_21] : memref<2x32x96xf32, #tpu.memory_space<vmem>>, vector<1x32x96xf32>
    %13 = vector.shape_cast %12 : vector<1x32x96xf32> to vector<32x96xf32>
    %c0_22 = arith.constant 0 : index
    %c0_23 = arith.constant 0 : index
    %c0_24 = arith.constant 0 : index
    %14 = vector.load %arg4[%c0_22, %c0_23, %c0_24] : memref<2x1x96xf32, #tpu.memory_space<vmem>>, vector<1x1x96xf32>
    %15 = vector.shape_cast %14 : vector<1x1x96xf32> to vector<1x96xf32>
    %c0_25 = arith.constant 0 : index
    %c0_26 = arith.constant 0 : index
    %c0_27 = arith.constant 0 : index
    %16 = vector.load %arg5[%c0_25, %c0_26, %c0_27] : memref<2x32x32xf32, #tpu.memory_space<vmem>>, vector<1x32x32xf32>
    %17 = vector.shape_cast %16 : vector<1x32x32xf32> to vector<32x32xf32>
    %c0_28 = arith.constant 0 : index
    %c0_29 = arith.constant 0 : index
    %c0_30 = arith.constant 0 : index
    %18 = vector.load %arg6[%c0_28, %c0_29, %c0_30] : memref<2x1x32xf32, #tpu.memory_space<vmem>>, vector<1x1x32xf32>
    %19 = vector.shape_cast %18 : vector<1x1x32xf32> to vector<1x32xf32>
    %c0_31 = arith.constant 0 : index
    %c0_32 = arith.constant 0 : index
    %c0_33 = arith.constant 0 : index
    %20 = vector.load %arg7[%c0_31, %c0_32, %c0_33] : memref<2x32x64xf32, #tpu.memory_space<vmem>>, vector<1x32x64xf32>
    %21 = vector.shape_cast %20 : vector<1x32x64xf32> to vector<32x64xf32>
    %c0_34 = arith.constant 0 : index
    %c0_35 = arith.constant 0 : index
    %c0_36 = arith.constant 0 : index
    %22 = vector.load %arg8[%c0_34, %c0_35, %c0_36] : memref<2x64x32xf32, #tpu.memory_space<vmem>>, vector<1x64x32xf32>
    %23 = vector.shape_cast %22 : vector<1x64x32xf32> to vector<64x32xf32>
    %cst_37 = arith.constant dense<0.000000e+00> : vector<16x96xf32>
    %24 = tpu.matmul %4, %13, %cst_37 {dimension_numbers = #tpu.dot_dimension_numbers<[1], [0], [0], [1], [0, 0, 1, 1], [], []>} : vector<16x32xf32>, vector<32x96xf32>, vector<16x96xf32> -> vector<16x96xf32>
    %25 = vector.broadcast %15 : vector<1x96xf32> to vector<16x96xf32>
    %26 = arith.addf %24, %25 : vector<16x96xf32>
    %27 = vector.extract_strided_slice %26 {offsets = [0, 0], sizes = [16, 32], strides = [1, 1]} : vector<16x96xf32> to vector<16x32xf32>
    %28 = vector.extract_strided_slice %26 {offsets = [0, 32], sizes = [16, 32], strides = [1, 1]} : vector<16x96xf32> to vector<16x32xf32>
    %29 = vector.extract_strided_slice %26 {offsets = [0, 64], sizes = [16, 32], strides = [1, 1]} : vector<16x96xf32> to vector<16x32xf32>
    %cst_38 = arith.constant dense<0.000000e+00> : vector<128x32xf32>
    %30 = tpu.matmul %6, %28, %cst_38 {dimension_numbers = #tpu.dot_dimension_numbers<[1], [0], [0], [1], [0, 0, 1, 1], [], []>} : vector<128x16xf32>, vector<16x32xf32>, vector<128x32xf32> -> vector<128x32xf32>
    %cst_39 = arith.constant dense<0.000000e+00> : vector<16x128xf32>
    %31 = tpu.matmul %27, %30, %cst_39 {dimension_numbers = #tpu.dot_dimension_numbers<[1], [1], [0], [0], [0, 0, 1, 0], [], []>} : vector<16x32xf32>, vector<128x32xf32>, vector<16x128xf32> -> vector<16x128xf32>
    %32 = arith.mulf %31, %8 : vector<16x128xf32>
    %cst_40 = arith.constant dense<0.000000e+00> : vector<128xf32>
    %33 = vector.multi_reduction <add>, %32, %cst_40 [0] : vector<16x128xf32> to vector<128xf32>
    %34 = vector.shape_cast %33 : vector<128xf32> to vector<1x128xf32>
    %cst_41 = arith.constant dense<0.000000e+00> : vector<1x16xf32>
    %35 = tpu.matmul %34, %9, %cst_41 {dimension_numbers = #tpu.dot_dimension_numbers<[1], [0], [0], [1], [0, 0, 1, 1], [], []>} : vector<1x128xf32>, vector<128x16xf32>, vector<1x16xf32> -> vector<1x16xf32>
    %cst_42 = arith.constant 3.125000e-02 : f32
    %36 = vector.broadcast %cst_42 : f32 to vector<1x16xf32>
    %37 = arith.mulf %35, %36 : vector<1x16xf32>
    %cst_43 = arith.constant 0.000000e+00 : f32
    %38 = vector.broadcast %cst_43 : f32 to vector<1x16xf32>
    %c0_44 = arith.constant 0 : index
    %c0_45 = arith.constant 0 : index
    %39 = vector.load %arg15[%c0_44, %c0_45] : memref<2x16xf32, #tpu.memory_space<vmem>>, vector<1x16xf32>
    %cst_46 = arith.constant 0.000000e+00 : f32
    %40 = vector.broadcast %cst_46 : f32 to vector<1x16xf32>
    %41 = arith.cmpf ogt, %39, %40 : vector<1x16xf32>
    %cst_47 = arith.constant -1.000000e+30 : f32
    %42 = vector.broadcast %cst_47 : f32 to vector<1x16xf32>
    %43 = arith.select %41, %37, %42 : vector<1x16xi1>, vector<1x16xf32>
    %cst_48 = arith.constant dense<0xFF800000> : vector<1xf32>
    %44 = vector.multi_reduction <maximumf>, %43, %cst_48 [1] : vector<1x16xf32> to vector<1xf32>
    %45 = vector.shape_cast %44 : vector<1xf32> to vector<1x1xf32>
    %46 = vector.broadcast %45 : vector<1x1xf32> to vector<1x16xf32>
    %47 = arith.cmpf oge, %43, %46 : vector<1x16xf32>
    %cst_49 = arith.constant -1.000000e+00 : f32
    %48 = vector.broadcast %cst_49 : f32 to vector<1x16xf32>
    %49 = arith.select %47, %11, %48 : vector<1x16xi1>, vector<1x16xf32>
    %cst_50 = arith.constant dense<0xFF800000> : vector<1xf32>
    %50 = vector.multi_reduction <maximumf>, %49, %cst_50 [1] : vector<1x16xf32> to vector<1xf32>
    %51 = vector.shape_cast %50 : vector<1xf32> to vector<1x1xf32>
    %52 = vector.broadcast %51 : vector<1x1xf32> to vector<1x16xf32>
    %53 = arith.cmpf oeq, %11, %52 : vector<1x16xf32>
    %54 = arith.extui %53 : vector<1x16xi1> to vector<1x16xi32>
    %55 = arith.sitofp %54 : vector<1x16xi32> to vector<1x16xf32>
    %cst_51 = arith.constant 0.000000e+00 : f32
    %56 = vector.broadcast %cst_51 : f32 to vector<1x16xf32>
    %57 = arith.cmpf ogt, %55, %56 : vector<1x16xf32>
    %cst_52 = arith.constant -1.000000e+30 : f32
    %58 = vector.broadcast %cst_52 : f32 to vector<1x16xf32>
    %59 = arith.select %57, %58, %37 : vector<1x16xi1>, vector<1x16xf32>
    %cst_53 = arith.constant 0.000000e+00 : f32
    %60 = vector.broadcast %cst_53 : f32 to vector<1x16xf32>
    %61 = arith.cmpf ogt, %39, %60 : vector<1x16xf32>
    %cst_54 = arith.constant -1.000000e+30 : f32
    %62 = vector.broadcast %cst_54 : f32 to vector<1x16xf32>
    %63 = arith.select %61, %59, %62 : vector<1x16xi1>, vector<1x16xf32>
    %cst_55 = arith.constant dense<0xFF800000> : vector<1xf32>
    %64 = vector.multi_reduction <maximumf>, %63, %cst_55 [1] : vector<1x16xf32> to vector<1xf32>
    %65 = vector.shape_cast %64 : vector<1xf32> to vector<1x1xf32>
    %66 = vector.broadcast %65 : vector<1x1xf32> to vector<1x16xf32>
    %67 = arith.cmpf oge, %63, %66 : vector<1x16xf32>
    %cst_56 = arith.constant -1.000000e+00 : f32
    %68 = vector.broadcast %cst_56 : f32 to vector<1x16xf32>
    %69 = arith.select %67, %11, %68 : vector<1x16xi1>, vector<1x16xf32>
    %cst_57 = arith.constant dense<0xFF800000> : vector<1xf32>
    %70 = vector.multi_reduction <maximumf>, %69, %cst_57 [1] : vector<1x16xf32> to vector<1xf32>
    %71 = vector.shape_cast %70 : vector<1xf32> to vector<1x1xf32>
    %72 = vector.broadcast %71 : vector<1x1xf32> to vector<1x16xf32>
    %73 = arith.cmpf oeq, %11, %72 : vector<1x16xf32>
    %74 = arith.extui %73 : vector<1x16xi1> to vector<1x16xi32>
    %75 = arith.sitofp %74 : vector<1x16xi32> to vector<1x16xf32>
    %cst_58 = arith.constant 0.000000e+00 : f32
    %76 = vector.broadcast %cst_58 : f32 to vector<1x16xf32>
    %77 = arith.cmpf ogt, %75, %76 : vector<1x16xf32>
    %cst_59 = arith.constant -1.000000e+30 : f32
    %78 = vector.broadcast %cst_59 : f32 to vector<1x16xf32>
    %79 = arith.select %77, %78, %59 : vector<1x16xi1>, vector<1x16xf32>
    %80 = arith.maximumf %45, %65 : vector<1x1xf32>
    %81 = arith.subf %45, %80 : vector<1x1xf32>
    %82 = math.exp %81 : vector<1x1xf32>
    %83 = arith.subf %65, %80 : vector<1x1xf32>
    %84 = math.exp %83 : vector<1x1xf32>
    %85 = arith.addf %82, %84 : vector<1x1xf32>
    %86 = tpu.reciprocal %85 {approx = true} : vector<1x1xf32> -> vector<1x1xf32>
    %87 = arith.mulf %82, %86 : vector<1x1xf32>
    %88 = vector.broadcast %87 : vector<1x1xf32> to vector<1x16xf32>
    %89 = arith.mulf %55, %88 : vector<1x16xf32>
    %90 = arith.addf %38, %89 : vector<1x16xf32>
    %91 = arith.mulf %84, %86 : vector<1x1xf32>
    %92 = vector.broadcast %91 : vector<1x1xf32> to vector<1x16xf32>
    %93 = arith.mulf %75, %92 : vector<1x16xf32>
    %94 = arith.addf %90, %93 : vector<1x16xf32>
    %c1 = arith.constant 1 : index
    %c0_60 = arith.constant 0 : index
    %95 = vector.load %arg15[%c1, %c0_60] : memref<2x16xf32, #tpu.memory_space<vmem>>, vector<1x16xf32>
    %cst_61 = arith.constant 0.000000e+00 : f32
    %96 = vector.broadcast %cst_61 : f32 to vector<1x16xf32>
    %97 = arith.cmpf ogt, %95, %96 : vector<1x16xf32>
    %cst_62 = arith.constant -1.000000e+30 : f32
    %98 = vector.broadcast %cst_62 : f32 to vector<1x16xf32>
    %99 = arith.select %97, %79, %98 : vector<1x16xi1>, vector<1x16xf32>
    %cst_63 = arith.constant dense<0xFF800000> : vector<1xf32>
    %100 = vector.multi_reduction <maximumf>, %99, %cst_63 [1] : vector<1x16xf32> to vector<1xf32>
    %101 = vector.shape_cast %100 : vector<1xf32> to vector<1x1xf32>
    %102 = vector.broadcast %101 : vector<1x1xf32> to vector<1x16xf32>
    %103 = arith.cmpf oge, %99, %102 : vector<1x16xf32>
    %cst_64 = arith.constant -1.000000e+00 : f32
    %104 = vector.broadcast %cst_64 : f32 to vector<1x16xf32>
    %105 = arith.select %103, %11, %104 : vector<1x16xi1>, vector<1x16xf32>
    %cst_65 = arith.constant dense<0xFF800000> : vector<1xf32>
    %106 = vector.multi_reduction <maximumf>, %105, %cst_65 [1] : vector<1x16xf32> to vector<1xf32>
    %107 = vector.shape_cast %106 : vector<1xf32> to vector<1x1xf32>
    %108 = vector.broadcast %107 : vector<1x1xf32> to vector<1x16xf32>
    %109 = arith.cmpf oeq, %11, %108 : vector<1x16xf32>
    %110 = arith.extui %109 : vector<1x16xi1> to vector<1x16xi32>
    %111 = arith.sitofp %110 : vector<1x16xi32> to vector<1x16xf32>
    %cst_66 = arith.constant 0.000000e+00 : f32
    %112 = vector.broadcast %cst_66 : f32 to vector<1x16xf32>
    %113 = arith.cmpf ogt, %111, %112 : vector<1x16xf32>
    %cst_67 = arith.constant -1.000000e+30 : f32
    %114 = vector.broadcast %cst_67 : f32 to vector<1x16xf32>
    %115 = arith.select %113, %114, %79 : vector<1x16xi1>, vector<1x16xf32>
    %cst_68 = arith.constant 0.000000e+00 : f32
    %116 = vector.broadcast %cst_68 : f32 to vector<1x16xf32>
    %117 = arith.cmpf ogt, %95, %116 : vector<1x16xf32>
    %cst_69 = arith.constant -1.000000e+30 : f32
    %118 = vector.broadcast %cst_69 : f32 to vector<1x16xf32>
    %119 = arith.select %117, %115, %118 : vector<1x16xi1>, vector<1x16xf32>
    %cst_70 = arith.constant dense<0xFF800000> : vector<1xf32>
    %120 = vector.multi_reduction <maximumf>, %119, %cst_70 [1] : vector<1x16xf32> to vector<1xf32>
    %121 = vector.shape_cast %120 : vector<1xf32> to vector<1x1xf32>
    %122 = vector.broadcast %121 : vector<1x1xf32> to vector<1x16xf32>
    %123 = arith.cmpf oge, %119, %122 : vector<1x16xf32>
    %cst_71 = arith.constant -1.000000e+00 : f32
    %124 = vector.broadcast %cst_71 : f32 to vector<1x16xf32>
    %125 = arith.select %123, %11, %124 : vector<1x16xi1>, vector<1x16xf32>
    %cst_72 = arith.constant dense<0xFF800000> : vector<1xf32>
    %126 = vector.multi_reduction <maximumf>, %125, %cst_72 [1] : vector<1x16xf32> to vector<1xf32>
    %127 = vector.shape_cast %126 : vector<1xf32> to vector<1x1xf32>
    %128 = vector.broadcast %127 : vector<1x1xf32> to vector<1x16xf32>
    %129 = arith.cmpf oeq, %11, %128 : vector<1x16xf32>
    %130 = arith.extui %129 : vector<1x16xi1> to vector<1x16xi32>
    %131 = arith.sitofp %130 : vector<1x16xi32> to vector<1x16xf32>
    %132 = arith.maximumf %101, %121 : vector<1x1xf32>
    %133 = arith.subf %101, %132 : vector<1x1xf32>
    %134 = math.exp %133 : vector<1x1xf32>
    %135 = arith.subf %121, %132 : vector<1x1xf32>
    %136 = math.exp %135 : vector<1x1xf32>
    %137 = arith.addf %134, %136 : vector<1x1xf32>
    %138 = tpu.reciprocal %137 {approx = true} : vector<1x1xf32> -> vector<1x1xf32>
    %139 = arith.mulf %134, %138 : vector<1x1xf32>
    %140 = vector.broadcast %139 : vector<1x1xf32> to vector<1x16xf32>
    %141 = arith.mulf %111, %140 : vector<1x16xf32>
    %142 = arith.addf %94, %141 : vector<1x16xf32>
    %143 = arith.mulf %136, %138 : vector<1x1xf32>
    %144 = vector.broadcast %143 : vector<1x1xf32> to vector<1x16xf32>
    %145 = arith.mulf %131, %144 : vector<1x16xf32>
    %146 = arith.addf %142, %145 : vector<1x16xf32>
    %cst_73 = arith.constant dense<0.000000e+00> : vector<128x32xf32>
    %147 = tpu.matmul %7, %29, %cst_73 {dimension_numbers = #tpu.dot_dimension_numbers<[1], [0], [0], [1], [0, 0, 1, 1], [], []>} : vector<128x16xf32>, vector<16x32xf32>, vector<128x32xf32> -> vector<128x32xf32>
    %cst_74 = arith.constant dense<0.000000e+00> : vector<1x128xf32>
    %148 = tpu.matmul %146, %10, %cst_74 {dimension_numbers = #tpu.dot_dimension_numbers<[1], [0], [0], [1], [0, 0, 1, 1], [], []>} : vector<1x16xf32>, vector<16x128xf32>, vector<1x128xf32> -> vector<1x128xf32>
    %149 = vector.broadcast %148 : vector<1x128xf32> to vector<16x128xf32>
    %150 = arith.mulf %8, %149 : vector<16x128xf32>
    %cst_75 = arith.constant dense<0.000000e+00> : vector<16x32xf32>
    %151 = tpu.matmul %150, %147, %cst_75 {dimension_numbers = #tpu.dot_dimension_numbers<[1], [0], [0], [1], [0, 0, 1, 1], [], []>} : vector<16x128xf32>, vector<128x32xf32>, vector<16x32xf32> -> vector<16x32xf32>
    %cst_76 = arith.constant dense<0.000000e+00> : vector<16x32xf32>
    %152 = tpu.matmul %151, %17, %cst_76 {dimension_numbers = #tpu.dot_dimension_numbers<[1], [0], [0], [1], [0, 0, 1, 1], [], []>} : vector<16x32xf32>, vector<32x32xf32>, vector<16x32xf32> -> vector<16x32xf32>
    %153 = vector.broadcast %19 : vector<1x32xf32> to vector<16x32xf32>
    %154 = arith.addf %152, %153 : vector<16x32xf32>
    %155 = arith.addf %154, %4 : vector<16x32xf32>
    %cst_77 = arith.constant dense<0.000000e+00> : vector<16x32xf32>
    %156 = tpu.matmul %5, %155, %cst_77 {dimension_numbers = #tpu.dot_dimension_numbers<[1], [0], [0], [1], [0, 0, 1, 1], [], []>} : vector<16x16xf32>, vector<16x32xf32>, vector<16x32xf32> -> vector<16x32xf32>
    %cst_78 = arith.constant dense<0.000000e+00> : vector<16x64xf32>
    %157 = tpu.matmul %156, %21, %cst_78 {dimension_numbers = #tpu.dot_dimension_numbers<[1], [0], [0], [1], [0, 0, 1, 1], [], []>} : vector<16x32xf32>, vector<32x64xf32>, vector<16x64xf32> -> vector<16x64xf32>
    %cst_79 = arith.constant 0.707106769 : f32
    %158 = vector.broadcast %cst_79 : f32 to vector<16x64xf32>
    %159 = arith.mulf %157, %158 : vector<16x64xf32>
    %160 = math.absf %159 : vector<16x64xf32>
    %cst_80 = arith.constant 0.327591091 : f32
    %161 = vector.broadcast %cst_80 : f32 to vector<16x64xf32>
    %162 = arith.mulf %161, %160 : vector<16x64xf32>
    %cst_81 = arith.constant 1.000000e+00 : f32
    %163 = vector.broadcast %cst_81 : f32 to vector<16x64xf32>
    %164 = arith.addf %163, %162 : vector<16x64xf32>
    %165 = tpu.reciprocal %164 {approx = true} : vector<16x64xf32> -> vector<16x64xf32>
    %cst_82 = arith.constant 1.06140542 : f32
    %166 = vector.broadcast %cst_82 : f32 to vector<16x64xf32>
    %167 = arith.mulf %166, %165 : vector<16x64xf32>
    %cst_83 = arith.constant -1.45315206 : f32
    %168 = vector.broadcast %cst_83 : f32 to vector<16x64xf32>
    %169 = arith.addf %167, %168 : vector<16x64xf32>
    %170 = arith.mulf %169, %165 : vector<16x64xf32>
    %cst_84 = arith.constant 1.42141378 : f32
    %171 = vector.broadcast %cst_84 : f32 to vector<16x64xf32>
    %172 = arith.addf %170, %171 : vector<16x64xf32>
    %173 = arith.mulf %172, %165 : vector<16x64xf32>
    %cst_85 = arith.constant -0.284496725 : f32
    %174 = vector.broadcast %cst_85 : f32 to vector<16x64xf32>
    %175 = arith.addf %173, %174 : vector<16x64xf32>
    %176 = arith.mulf %175, %165 : vector<16x64xf32>
    %cst_86 = arith.constant 0.254829586 : f32
    %177 = vector.broadcast %cst_86 : f32 to vector<16x64xf32>
    %178 = arith.addf %176, %177 : vector<16x64xf32>
    %179 = arith.mulf %178, %165 : vector<16x64xf32>
    %cst_87 = arith.constant 0.000000e+00 : f32
    %180 = vector.broadcast %cst_87 : f32 to vector<16x64xf32>
    %181 = arith.subf %180, %160 : vector<16x64xf32>
    %182 = arith.mulf %181, %160 : vector<16x64xf32>
    %183 = math.exp %182 : vector<16x64xf32>
    %184 = arith.mulf %179, %183 : vector<16x64xf32>
    %cst_88 = arith.constant 1.000000e+00 : f32
    %185 = vector.broadcast %cst_88 : f32 to vector<16x64xf32>
    %186 = arith.subf %185, %184 : vector<16x64xf32>
    %cst_89 = arith.constant 0.000000e+00 : f32
    %187 = vector.broadcast %cst_89 : f32 to vector<16x64xf32>
    %188 = arith.cmpf oge, %159, %187 : vector<16x64xf32>
    %cst_90 = arith.constant 0.000000e+00 : f32
    %189 = vector.broadcast %cst_90 : f32 to vector<16x64xf32>
    %190 = arith.subf %189, %186 : vector<16x64xf32>
    %191 = arith.select %188, %186, %190 : vector<16x64xi1>, vector<16x64xf32>
    %cst_91 = arith.constant 5.000000e-01 : f32
    %192 = vector.broadcast %cst_91 : f32 to vector<16x64xf32>
    %193 = arith.mulf %192, %157 : vector<16x64xf32>
    %cst_92 = arith.constant 1.000000e+00 : f32
    %194 = vector.broadcast %cst_92 : f32 to vector<16x64xf32>
    %195 = arith.addf %194, %191 : vector<16x64xf32>
    %196 = arith.mulf %193, %195 : vector<16x64xf32>
    %cst_93 = arith.constant dense<0.000000e+00> : vector<16x32xf32>
    %197 = tpu.matmul %196, %23, %cst_93 {dimension_numbers = #tpu.dot_dimension_numbers<[1], [0], [0], [1], [0, 0, 1, 1], [], []>} : vector<16x64xf32>, vector<64x32xf32>, vector<16x32xf32> -> vector<16x32xf32>
    %198 = arith.addf %156, %197 : vector<16x32xf32>
    %cst_94 = arith.constant dense<0.000000e+00> : vector<16x32xf32>
    %199 = tpu.matmul %5, %198, %cst_94 {dimension_numbers = #tpu.dot_dimension_numbers<[1], [0], [0], [1], [0, 0, 1, 1], [], []>} : vector<16x16xf32>, vector<16x32xf32>, vector<16x32xf32> -> vector<16x32xf32>
    %c1_95 = arith.constant 1 : index
    %c0_96 = arith.constant 0 : index
    %c0_97 = arith.constant 0 : index
    %200 = vector.load %arg3[%c1_95, %c0_96, %c0_97] : memref<2x32x96xf32, #tpu.memory_space<vmem>>, vector<1x32x96xf32>
    %201 = vector.shape_cast %200 : vector<1x32x96xf32> to vector<32x96xf32>
    %c1_98 = arith.constant 1 : index
    %c0_99 = arith.constant 0 : index
    %c0_100 = arith.constant 0 : index
    %202 = vector.load %arg4[%c1_98, %c0_99, %c0_100] : memref<2x1x96xf32, #tpu.memory_space<vmem>>, vector<1x1x96xf32>
    %203 = vector.shape_cast %202 : vector<1x1x96xf32> to vector<1x96xf32>
    %c1_101 = arith.constant 1 : index
    %c0_102 = arith.constant 0 : index
    %c0_103 = arith.constant 0 : index
    %204 = vector.load %arg5[%c1_101, %c0_102, %c0_103] : memref<2x32x32xf32, #tpu.memory_space<vmem>>, vector<1x32x32xf32>
    %205 = vector.shape_cast %204 : vector<1x32x32xf32> to vector<32x32xf32>
    %c1_104 = arith.constant 1 : index
    %c0_105 = arith.constant 0 : index
    %c0_106 = arith.constant 0 : index
    %206 = vector.load %arg6[%c1_104, %c0_105, %c0_106] : memref<2x1x32xf32, #tpu.memory_space<vmem>>, vector<1x1x32xf32>
    %207 = vector.shape_cast %206 : vector<1x1x32xf32> to vector<1x32xf32>
    %c1_107 = arith.constant 1 : index
    %c0_108 = arith.constant 0 : index
    %c0_109 = arith.constant 0 : index
    %208 = vector.load %arg7[%c1_107, %c0_108, %c0_109] : memref<2x32x64xf32, #tpu.memory_space<vmem>>, vector<1x32x64xf32>
    %209 = vector.shape_cast %208 : vector<1x32x64xf32> to vector<32x64xf32>
    %c1_110 = arith.constant 1 : index
    %c0_111 = arith.constant 0 : index
    %c0_112 = arith.constant 0 : index
    %210 = vector.load %arg8[%c1_110, %c0_111, %c0_112] : memref<2x64x32xf32, #tpu.memory_space<vmem>>, vector<1x64x32xf32>
    %211 = vector.shape_cast %210 : vector<1x64x32xf32> to vector<64x32xf32>
    %cst_113 = arith.constant dense<0.000000e+00> : vector<16x96xf32>
    %212 = tpu.matmul %199, %201, %cst_113 {dimension_numbers = #tpu.dot_dimension_numbers<[1], [0], [0], [1], [0, 0, 1, 1], [], []>} : vector<16x32xf32>, vector<32x96xf32>, vector<16x96xf32> -> vector<16x96xf32>
    %213 = vector.broadcast %203 : vector<1x96xf32> to vector<16x96xf32>
    %214 = arith.addf %212, %213 : vector<16x96xf32>
    %215 = vector.extract_strided_slice %214 {offsets = [0, 0], sizes = [16, 32], strides = [1, 1]} : vector<16x96xf32> to vector<16x32xf32>
    %216 = vector.extract_strided_slice %214 {offsets = [0, 32], sizes = [16, 32], strides = [1, 1]} : vector<16x96xf32> to vector<16x32xf32>
    %217 = vector.extract_strided_slice %214 {offsets = [0, 64], sizes = [16, 32], strides = [1, 1]} : vector<16x96xf32> to vector<16x32xf32>
    %cst_114 = arith.constant dense<0.000000e+00> : vector<128x32xf32>
    %218 = tpu.matmul %6, %216, %cst_114 {dimension_numbers = #tpu.dot_dimension_numbers<[1], [0], [0], [1], [0, 0, 1, 1], [], []>} : vector<128x16xf32>, vector<16x32xf32>, vector<128x32xf32> -> vector<128x32xf32>
    %cst_115 = arith.constant dense<0.000000e+00> : vector<16x128xf32>
    %219 = tpu.matmul %215, %218, %cst_115 {dimension_numbers = #tpu.dot_dimension_numbers<[1], [1], [0], [0], [0, 0, 1, 0], [], []>} : vector<16x32xf32>, vector<128x32xf32>, vector<16x128xf32> -> vector<16x128xf32>
    %220 = arith.mulf %219, %8 : vector<16x128xf32>
    %cst_116 = arith.constant dense<0.000000e+00> : vector<128xf32>
    %221 = vector.multi_reduction <add>, %220, %cst_116 [0] : vector<16x128xf32> to vector<128xf32>
    %222 = vector.shape_cast %221 : vector<128xf32> to vector<1x128xf32>
    %cst_117 = arith.constant dense<0.000000e+00> : vector<1x16xf32>
    %223 = tpu.matmul %222, %9, %cst_117 {dimension_numbers = #tpu.dot_dimension_numbers<[1], [0], [0], [1], [0, 0, 1, 1], [], []>} : vector<1x128xf32>, vector<128x16xf32>, vector<1x16xf32> -> vector<1x16xf32>
    %cst_118 = arith.constant 3.125000e-02 : f32
    %224 = vector.broadcast %cst_118 : f32 to vector<1x16xf32>
    %225 = arith.mulf %223, %224 : vector<1x16xf32>
    %cst_119 = arith.constant 0.000000e+00 : f32
    %226 = vector.broadcast %cst_119 : f32 to vector<1x16xf32>
    %c0_120 = arith.constant 0 : index
    %c0_121 = arith.constant 0 : index
    %227 = vector.load %arg15[%c0_120, %c0_121] : memref<2x16xf32, #tpu.memory_space<vmem>>, vector<1x16xf32>
    %cst_122 = arith.constant 0.000000e+00 : f32
    %228 = vector.broadcast %cst_122 : f32 to vector<1x16xf32>
    %229 = arith.cmpf ogt, %227, %228 : vector<1x16xf32>
    %cst_123 = arith.constant -1.000000e+30 : f32
    %230 = vector.broadcast %cst_123 : f32 to vector<1x16xf32>
    %231 = arith.select %229, %225, %230 : vector<1x16xi1>, vector<1x16xf32>
    %cst_124 = arith.constant dense<0xFF800000> : vector<1xf32>
    %232 = vector.multi_reduction <maximumf>, %231, %cst_124 [1] : vector<1x16xf32> to vector<1xf32>
    %233 = vector.shape_cast %232 : vector<1xf32> to vector<1x1xf32>
    %234 = vector.broadcast %233 : vector<1x1xf32> to vector<1x16xf32>
    %235 = arith.cmpf oge, %231, %234 : vector<1x16xf32>
    %cst_125 = arith.constant -1.000000e+00 : f32
    %236 = vector.broadcast %cst_125 : f32 to vector<1x16xf32>
    %237 = arith.select %235, %11, %236 : vector<1x16xi1>, vector<1x16xf32>
    %cst_126 = arith.constant dense<0xFF800000> : vector<1xf32>
    %238 = vector.multi_reduction <maximumf>, %237, %cst_126 [1] : vector<1x16xf32> to vector<1xf32>
    %239 = vector.shape_cast %238 : vector<1xf32> to vector<1x1xf32>
    %240 = vector.broadcast %239 : vector<1x1xf32> to vector<1x16xf32>
    %241 = arith.cmpf oeq, %11, %240 : vector<1x16xf32>
    %242 = arith.extui %241 : vector<1x16xi1> to vector<1x16xi32>
    %243 = arith.sitofp %242 : vector<1x16xi32> to vector<1x16xf32>
    %cst_127 = arith.constant 0.000000e+00 : f32
    %244 = vector.broadcast %cst_127 : f32 to vector<1x16xf32>
    %245 = arith.cmpf ogt, %243, %244 : vector<1x16xf32>
    %cst_128 = arith.constant -1.000000e+30 : f32
    %246 = vector.broadcast %cst_128 : f32 to vector<1x16xf32>
    %247 = arith.select %245, %246, %225 : vector<1x16xi1>, vector<1x16xf32>
    %cst_129 = arith.constant 0.000000e+00 : f32
    %248 = vector.broadcast %cst_129 : f32 to vector<1x16xf32>
    %249 = arith.cmpf ogt, %227, %248 : vector<1x16xf32>
    %cst_130 = arith.constant -1.000000e+30 : f32
    %250 = vector.broadcast %cst_130 : f32 to vector<1x16xf32>
    %251 = arith.select %249, %247, %250 : vector<1x16xi1>, vector<1x16xf32>
    %cst_131 = arith.constant dense<0xFF800000> : vector<1xf32>
    %252 = vector.multi_reduction <maximumf>, %251, %cst_131 [1] : vector<1x16xf32> to vector<1xf32>
    %253 = vector.shape_cast %252 : vector<1xf32> to vector<1x1xf32>
    %254 = vector.broadcast %253 : vector<1x1xf32> to vector<1x16xf32>
    %255 = arith.cmpf oge, %251, %254 : vector<1x16xf32>
    %cst_132 = arith.constant -1.000000e+00 : f32
    %256 = vector.broadcast %cst_132 : f32 to vector<1x16xf32>
    %257 = arith.select %255, %11, %256 : vector<1x16xi1>, vector<1x16xf32>
    %cst_133 = arith.constant dense<0xFF800000> : vector<1xf32>
    %258 = vector.multi_reduction <maximumf>, %257, %cst_133 [1] : vector<1x16xf32> to vector<1xf32>
    %259 = vector.shape_cast %258 : vector<1xf32> to vector<1x1xf32>
    %260 = vector.broadcast %259 : vector<1x1xf32> to vector<1x16xf32>
    %261 = arith.cmpf oeq, %11, %260 : vector<1x16xf32>
    %262 = arith.extui %261 : vector<1x16xi1> to vector<1x16xi32>
    %263 = arith.sitofp %262 : vector<1x16xi32> to vector<1x16xf32>
    %cst_134 = arith.constant 0.000000e+00 : f32
    %264 = vector.broadcast %cst_134 : f32 to vector<1x16xf32>
    %265 = arith.cmpf ogt, %263, %264 : vector<1x16xf32>
    %cst_135 = arith.constant -1.000000e+30 : f32
    %266 = vector.broadcast %cst_135 : f32 to vector<1x16xf32>
    %267 = arith.select %265, %266, %247 : vector<1x16xi1>, vector<1x16xf32>
    %268 = arith.maximumf %233, %253 : vector<1x1xf32>
    %269 = arith.subf %233, %268 : vector<1x1xf32>
    %270 = math.exp %269 : vector<1x1xf32>
    %271 = arith.subf %253, %268 : vector<1x1xf32>
    %272 = math.exp %271 : vector<1x1xf32>
    %273 = arith.addf %270, %272 : vector<1x1xf32>
    %274 = tpu.reciprocal %273 {approx = true} : vector<1x1xf32> -> vector<1x1xf32>
    %275 = arith.mulf %270, %274 : vector<1x1xf32>
    %276 = vector.broadcast %275 : vector<1x1xf32> to vector<1x16xf32>
    %277 = arith.mulf %243, %276 : vector<1x16xf32>
    %278 = arith.addf %226, %277 : vector<1x16xf32>
    %279 = arith.mulf %272, %274 : vector<1x1xf32>
    %280 = vector.broadcast %279 : vector<1x1xf32> to vector<1x16xf32>
    %281 = arith.mulf %263, %280 : vector<1x16xf32>
    %282 = arith.addf %278, %281 : vector<1x16xf32>
    %c1_136 = arith.constant 1 : index
    %c0_137 = arith.constant 0 : index
    %283 = vector.load %arg15[%c1_136, %c0_137] : memref<2x16xf32, #tpu.memory_space<vmem>>, vector<1x16xf32>
    %cst_138 = arith.constant 0.000000e+00 : f32
    %284 = vector.broadcast %cst_138 : f32 to vector<1x16xf32>
    %285 = arith.cmpf ogt, %283, %284 : vector<1x16xf32>
    %cst_139 = arith.constant -1.000000e+30 : f32
    %286 = vector.broadcast %cst_139 : f32 to vector<1x16xf32>
    %287 = arith.select %285, %267, %286 : vector<1x16xi1>, vector<1x16xf32>
    %cst_140 = arith.constant dense<0xFF800000> : vector<1xf32>
    %288 = vector.multi_reduction <maximumf>, %287, %cst_140 [1] : vector<1x16xf32> to vector<1xf32>
    %289 = vector.shape_cast %288 : vector<1xf32> to vector<1x1xf32>
    %290 = vector.broadcast %289 : vector<1x1xf32> to vector<1x16xf32>
    %291 = arith.cmpf oge, %287, %290 : vector<1x16xf32>
    %cst_141 = arith.constant -1.000000e+00 : f32
    %292 = vector.broadcast %cst_141 : f32 to vector<1x16xf32>
    %293 = arith.select %291, %11, %292 : vector<1x16xi1>, vector<1x16xf32>
    %cst_142 = arith.constant dense<0xFF800000> : vector<1xf32>
    %294 = vector.multi_reduction <maximumf>, %293, %cst_142 [1] : vector<1x16xf32> to vector<1xf32>
    %295 = vector.shape_cast %294 : vector<1xf32> to vector<1x1xf32>
    %296 = vector.broadcast %295 : vector<1x1xf32> to vector<1x16xf32>
    %297 = arith.cmpf oeq, %11, %296 : vector<1x16xf32>
    %298 = arith.extui %297 : vector<1x16xi1> to vector<1x16xi32>
    %299 = arith.sitofp %298 : vector<1x16xi32> to vector<1x16xf32>
    %cst_143 = arith.constant 0.000000e+00 : f32
    %300 = vector.broadcast %cst_143 : f32 to vector<1x16xf32>
    %301 = arith.cmpf ogt, %299, %300 : vector<1x16xf32>
    %cst_144 = arith.constant -1.000000e+30 : f32
    %302 = vector.broadcast %cst_144 : f32 to vector<1x16xf32>
    %303 = arith.select %301, %302, %267 : vector<1x16xi1>, vector<1x16xf32>
    %cst_145 = arith.constant 0.000000e+00 : f32
    %304 = vector.broadcast %cst_145 : f32 to vector<1x16xf32>
    %305 = arith.cmpf ogt, %283, %304 : vector<1x16xf32>
    %cst_146 = arith.constant -1.000000e+30 : f32
    %306 = vector.broadcast %cst_146 : f32 to vector<1x16xf32>
    %307 = arith.select %305, %303, %306 : vector<1x16xi1>, vector<1x16xf32>
    %cst_147 = arith.constant dense<0xFF800000> : vector<1xf32>
    %308 = vector.multi_reduction <maximumf>, %307, %cst_147 [1] : vector<1x16xf32> to vector<1xf32>
    %309 = vector.shape_cast %308 : vector<1xf32> to vector<1x1xf32>
    %310 = vector.broadcast %309 : vector<1x1xf32> to vector<1x16xf32>
    %311 = arith.cmpf oge, %307, %310 : vector<1x16xf32>
    %cst_148 = arith.constant -1.000000e+00 : f32
    %312 = vector.broadcast %cst_148 : f32 to vector<1x16xf32>
    %313 = arith.select %311, %11, %312 : vector<1x16xi1>, vector<1x16xf32>
    %cst_149 = arith.constant dense<0xFF800000> : vector<1xf32>
    %314 = vector.multi_reduction <maximumf>, %313, %cst_149 [1] : vector<1x16xf32> to vector<1xf32>
    %315 = vector.shape_cast %314 : vector<1xf32> to vector<1x1xf32>
    %316 = vector.broadcast %315 : vector<1x1xf32> to vector<1x16xf32>
    %317 = arith.cmpf oeq, %11, %316 : vector<1x16xf32>
    %318 = arith.extui %317 : vector<1x16xi1> to vector<1x16xi32>
    %319 = arith.sitofp %318 : vector<1x16xi32> to vector<1x16xf32>
    %320 = arith.maximumf %289, %309 : vector<1x1xf32>
    %321 = arith.subf %289, %320 : vector<1x1xf32>
    %322 = math.exp %321 : vector<1x1xf32>
    %323 = arith.subf %309, %320 : vector<1x1xf32>
    %324 = math.exp %323 : vector<1x1xf32>
    %325 = arith.addf %322, %324 : vector<1x1xf32>
    %326 = tpu.reciprocal %325 {approx = true} : vector<1x1xf32> -> vector<1x1xf32>
    %327 = arith.mulf %322, %326 : vector<1x1xf32>
    %328 = vector.broadcast %327 : vector<1x1xf32> to vector<1x16xf32>
    %329 = arith.mulf %299, %328 : vector<1x16xf32>
    %330 = arith.addf %282, %329 : vector<1x16xf32>
    %331 = arith.mulf %324, %326 : vector<1x1xf32>
    %332 = vector.broadcast %331 : vector<1x1xf32> to vector<1x16xf32>
    %333 = arith.mulf %319, %332 : vector<1x16xf32>
    %334 = arith.addf %330, %333 : vector<1x16xf32>
    %cst_150 = arith.constant dense<0.000000e+00> : vector<128x32xf32>
    %335 = tpu.matmul %7, %217, %cst_150 {dimension_numbers = #tpu.dot_dimension_numbers<[1], [0], [0], [1], [0, 0, 1, 1], [], []>} : vector<128x16xf32>, vector<16x32xf32>, vector<128x32xf32> -> vector<128x32xf32>
    %cst_151 = arith.constant dense<0.000000e+00> : vector<1x128xf32>
    %336 = tpu.matmul %334, %10, %cst_151 {dimension_numbers = #tpu.dot_dimension_numbers<[1], [0], [0], [1], [0, 0, 1, 1], [], []>} : vector<1x16xf32>, vector<16x128xf32>, vector<1x128xf32> -> vector<1x128xf32>
    %337 = vector.broadcast %336 : vector<1x128xf32> to vector<16x128xf32>
    %338 = arith.mulf %8, %337 : vector<16x128xf32>
    %cst_152 = arith.constant dense<0.000000e+00> : vector<16x32xf32>
    %339 = tpu.matmul %338, %335, %cst_152 {dimension_numbers = #tpu.dot_dimension_numbers<[1], [0], [0], [1], [0, 0, 1, 1], [], []>} : vector<16x128xf32>, vector<128x32xf32>, vector<16x32xf32> -> vector<16x32xf32>
    %cst_153 = arith.constant dense<0.000000e+00> : vector<16x32xf32>
    %340 = tpu.matmul %339, %205, %cst_153 {dimension_numbers = #tpu.dot_dimension_numbers<[1], [0], [0], [1], [0, 0, 1, 1], [], []>} : vector<16x32xf32>, vector<32x32xf32>, vector<16x32xf32> -> vector<16x32xf32>
    %341 = vector.broadcast %207 : vector<1x32xf32> to vector<16x32xf32>
    %342 = arith.addf %340, %341 : vector<16x32xf32>
    %343 = arith.addf %342, %199 : vector<16x32xf32>
    %cst_154 = arith.constant dense<0.000000e+00> : vector<16x32xf32>
    %344 = tpu.matmul %5, %343, %cst_154 {dimension_numbers = #tpu.dot_dimension_numbers<[1], [0], [0], [1], [0, 0, 1, 1], [], []>} : vector<16x16xf32>, vector<16x32xf32>, vector<16x32xf32> -> vector<16x32xf32>
    %cst_155 = arith.constant dense<0.000000e+00> : vector<16x64xf32>
    %345 = tpu.matmul %344, %209, %cst_155 {dimension_numbers = #tpu.dot_dimension_numbers<[1], [0], [0], [1], [0, 0, 1, 1], [], []>} : vector<16x32xf32>, vector<32x64xf32>, vector<16x64xf32> -> vector<16x64xf32>
    %cst_156 = arith.constant 0.707106769 : f32
    %346 = vector.broadcast %cst_156 : f32 to vector<16x64xf32>
    %347 = arith.mulf %345, %346 : vector<16x64xf32>
    %348 = math.absf %347 : vector<16x64xf32>
    %cst_157 = arith.constant 0.327591091 : f32
    %349 = vector.broadcast %cst_157 : f32 to vector<16x64xf32>
    %350 = arith.mulf %349, %348 : vector<16x64xf32>
    %cst_158 = arith.constant 1.000000e+00 : f32
    %351 = vector.broadcast %cst_158 : f32 to vector<16x64xf32>
    %352 = arith.addf %351, %350 : vector<16x64xf32>
    %353 = tpu.reciprocal %352 {approx = true} : vector<16x64xf32> -> vector<16x64xf32>
    %cst_159 = arith.constant 1.06140542 : f32
    %354 = vector.broadcast %cst_159 : f32 to vector<16x64xf32>
    %355 = arith.mulf %354, %353 : vector<16x64xf32>
    %cst_160 = arith.constant -1.45315206 : f32
    %356 = vector.broadcast %cst_160 : f32 to vector<16x64xf32>
    %357 = arith.addf %355, %356 : vector<16x64xf32>
    %358 = arith.mulf %357, %353 : vector<16x64xf32>
    %cst_161 = arith.constant 1.42141378 : f32
    %359 = vector.broadcast %cst_161 : f32 to vector<16x64xf32>
    %360 = arith.addf %358, %359 : vector<16x64xf32>
    %361 = arith.mulf %360, %353 : vector<16x64xf32>
    %cst_162 = arith.constant -0.284496725 : f32
    %362 = vector.broadcast %cst_162 : f32 to vector<16x64xf32>
    %363 = arith.addf %361, %362 : vector<16x64xf32>
    %364 = arith.mulf %363, %353 : vector<16x64xf32>
    %cst_163 = arith.constant 0.254829586 : f32
    %365 = vector.broadcast %cst_163 : f32 to vector<16x64xf32>
    %366 = arith.addf %364, %365 : vector<16x64xf32>
    %367 = arith.mulf %366, %353 : vector<16x64xf32>
    %cst_164 = arith.constant 0.000000e+00 : f32
    %368 = vector.broadcast %cst_164 : f32 to vector<16x64xf32>
    %369 = arith.subf %368, %348 : vector<16x64xf32>
    %370 = arith.mulf %369, %348 : vector<16x64xf32>
    %371 = math.exp %370 : vector<16x64xf32>
    %372 = arith.mulf %367, %371 : vector<16x64xf32>
    %cst_165 = arith.constant 1.000000e+00 : f32
    %373 = vector.broadcast %cst_165 : f32 to vector<16x64xf32>
    %374 = arith.subf %373, %372 : vector<16x64xf32>
    %cst_166 = arith.constant 0.000000e+00 : f32
    %375 = vector.broadcast %cst_166 : f32 to vector<16x64xf32>
    %376 = arith.cmpf oge, %347, %375 : vector<16x64xf32>
    %cst_167 = arith.constant 0.000000e+00 : f32
    %377 = vector.broadcast %cst_167 : f32 to vector<16x64xf32>
    %378 = arith.subf %377, %374 : vector<16x64xf32>
    %379 = arith.select %376, %374, %378 : vector<16x64xi1>, vector<16x64xf32>
    %cst_168 = arith.constant 5.000000e-01 : f32
    %380 = vector.broadcast %cst_168 : f32 to vector<16x64xf32>
    %381 = arith.mulf %380, %345 : vector<16x64xf32>
    %cst_169 = arith.constant 1.000000e+00 : f32
    %382 = vector.broadcast %cst_169 : f32 to vector<16x64xf32>
    %383 = arith.addf %382, %379 : vector<16x64xf32>
    %384 = arith.mulf %381, %383 : vector<16x64xf32>
    %cst_170 = arith.constant dense<0.000000e+00> : vector<16x32xf32>
    %385 = tpu.matmul %384, %211, %cst_170 {dimension_numbers = #tpu.dot_dimension_numbers<[1], [0], [0], [1], [0, 0, 1, 1], [], []>} : vector<16x64xf32>, vector<64x32xf32>, vector<16x32xf32> -> vector<16x32xf32>
    %386 = arith.addf %344, %385 : vector<16x32xf32>
    %cst_171 = arith.constant dense<0.000000e+00> : vector<16x32xf32>
    %387 = tpu.matmul %5, %386, %cst_171 {dimension_numbers = #tpu.dot_dimension_numbers<[1], [0], [0], [1], [0, 0, 1, 1], [], []>} : vector<16x16xf32>, vector<16x32xf32>, vector<16x32xf32> -> vector<16x32xf32>
    %cst_172 = arith.constant dense<0.000000e+00> : vector<16xf32>
    %388 = vector.multi_reduction <add>, %387, %cst_172 [1] : vector<16x32xf32> to vector<16xf32>
    %389 = vector.shape_cast %388 : vector<16xf32> to vector<16x1xf32>
    %cst_173 = arith.constant 3.200000e+01 : f32
    %390 = vector.broadcast %cst_173 : f32 to vector<16x1xf32>
    %391 = arith.divf %389, %390 : vector<16x1xf32>
    %392 = vector.broadcast %391 : vector<16x1xf32> to vector<16x32xf32>
    %393 = arith.subf %387, %392 : vector<16x32xf32>
    %394 = arith.mulf %393, %393 : vector<16x32xf32>
    %cst_174 = arith.constant dense<0.000000e+00> : vector<16xf32>
    %395 = vector.multi_reduction <add>, %394, %cst_174 [1] : vector<16x32xf32> to vector<16xf32>
    %396 = vector.shape_cast %395 : vector<16xf32> to vector<16x1xf32>
    %cst_175 = arith.constant 3.200000e+01 : f32
    %397 = vector.broadcast %cst_175 : f32 to vector<16x1xf32>
    %398 = arith.divf %396, %397 : vector<16x1xf32>
    %cst_176 = arith.constant 9.99999974E-6 : f32
    %399 = vector.broadcast %cst_176 : f32 to vector<16x1xf32>
    %400 = arith.addf %398, %399 : vector<16x1xf32>
    %401 = math.rsqrt %400 : vector<16x1xf32>
    %402 = vector.broadcast %401 : vector<16x1xf32> to vector<16x32xf32>
    %403 = arith.mulf %393, %402 : vector<16x32xf32>
    %c0_177 = arith.constant 0 : index
    %c0_178 = arith.constant 0 : index
    %404 = vector.load %arg17[%c0_177, %c0_178] : memref<1x32xf32, #tpu.memory_space<vmem>>, vector<1x32xf32>
    %405 = vector.broadcast %404 : vector<1x32xf32> to vector<16x32xf32>
    %406 = arith.mulf %403, %405 : vector<16x32xf32>
    %c0_179 = arith.constant 0 : index
    %c0_180 = arith.constant 0 : index
    %407 = vector.load %arg18[%c0_179, %c0_180] : memref<1x32xf32, #tpu.memory_space<vmem>>, vector<1x32xf32>
    %408 = vector.broadcast %407 : vector<1x32xf32> to vector<16x32xf32>
    %409 = arith.addf %406, %408 : vector<16x32xf32>
    %c0_181 = arith.constant 0 : index
    %c0_182 = arith.constant 0 : index
    %410 = vector.load %arg19[%c0_181, %c0_182] : memref<16x32xf32, #tpu.memory_space<vmem>>, vector<16x32xf32>
    tpu.vector_store %arg19[%c0_181, %c0_182], %409 {strides = array<i32>} : memref<16x32xf32, #tpu.memory_space<vmem>>, vector<16x32xf32>,
    return
  }
}

</mosaic_0001>

<llo_original>
// kernel: encoder_forward.1
$region0: #{encoder_forward.1}
  #allocation0 [shape = 'u32[]', space=smem, size = 0x4, offset = 0x4, fixed_abs, tag = 'smem constant byte address 0x4 - core index']
  #allocation1 [shape = 'u32[144,128]{1,0:T(1,128)}', space=vmem, size = 0x12000, scoped, tag = 'internal scratch']
  %s0 = inlined_call_operand.vmem [shape: f32[16,16], index: 0, kind: input, shape index: {}]
  %s1 = inlined_call_operand.vmem [shape: f32[16,32], index: 1, kind: input, shape index: {}]
  %s2 = inlined_call_operand.vmem [shape: f32[16,32], index: 2, kind: input, shape index: {}]
  %s3 = inlined_call_operand.vmem [shape: f32[2,32,96], index: 3, kind: input, shape index: {}]
  %s4 = inlined_call_operand.vmem [shape: f32[2,1,96], index: 4, kind: input, shape index: {}]
  %s5 = inlined_call_operand.vmem [shape: f32[2,32,32], index: 5, kind: input, shape index: {}]
  %s6 = inlined_call_operand.vmem [shape: f32[2,1,32], index: 6, kind: input, shape index: {}]
  %s7 = inlined_call_operand.vmem [shape: f32[2,32,64], index: 7, kind: input, shape index: {}]
  %s8 = inlined_call_operand.vmem [shape: f32[2,64,32], index: 8, kind: input, shape index: {}]
  %s9 = inlined_call_operand.vmem [shape: f32[16,16], index: 9, kind: input, shape index: {}]
  %s10 = inlined_call_operand.vmem [shape: f32[128,16], index: 10, kind: input, shape index: {}]
  %s11 = inlined_call_operand.vmem [shape: f32[128,16], index: 11, kind: input, shape index: {}]
  %s12 = inlined_call_operand.vmem [shape: f32[16,128], index: 12, kind: input, shape index: {}]
  %s13 = inlined_call_operand.vmem [shape: f32[128,16], index: 13, kind: input, shape index: {}]
  %s14 = inlined_call_operand.vmem [shape: f32[16,128], index: 14, kind: input, shape index: {}]
  %s15 = inlined_call_operand.vmem [shape: f32[2,16], index: 15, kind: input, shape index: {}]
  %s16 = inlined_call_operand.vmem [shape: f32[1,16], index: 16, kind: input, shape index: {}]
  %s17 = inlined_call_operand.vmem [shape: f32[1,32], index: 17, kind: input, shape index: {}]
  %s18 = inlined_call_operand.vmem [shape: f32[1,32], index: 18, kind: input, shape index: {}]
  %s19 = inlined_call_operand.hbm [shape: f32[16,32], index: 19, kind: output, shape index: {}]
  %s20 = sld [smem:[#allocation0]]
  $region86: #{encoder_forward.1} parent=0
    _
  %s22 = ssub.s32 1, %s20
  %s23 = scalar_select 0, %s22, %s20
  $region1: #{encoder_forward.1} parent=0
    #allocation2 [shape = 'u8[8192]{0}', space=vmem, size = 0x2000, scoped, tag = 'output window, operand 0, single buffered']
    #allocation3 [shape = 's32[1]{0}', space=sflag, size = 0x4, scoped, tag = 'scoped memory for encoder_forward.1']
    %24 = vsyncpa [#allocation3], 0
    // Predicated region
    $region2: #{encoder_forward.1} parent=1 // pred_check
      _
    $region3: #{encoder_forward.1} parent=1 // pred_check_branch
      %26 = sbr.rel (0) target = $region5
    $region4: #{encoder_forward.1} parent=1 // pred_region
      _
    $region5: #{encoder_forward.1} parent=1 // pred_fallthru
      _
    // Predicated region
    $region6: #{encoder_forward.1} parent=1 // pred_check
      _
    $region7: #{encoder_forward.1} parent=1 // pred_check_branch
      %28 = sbr.rel (0) target = $region9
    $region8: #{encoder_forward.1} parent=1 // pred_region
      _
    $region9: #{encoder_forward.1} parent=1 // pred_fallthru
      _
    // Predicated region
    $region10: #{encoder_forward.1} parent=1 // pred_check
      _
    $region11: #{encoder_forward.1} parent=1 // pred_check_branch
      %30 = sbr.rel (0) target = $region13
    $region12: #{encoder_forward.1} parent=1 // pred_region
      _
    $region13: #{encoder_forward.1} parent=1 // pred_fallthru
      _
    // Predicated region
    $region14: #{encoder_forward.1} parent=1 // pred_check
      _
    $region15: #{encoder_forward.1} parent=1 // pred_check_branch
      %32 = sbr.rel (0) target = $region17
    $region16: #{encoder_forward.1} parent=1 // pred_region
      _
    $region17: #{encoder_forward.1} parent=1 // pred_fallthru
      _
    // Predicated region
    $region18: #{encoder_forward.1} parent=1 // pred_check
      _
    $region19: #{encoder_forward.1} parent=1 // pred_check_branch
      %34 = sbr.rel (0) target = $region21
    $region20: #{encoder_forward.1} parent=1 // pred_region
      _
    $region21: #{encoder_forward.1} parent=1 // pred_fallthru
      _
    // Predicated region
    $region22: #{encoder_forward.1} parent=1 // pred_check
      _
    $region23: #{encoder_forward.1} parent=1 // pred_check_branch
      %36 = sbr.rel (0) target = $region25
    $region24: #{encoder_forward.1} parent=1 // pred_region
      _
    $region25: #{encoder_forward.1} parent=1 // pred_fallthru
      _
    // Predicated region
    $region26: #{encoder_forward.1} parent=1 // pred_check
      _
    $region27: #{encoder_forward.1} parent=1 // pred_check_branch
      %38 = sbr.rel (0) target = $region29
    $region28: #{encoder_forward.1} parent=1 // pred_region
      _
    $region29: #{encoder_forward.1} parent=1 // pred_fallthru
      _
    // Predicated region
    $region30: #{encoder_forward.1} parent=1 // pred_check
      _
    $region31: #{encoder_forward.1} parent=1 // pred_check_branch
      %40 = sbr.rel (0) target = $region33
    $region32: #{encoder_forward.1} parent=1 // pred_region
      _
    $region33: #{encoder_forward.1} parent=1 // pred_fallthru
      _
    // Predicated region
    $region34: #{encoder_forward.1} parent=1 // pred_check
      _
    $region35: #{encoder_forward.1} parent=1 // pred_check_branch
      %42 = sbr.rel (0) target = $region37
    $region36: #{encoder_forward.1} parent=1 // pred_region
      _
    $region37: #{encoder_forward.1} parent=1 // pred_fallthru
      _
    // Predicated region
    $region38: #{encoder_forward.1} parent=1 // pred_check
      _
    $region39: #{encoder_forward.1} parent=1 // pred_check_branch
      %44 = sbr.rel (0) target = $region41
    $region40: #{encoder_forward.1} parent=1 // pred_region
      _
    $region41: #{encoder_forward.1} parent=1 // pred_fallthru
      _
    // Predicated region
    $region42: #{encoder_forward.1} parent=1 // pred_check
      _
    $region43: #{encoder_forward.1} parent=1 // pred_check_branch
      %46 = sbr.rel (0) target = $region45
    $region44: #{encoder_forward.1} parent=1 // pred_region
      _
    $region45: #{encoder_forward.1} parent=1 // pred_fallthru
      _
    // Predicated region
    $region46: #{encoder_forward.1} parent=1 // pred_check
      _
    $region47: #{encoder_forward.1} parent=1 // pred_check_branch
      %48 = sbr.rel (0) target = $region49
    $region48: #{encoder_forward.1} parent=1 // pred_region
      _
    $region49: #{encoder_forward.1} parent=1 // pred_fallthru
      _
    // Predicated region
    $region50: #{encoder_forward.1} parent=1 // pred_check
      _
    $region51: #{encoder_forward.1} parent=1 // pred_check_branch
      %50 = sbr.rel (0) target = $region53
    $region52: #{encoder_forward.1} parent=1 // pred_region
      _
    $region53: #{encoder_forward.1} parent=1 // pred_fallthru
      _
    // Predicated region
    $region54: #{encoder_forward.1} parent=1 // pred_check
      _
    $region55: #{encoder_forward.1} parent=1 // pred_check_branch
      %52 = sbr.rel (0) target = $region57
    $region56: #{encoder_forward.1} parent=1 // pred_region
      _
    $region57: #{encoder_forward.1} parent=1 // pred_fallthru
      _
    // Predicated region
    $region58: #{encoder_forward.1} parent=1 // pred_check
      _
    $region59: #{encoder_forward.1} parent=1 // pred_check_branch
      %54 = sbr.rel (0) target = $region61
    $region60: #{encoder_forward.1} parent=1 // pred_region
      _
    $region61: #{encoder_forward.1} parent=1 // pred_fallthru
      _
    // Predicated region
    $region62: #{encoder_forward.1} parent=1 // pred_check
      _
    $region63: #{encoder_forward.1} parent=1 // pred_check_branch
      %56 = sbr.rel (0) target = $region65
    $region64: #{encoder_forward.1} parent=1 // pred_region
      _
    $region65: #{encoder_forward.1} parent=1 // pred_fallthru
      _
    // Predicated region
    $region66: #{encoder_forward.1} parent=1 // pred_check
      _
    $region67: #{encoder_forward.1} parent=1 // pred_check_branch
      %58 = sbr.rel (0) target = $region69
    $region68: #{encoder_forward.1} parent=1 // pred_region
      _
    $region69: #{encoder_forward.1} parent=1 // pred_fallthru
      _
    // Predicated region
    $region70: #{encoder_forward.1} parent=1 // pred_check
      _
    $region71: #{encoder_forward.1} parent=1 // pred_check_branch
      %60 = sbr.rel (0) target = $region73
    $region72: #{encoder_forward.1} parent=1 // pred_region
      _
    $region73: #{encoder_forward.1} parent=1 // pred_fallthru
      _
    // Predicated region
    $region74: #{encoder_forward.1} parent=1 // pred_check
      _
    $region75: #{encoder_forward.1} parent=1 // pred_check_branch
      %62 = sbr.rel (0) target = $region77
    $region76: #{encoder_forward.1} parent=1 // pred_region
      _
    $region77: #{encoder_forward.1} parent=1 // pred_fallthru
      _
    %v63 = vld [vmem:[%s0] sm:$0xff]
    %v64 = vld [vmem:[%s0 + $0x8] sm:$0xff]
    %v65 = vld [vmem:[%s2] sm:$0xff]
    %v66 = vld [vmem:[%s2 + $0x8] sm:$0xff]
    %v67 = vld [vmem:[%s1] sm:$0xff]
    %v68 = vld [vmem:[%s1 + $0x8] sm:$0xff]
    %vm69 = vcmask 130048
    %v71 = vsel %vm69, %v63, 0
    %v74 = vsel %vm69, %v64, 0
    %76 = vmatprep.subr.mxu0 0.0
    %77 = vmatpush1.msra.mxu0 %v65
    %78 = vmatprep.subr.mxu0 0.0
    %79 = vmatpush1.msra.mxu0 %v66
    %80 = vmatprep.subr.mxu0 0.0
    %81 = vmatpush1.msra.mxu0 0.0
    %82 = vmatprep.subr.mxu0 0.0
    %83 = vmatpush1.msra.mxu0 0.0
    %84 = vmatprep.subr.mxu0 0.0
    %85 = vmatpush1.msra.mxu0 0.0
    %86 = vmatprep.subr.mxu0 0.0
    %87 = vmatpush1.msra.mxu0 0.0
    %88 = vmatprep.subr.mxu0 0.0
    %89 = vmatpush1.msra.mxu0 0.0
    %90 = vmatprep.subr.mxu0 0.0
    %91 = vmatpush1.msra.mxu0 0.0
    %92 = vmatprep.subr.mxu0 0.0
    %93 = vmatpush1.msra.mxu0 0.0
    %94 = vmatprep.subr.mxu0 0.0
    %95 = vmatpush1.msra.mxu0 0.0
    %96 = vmatprep.subr.mxu0 0.0
    %97 = vmatpush1.msra.mxu0 0.0
    %98 = vmatprep.subr.mxu0 0.0
    %99 = vmatpush1.msra.mxu0 0.0
    %100 = vmatprep.subr.mxu0 0.0
    %101 = vmatpush1.msra.mxu0 0.0
    %102 = vmatprep.subr.mxu0 0.0
    %103 = vmatpush1.msra.mxu0 0.0
    %104 = vmatprep.subr.mxu0 0.0
    %105 = vmatpush1.msra.mxu0 0.0
    %106 = vmatprep.subr.mxu0 0.0
    %107 = vmatpush1.msra.mxu0 0.0
    %108 = vmatprep.subr.mxu0 0.0
    %109 = vmatpush1.msra.mxu0 0.0
    %110 = vmatprep.subr.mxu0 0.0
    %111 = vmatpush1.msra.mxu0 0.0
    %112 = vmatprep.subr.mxu0 0.0
    %113 = vmatpush1.msra.mxu0 0.0
    %114 = vmatprep.subr.mxu0 0.0
    %115 = vmatpush1.msra.mxu0 0.0
    %116 = vmatprep.subr.mxu0 0.0
    %117 = vmatpush1.msra.mxu0 0.0
    %118 = vmatprep.subr.mxu0 0.0
    %119 = vmatpush1.msra.mxu0 0.0
    %120 = vmatprep.subr.mxu0 0.0
    %121 = vmatpush1.msra.mxu0 0.0
    %122 = vmatprep.subr.mxu0 0.0
    %123 = vmatpush1.msra.mxu0 0.0
    %124 = vmatprep.subr.mxu0 0.0
    %125 = vmatpush1.msra.mxu0 0.0
    %126 = vmatprep.subr.mxu0 0.0
    %127 = vmatpush1.msra.mxu0 0.0
    %128 = vmatprep.subr.mxu0 0.0
    %129 = vmatpush1.msra.mxu0 0.0
    %130 = vmatprep.subr.mxu0 0.0
    %131 = vmatpush1.msra.mxu0 0.0
    %132 = vmatprep.subr.mxu0 0.0
    %133 = vmatpush1.msra.mxu0 0.0
    %134 = vmatprep.subr.mxu0 0.0
    %135 = vmatpush1.msra.mxu0 0.0
    %136 = vmatprep.subr.mxu0 0.0
    %137 = vmatpush1.msra.mxu0 0.0
    %138 = vmatprep.subr.mxu0 0.0
    %139 = vmatpush1.msra.mxu0 0.0
    %140 = vmatprep.mubr.f32.mxu0 0.0
    %141 = vmatmul.mubr.f32.gmra.mrb[0].mxu0 %v71
    %v142 = vpop.f32.mrb[0].mxu0
    %v143 = vadd.f32 %v67, %v142
    %v144 = vpop.f32.mrb[0].mxu0
    %145 = vmatprep.mubr.f32.mxu0 0.0
    %146 = vmatmul.mubr.f32.gmra.mrb[0].mxu0 %v74
    %v147 = vpop.f32.mrb[0].mxu0
    %v148 = vadd.f32 %v68, %v147
    %v149 = vpop.f32.mrb[0].mxu0
    %150 = vdwg.mxu0
    %v151 = vld [vmem:[%s9] sm:$0xff]
    %v152 = vld [vmem:[%s9 + $0x8] sm:$0xff]
    %v153 = vld [vmem:[%s10] sm:$0xff]
    %v154 = vld [vmem:[%s10 + $0x8] sm:$0xff]
    %v155 = vld [vmem:[%s10 + $0x10] sm:$0xff]
    %v156 = vld [vmem:[%s10 + $0x18] sm:$0xff]
    %v157 = vld [vmem:[%s10 + $0x20] sm:$0xff]
    %v158 = vld [vmem:[%s10 + $0x28] sm:$0xff]
    %v159 = vld [vmem:[%s10 + $0x30] sm:$0xff]
    %v160 = vld [vmem:[%s10 + $0x38] sm:$0xff]
    %v161 = vld [vmem:[%s10 + $0x40] sm:$0xff]
    %v162 = vld [vmem:[%s10 + $0x48] sm:$0xff]
    %v163 = vld [vmem:[%s10 + $0x50] sm:$0xff]
    %v164 = vld [vmem:[%s10 + $0x58] sm:$0xff]
    %v165 = vld [vmem:[%s10 + $0x60] sm:$0xff]
    %v166 = vld [vmem:[%s10 + $0x68] sm:$0xff]
    %v167 = vld [vmem:[%s10 + $0x70] sm:$0xff]
    %v168 = vld [vmem:[%s10 + $0x78] sm:$0xff]
    %v169 = vld [vmem:[%s11] sm:$0xff]
    %v170 = vld [vmem:[%s11 + $0x8] sm:$0xff]
    %v171 = vld [vmem:[%s11 + $0x10] sm:$0xff]
    %v172 = vld [vmem:[%s11 + $0x18] sm:$0xff]
    %v173 = vld [vmem:[%s11 + $0x20] sm:$0xff]
    %v174 = vld [vmem:[%s11 + $0x28] sm:$0xff]
    %v175 = vld [vmem:[%s11 + $0x30] sm:$0xff]
    %v176 = vld [vmem:[%s11 + $0x38] sm:$0xff]
    %v177 = vld [vmem:[%s11 + $0x40] sm:$0xff]
    %v178 = vld [vmem:[%s11 + $0x48] sm:$0xff]
    %v179 = vld [vmem:[%s11 + $0x50] sm:$0xff]
    %v180 = vld [vmem:[%s11 + $0x58] sm:$0xff]
    %v181 = vld [vmem:[%s11 + $0x60] sm:$0xff]
    %v182 = vld [vmem:[%s11 + $0x68] sm:$0xff]
    %v183 = vld [vmem:[%s11 + $0x70] sm:$0xff]
    %v184 = vld [vmem:[%s11 + $0x78] sm:$0xff]
    %v185 = vld [vmem:[%s12] sm:$0xff]
    %v186 = vld [vmem:[%s12 + $0x8] sm:$0xff]
    %v187 = vld [vmem:[%s13] sm:$0xff]
    %v188 = vld [vmem:[%s13 + $0x8] sm:$0xff]
    %v189 = vld [vmem:[%s13 + $0x10] sm:$0xff]
    %v190 = vld [vmem:[%s13 + $0x18] sm:$0xff]
    %v191 = vld [vmem:[%s13 + $0x20] sm:$0xff]
    %v192 = vld [vmem:[%s13 + $0x28] sm:$0xff]
    %v193 = vld [vmem:[%s13 + $0x30] sm:$0xff]
    %v194 = vld [vmem:[%s13 + $0x38] sm:$0xff]
    %v195 = vld [vmem:[%s13 + $0x40] sm:$0xff]
    %v196 = vld [vmem:[%s13 + $0x48] sm:$0xff]
    %v197 = vld [vmem:[%s13 + $0x50] sm:$0xff]
    %v198 = vld [vmem:[%s13 + $0x58] sm:$0xff]
    %v199 = vld [vmem:[%s13 + $0x60] sm:$0xff]
    %v200 = vld [vmem:[%s13 + $0x68] sm:$0xff]
    %v201 = vld [vmem:[%s13 + $0x70] sm:$0xff]
    %v202 = vld [vmem:[%s13 + $0x78] sm:$0xff]
    %v203 = vld [vmem:[%s14] sm:$0xff]
    %v204 = vld [vmem:[%s14 + $0x8] sm:$0xff]
    %v205 = vld [vmem:[%s16] sm:$0x1]
    %v206 = vld [vmem:[%s3] sm:$0xff]
    %v207 = vld [vmem:[%s3 + $0x8] sm:$0xff]
    %v208 = vld [vmem:[%s3 + $0x10] sm:$0xff]
    %v209 = vld [vmem:[%s3 + $0x18] sm:$0xff]
    %v210 = vld [vmem:[%s4] sm:$0x1]
    %v211 = vld [vmem:[%s5] sm:$0xff]
    %v212 = vld [vmem:[%s5 + $0x8] sm:$0xff]
    %v213 = vld [vmem:[%s5 + $0x10] sm:$0xff]
    %v214 = vld [vmem:[%s5 + $0x18] sm:$0xff]
    %v215 = vld [vmem:[%s6] sm:$0x1]
    %v216 = vld [vmem:[%s7] sm:$0xff]
    %v217 = vld [vmem:[%s7 + $0x8] sm:$0xff]
    %v218 = vld [vmem:[%s7 + $0x10] sm:$0xff]
    %v219 = vld [vmem:[%s7 + $0x18] sm:$0xff]
    %v220 = vld [vmem:[%s8] sm:$0xff]
    %v221 = vld [vmem:[%s8 + $0x8] sm:$0xff]
    %v222 = vld [vmem:[%s8 + $0x10] sm:$0xff]
    %v223 = vld [vmem:[%s8 + $0x18] sm:$0xff]
    %v224 = vld [vmem:[%s8 + $0x20] sm:$0xff]
    %v225 = vld [vmem:[%s8 + $0x28] sm:$0xff]
    %v226 = vld [vmem:[%s8 + $0x30] sm:$0xff]
    %v227 = vld [vmem:[%s8 + $0x38] sm:$0xff]
    %v229 = vlaneseq
    %v230 = vshrl.u32 %v229, 7
    %v231 = vsub.s32 0, %v230
    %v232 = vrot.slane %v210, %v231
    %vm234 = vcmask 261120
    %v236 = vsel %vm234, %v143, 0
    %v239 = vsel %vm234, %v148, 0
    %241 = vmatprep.subr.mxu0 0.0
    %242 = vmatpush1.msra.mxu0 %v206
    %243 = vmatprep.subr.mxu0 0.0
    %244 = vmatpush1.msra.mxu0 %v207
    %245 = vmatprep.subr.mxu0 0.0
    %246 = vmatpush1.msra.mxu0 %v208
    %247 = vmatprep.subr.mxu0 0.0
    %248 = vmatpush1.msra.mxu0 %v209
    %249 = vmatprep.subr.mxu0 0.0
    %250 = vmatpush1.msra.mxu0 0.0
    %251 = vmatprep.subr.mxu0 0.0
    %252 = vmatpush1.msra.mxu0 0.0
    %253 = vmatprep.subr.mxu0 0.0
    %254 = vmatpush1.msra.mxu0 0.0
    %255 = vmatprep.subr.mxu0 0.0
    %256 = vmatpush1.msra.mxu0 0.0
    %257 = vmatprep.subr.mxu0 0.0
    %258 = vmatpush1.msra.mxu0 0.0
    %259 = vmatprep.subr.mxu0 0.0
    %260 = vmatpush1.msra.mxu0 0.0
    %261 = vmatprep.subr.mxu0 0.0
    %262 = vmatpush1.msra.mxu0 0.0
    %263 = vmatprep.subr.mxu0 0.0
    %264 = vmatpush1.msra.mxu0 0.0
    %265 = vmatprep.subr.mxu0 0.0
    %266 = vmatpush1.msra.mxu0 0.0
    %267 = vmatprep.subr.mxu0 0.0
    %268 = vmatpush1.msra.mxu0 0.0
    %269 = vmatprep.subr.mxu0 0.0
    %270 = vmatpush1.msra.mxu0 0.0
    %271 = vmatprep.subr.mxu0 0.0
    %272 = vmatpush1.msra.mxu0 0.0
    %273 = vmatprep.subr.mxu0 0.0
    %274 = vmatpush1.msra.mxu0 0.0
    %275 = vmatprep.subr.mxu0 0.0
    %276 = vmatpush1.msra.mxu0 0.0
    %277 = vmatprep.subr.mxu0 0.0
    %278 = vmatpush1.msra.mxu0 0.0
    %279 = vmatprep.subr.mxu0 0.0
    %280 = vmatpush1.msra.mxu0 0.0
    %281 = vmatprep.subr.mxu0 0.0
    %282 = vmatpush1.msra.mxu0 0.0
    %283 = vmatprep.subr.mxu0 0.0
    %284 = vmatpush1.msra.mxu0 0.0
    %285 = vmatprep.subr.mxu0 0.0
    %286 = vmatpush1.msra.mxu0 0.0
    %287 = vmatprep.subr.mxu0 0.0
    %288 = vmatpush1.msra.mxu0 0.0
    %289 = vmatprep.subr.mxu0 0.0
    %290 = vmatpush1.msra.mxu0 0.0
    %291 = vmatprep.subr.mxu0 0.0
    %292 = vmatpush1.msra.mxu0 0.0
    %293 = vmatprep.subr.mxu0 0.0
    %294 = vmatpush1.msra.mxu0 0.0
    %295 = vmatprep.subr.mxu0 0.0
    %296 = vmatpush1.msra.mxu0 0.0
    %297 = vmatprep.subr.mxu0 0.0
    %298 = vmatpush1.msra.mxu0 0.0
    %299 = vmatprep.subr.mxu0 0.0
    %300 = vmatpush1.msra.mxu0 0.0
    %301 = vmatprep.subr.mxu0 0.0
    %302 = vmatpush1.msra.mxu0 0.0
    %303 = vmatprep.subr.mxu0 0.0
    %304 = vmatpush1.msra.mxu0 0.0
    %305 = vmatprep.mubr.f32.mxu0 0.0
    %306 = vmatmul.mubr.f32.gmra.mrb[0].mxu0 %v236
    %v307 = vpop.f32.mrb[0].mxu0
    %v308 = vadd.f32 %v232, %v307
    %v309 = vpop.f32.mrb[0].mxu0
    %310 = vmatprep.mubr.f32.mxu0 0.0
    %311 = vmatmul.mubr.f32.gmra.mrb[0].mxu0 %v239
    %v312 = vpop.f32.mrb[0].mxu0
    %v313 = vadd.f32 %v232, %v312
    %v314 = vpop.f32.mrb[0].mxu0
    %315 = vdwg.mxu0
    %318 = vrot.lane.b32.xlu0 %v308, 96
    %v319 = vpop.permute.xlu0 %318
    %320 = vrot.lane.b32.xlu0 %v313, 96
    %v321 = vpop.permute.xlu0 %320
    %v325 = vsel %vm69, %v153, 0
    %v328 = vsel %vm69, %v154, 0
    %v331 = vsel %vm69, %v155, 0
    %v334 = vsel %vm69, %v156, 0
    %v337 = vsel %vm69, %v157, 0
    %v340 = vsel %vm69, %v158, 0
    %v343 = vsel %vm69, %v159, 0
    %v346 = vsel %vm69, %v160, 0
    %v349 = vsel %vm69, %v161, 0
    %v352 = vsel %vm69, %v162, 0
    %v355 = vsel %vm69, %v163, 0
    %v358 = vsel %vm69, %v164, 0
    %v361 = vsel %vm69, %v165, 0
    %v364 = vsel %vm69, %v166, 0
    %v367 = vsel %vm69, %v167, 0
    %v370 = vsel %vm69, %v168, 0
    %372 = vmatprep.subr.mxu0 0.0
    %373 = vmatpush1.msra.mxu0 %v319
    %374 = vmatprep.subr.mxu0 0.0
    %375 = vmatpush1.msra.mxu0 %v321
    %376 = vmatprep.subr.mxu0 0.0
    %377 = vmatpush1.msra.mxu0 0.0
    %378 = vmatprep.subr.mxu0 0.0
    %379 = vmatpush1.msra.mxu0 0.0
    %380 = vmatprep.subr.mxu0 0.0
    %381 = vmatpush1.msra.mxu0 0.0
    %382 = vmatprep.subr.mxu0 0.0
    %383 = vmatpush1.msra.mxu0 0.0
    %384 = vmatprep.subr.mxu0 0.0
    %385 = vmatpush1.msra.mxu0 0.0
    %386 = vmatprep.subr.mxu0 0.0
    %387 = vmatpush1.msra.mxu0 0.0
    %388 = vmatprep.subr.mxu0 0.0
    %389 = vmatpush1.msra.mxu0 0.0
    %390 = vmatprep.subr.mxu0 0.0
    %391 = vmatpush1.msra.mxu0 0.0
    %392 = vmatprep.subr.mxu0 0.0
    %393 = vmatpush1.msra.mxu0 0.0
    %394 = vmatprep.subr.mxu0 0.0
    %395 = vmatpush1.msra.mxu0 0.0
    %396 = vmatprep.subr.mxu0 0.0
    %397 = vmatpush1.msra.mxu0 0.0
    %398 = vmatprep.subr.mxu0 0.0
    %399 = vmatpush1.msra.mxu0 0.0
    %400 = vmatprep.subr.mxu0 0.0
    %401 = vmatpush1.msra.mxu0 0.0
    %402 = vmatprep.subr.mxu0 0.0
    %403 = vmatpush1.msra.mxu0 0.0
    %404 = vmatprep.subr.mxu0 0.0
    %405 = vmatpush1.msra.mxu0 0.0
    %406 = vmatprep.subr.mxu0 0.0
    %407 = vmatpush1.msra.mxu0 0.0
    %408 = vmatprep.subr.mxu0 0.0
    %409 = vmatpush1.msra.mxu0 0.0
    %410 = vmatprep.subr.mxu0 0.0
    %411 = vmatpush1.msra.mxu0 0.0
    %412 = vmatprep.subr.mxu0 0.0
    %413 = vmatpush1.msra.mxu0 0.0
    %414 = vmatprep.subr.mxu0 0.0
    %415 = vmatpush1.msra.mxu0 0.0
    %416 = vmatprep.subr.mxu0 0.0
    %417 = vmatpush1.msra.mxu0 0.0
    %418 = vmatprep.subr.mxu0 0.0
    %419 = vmatpush1.msra.mxu0 0.0
    %420 = vmatprep.subr.mxu0 0.0
    %421 = vmatpush1.msra.mxu0 0.0
    %422 = vmatprep.subr.mxu0 0.0
    %423 = vmatpush1.msra.mxu0 0.0
    %424 = vmatprep.subr.mxu0 0.0
    %425 = vmatpush1.msra.mxu0 0.0
    %426 = vmatprep.subr.mxu0 0.0
    %427 = vmatpush1.msra.mxu0 0.0
    %428 = vmatprep.subr.mxu0 0.0
    %429 = vmatpush1.msra.mxu0 0.0
    %430 = vmatprep.subr.mxu0 0.0
    %431 = vmatpush1.msra.mxu0 0.0
    %432 = vmatprep.subr.mxu0 0.0
    %433 = vmatpush1.msra.mxu0 0.0
    %434 = vmatprep.subr.mxu0 0.0
    %435 = vmatpush1.msra.mxu0 0.0
    %436 = vmatprep.mubr.f32.mxu0 0.0
    %437 = vmatmul.mubr.f32.gmra.mrb[0].mxu0 %v325
    %v438 = vpop.f32.mrb[0].mxu0
    %v439 = vadd.f32 0.0, %v438
    %v440 = vpop.f32.mrb[0].mxu0
    %441 = vmatprep.mubr.f32.mxu0 0.0
    %442 = vmatmul.mubr.f32.gmra.mrb[0].mxu0 %v328
    %v443 = vpop.f32.mrb[0].mxu0
    %v444 = vadd.f32 0.0, %v443
    %v445 = vpop.f32.mrb[0].mxu0
    %446 = vmatprep.mubr.f32.mxu0 0.0
    %447 = vmatmul.mubr.f32.gmra.mrb[0].mxu0 %v331
    %v448 = vpop.f32.mrb[0].mxu0
    %v449 = vadd.f32 0.0, %v448
    %v450 = vpop.f32.mrb[0].mxu0
    %451 = vmatprep.mubr.f32.mxu0 0.0
    %452 = vmatmul.mubr.f32.gmra.mrb[0].mxu0 %v334
    %v453 = vpop.f32.mrb[0].mxu0
    %v454 = vadd.f32 0.0, %v453
    %v455 = vpop.f32.mrb[0].mxu0
    %456 = vmatprep.mubr.f32.mxu0 0.0
    %457 = vmatmul.mubr.f32.gmra.mrb[0].mxu0 %v337
    %v458 = vpop.f32.mrb[0].mxu0
    %v459 = vadd.f32 0.0, %v458
    %v460 = vpop.f32.mrb[0].mxu0
    %461 = vmatprep.mubr.f32.mxu0 0.0
    %462 = vmatmul.mubr.f32.gmra.mrb[0].mxu0 %v340
    %v463 = vpop.f32.mrb[0].mxu0
    %v464 = vadd.f32 0.0, %v463
    %v465 = vpop.f32.mrb[0].mxu0
    %466 = vmatprep.mubr.f32.mxu0 0.0
    %467 = vmatmul.mubr.f32.gmra.mrb[0].mxu0 %v343
    %v468 = vpop.f32.mrb[0].mxu0
    %v469 = vadd.f32 0.0, %v468
    %v470 = vpop.f32.mrb[0].mxu0
    %471 = vmatprep.mubr.f32.mxu0 0.0
    %472 = vmatmul.mubr.f32.gmra.mrb[0].mxu0 %v346
    %v473 = vpop.f32.mrb[0].mxu0
    %v474 = vadd.f32 0.0, %v473
    %v475 = vpop.f32.mrb[0].mxu0
    %476 = vmatprep.mubr.f32.mxu0 0.0
    %477 = vmatmul.mubr.f32.gmra.mrb[0].mxu0 %v349
    %v478 = vpop.f32.mrb[0].mxu0
    %v479 = vadd.f32 0.0, %v478
    %v480 = vpop.f32.mrb[0].mxu0
    %481 = vmatprep.mubr.f32.mxu0 0.0
    %482 = vmatmul.mubr.f32.gmra.mrb[0].mxu0 %v352
    %v483 = vpop.f32.mrb[0].mxu0
    %v484 = vadd.f32 0.0, %v483
    %v485 = vpop.f32.mrb[0].mxu0
    %486 = vmatprep.mubr.f32.mxu0 0.0
    %487 = vmatmul.mubr.f32.gmra.mrb[0].mxu0 %v355
    %v488 = vpop.f32.mrb[0].mxu0
    %v489 = vadd.f32 0.0, %v488
    %v490 = vpop.f32.mrb[0].mxu0
    %491 = vmatprep.mubr.f32.mxu0 0.0
    %492 = vmatmul.mubr.f32.gmra.mrb[0].mxu0 %v358
    %v493 = vpop.f32.mrb[0].mxu0
    %v494 = vadd.f32 0.0, %v493
    %v495 = vpop.f32.mrb[0].mxu0
    %496 = vmatprep.mubr.f32.mxu0 0.0
    %497 = vmatmul.mubr.f32.gmra.mrb[0].mxu0 %v361
    %v498 = vpop.f32.mrb[0].mxu0
    %v499 = vadd.f32 0.0, %v498
    %v500 = vpop.f32.mrb[0].mxu0
    %501 = vmatprep.mubr.f32.mxu0 0.0
    %502 = vmatmul.mubr.f32.gmra.mrb[0].mxu0 %v364
    %v503 = vpop.f32.mrb[0].mxu0
    %v504 = vadd.f32 0.0, %v503
    %v505 = vpop.f32.mrb[0].mxu0
    %506 = vmatprep.mubr.f32.mxu0 0.0
    %507 = vmatmul.mubr.f32.gmra.mrb[0].mxu0 %v367
    %v508 = vpop.f32.mrb[0].mxu0
    %v509 = vadd.f32 0.0, %v508
    %v510 = vpop.f32.mrb[0].mxu0
    %511 = vmatprep.mubr.f32.mxu0 0.0
    %512 = vmatmul.mubr.f32.gmra.mrb[0].mxu0 %v370
    %v513 = vpop.f32.mrb[0].mxu0
    %v514 = vadd.f32 0.0, %v513
    %v515 = vpop.f32.mrb[0].mxu0
    %516 = vdwg.mxu0
    %v517 = vsel %vm234, %v308, 0
    %v519 = vsel %vm234, %v313, 0
    %v522 = vsel %vm234, %v439, 0
    %v525 = vsel %vm234, %v444, 0
    %v528 = vsel %vm234, %v449, 0
    %v531 = vsel %vm234, %v454, 0
    %v534 = vsel %vm234, %v459, 0
    %v537 = vsel %vm234, %v464, 0
    %v540 = vsel %vm234, %v469, 0
    %v543 = vsel %vm234, %v474, 0
    %v546 = vsel %vm234, %v479, 0
    %v549 = vsel %vm234, %v484, 0
    %v552 = vsel %vm234, %v489, 0
    %v555 = vsel %vm234, %v494, 0
    %v558 = vsel %vm234, %v499, 0
    %v561 = vsel %vm234, %v504, 0
    %v564 = vsel %vm234, %v509, 0
    %v567 = vsel %vm234, %v514, 0
    %569 = vmatprep.subr.mxu0 0.0
    %570 = vmatpush1.xpose.msra.mxu0 %v522
    %571 = vmatprep.subr.mxu0 0.0
    %572 = vmatpush1.xpose.msra.mxu0 %v525
    %573 = vmatprep.subr.mxu0 0.0
    %574 = vmatpush1.xpose.msra.mxu0 %v528
    %575 = vmatprep.subr.mxu0 0.0
    %576 = vmatpush1.xpose.msra.mxu0 %v531
    %577 = vmatprep.subr.mxu0 0.0
    %578 = vmatpush1.xpose.msra.mxu0 %v534
    %579 = vmatprep.subr.mxu0 0.0
    %580 = vmatpush1.xpose.msra.mxu0 %v537
    %581 = vmatprep.subr.mxu0 0.0
    %582 = vmatpush1.xpose.msra.mxu0 %v540
    %583 = vmatprep.subr.mxu0 0.0
    %584 = vmatpush1.xpose.msra.mxu0 %v543
    %585 = vmatprep.subr.mxu0 0.0
    %586 = vmatpush1.xpose.msra.mxu0 %v546
    %587 = vmatprep.subr.mxu0 0.0
    %588 = vmatpush1.xpose.msra.mxu0 %v549
    %589 = vmatprep.subr.mxu0 0.0
    %590 = vmatpush1.xpose.msra.mxu0 %v552
    %591 = vmatprep.subr.mxu0 0.0
    %592 = vmatpush1.xpose.msra.mxu0 %v555
    %593 = vmatprep.subr.mxu0 0.0
    %594 = vmatpush1.xpose.msra.mxu0 %v558
    %595 = vmatprep.subr.mxu0 0.0
    %596 = vmatpush1.xpose.msra.mxu0 %v561
    %597 = vmatprep.subr.mxu0 0.0
    %598 = vmatpush1.xpose.msra.mxu0 %v564
    %599 = vmatprep.subr.mxu0 0.0
    %600 = vmatpush1.xpose.msra.mxu0 %v567
    %601 = vmatprep.subr.mxu0 0.0
    %602 = vmatpush1.xpose.msra.mxu0 0.0
    %603 = vmatprep.subr.mxu0 0.0
    %604 = vmatpush1.xpose.msra.mxu0 0.0
    %605 = vmatprep.subr.mxu0 0.0
    %606 = vmatpush1.xpose.msra.mxu0 0.0
    %607 = vmatprep.subr.mxu0 0.0
    %608 = vmatpush1.xpose.msra.mxu0 0.0
    %609 = vmatprep.subr.mxu0 0.0
    %610 = vmatpush1.xpose.msra.mxu0 0.0
    %611 = vmatprep.subr.mxu0 0.0
    %612 = vmatpush1.xpose.msra.mxu0 0.0
    %613 = vmatprep.subr.mxu0 0.0
    %614 = vmatpush1.xpose.msra.mxu0 0.0
    %615 = vmatprep.subr.mxu0 0.0
    %616 = vmatpush1.xpose.msra.mxu0 0.0
    %617 = vmatprep.subr.mxu0 0.0
    %618 = vmatpush1.xpose.msra.mxu0 0.0
    %619 = vmatprep.subr.mxu0 0.0
    %620 = vmatpush1.xpose.msra.mxu0 0.0
    %621 = vmatprep.subr.mxu0 0.0
    %622 = vmatpush1.xpose.msra.mxu0 0.0
    %623 = vmatprep.subr.mxu0 0.0
    %624 = vmatpush1.xpose.msra.mxu0 0.0
    %625 = vmatprep.subr.mxu0 0.0
    %626 = vmatpush1.xpose.msra.mxu0 0.0
    %627 = vmatprep.subr.mxu0 0.0
    %628 = vmatpush1.xpose.msra.mxu0 0.0
    %629 = vmatprep.subr.mxu0 0.0
    %630 = vmatpush1.xpose.msra.mxu0 0.0
    %631 = vmatprep.subr.mxu0 0.0
    %632 = vmatpush1.xpose.msra.mxu0 0.0
    %633 = vmatprep.mubr.f32.mxu0 0.0
    %634 = vmatmul.mubr.f32.gmra.mrb[0].mxu0 %v517
    %v635 = vpop.f32.mrb[0].mxu0
    %v636 = vadd.f32 0.0, %v635
    %v637 = vpop.f32.mrb[0].mxu0
    %638 = vmatprep.mubr.f32.mxu0 0.0
    %639 = vmatmul.mubr.f32.gmra.mrb[0].mxu0 %v519
    %v640 = vpop.f32.mrb[0].mxu0
    %v641 = vadd.f32 0.0, %v640
    %v642 = vpop.f32.mrb[0].mxu0
    %643 = vdwg.mxu0
    %v644 = vmul.f32 %v636, %v185
    %v645 = vmul.f32 %v641, %v186
    %v646 = vadd.f32 %v644, %v645
    %v647 = vrot.slane %v646, 4
    %v648 = vadd.f32 %v646, %v647
    %v649 = vrot.slane %v648, 2
    %v650 = vadd.f32 %v648, %v649
    %v651 = vrot.slane %v650, 1
    %v652 = vadd.f32 %v650, %v651
    %653 = vmatprep.subr.mxu0 0.0
    %654 = vmatpush1.msra.mxu0 %v187
    %655 = vmatprep.subr.mxu0 0.0
    %656 = vmatpush1.msra.mxu0 %v188
    %657 = vmatprep.subr.mxu0 0.0
    %658 = vmatpush1.msra.mxu0 %v189
    %659 = vmatprep.subr.mxu0 0.0
    %660 = vmatpush1.msra.mxu0 %v190
    %661 = vmatprep.subr.mxu0 0.0
    %662 = vmatpush1.msra.mxu0 %v191
    %663 = vmatprep.subr.mxu0 0.0
    %664 = vmatpush1.msra.mxu0 %v192
    %665 = vmatprep.subr.mxu0 0.0
    %666 = vmatpush1.msra.mxu0 %v193
    %667 = vmatprep.subr.mxu0 0.0
    %668 = vmatpush1.msra.mxu0 %v194
    %669 = vmatprep.subr.mxu0 0.0
    %670 = vmatpush1.msra.mxu0 %v195
    %671 = vmatprep.subr.mxu0 0.0
    %672 = vmatpush1.msra.mxu0 %v196
    %673 = vmatprep.subr.mxu0 0.0
    %674 = vmatpush1.msra.mxu0 %v197
    %675 = vmatprep.subr.mxu0 0.0
    %676 = vmatpush1.msra.mxu0 %v198
    %677 = vmatprep.subr.mxu0 0.0
    %678 = vmatpush1.msra.mxu0 %v199
    %679 = vmatprep.subr.mxu0 0.0
    %680 = vmatpush1.msra.mxu0 %v200
    %681 = vmatprep.subr.mxu0 0.0
    %682 = vmatpush1.msra.mxu0 %v201
    %683 = vmatprep.subr.mxu0 0.0
    %684 = vmatpush1.msra.mxu0 %v202
    %685 = vmatprep.subr.mxu0 0.0
    %686 = vmatpush1.msra.mxu0 0.0
    %687 = vmatprep.subr.mxu0 0.0
    %688 = vmatpush1.msra.mxu0 0.0
    %689 = vmatprep.subr.mxu0 0.0
    %690 = vmatpush1.msra.mxu0 0.0
    %691 = vmatprep.subr.mxu0 0.0
    %692 = vmatpush1.msra.mxu0 0.0
    %693 = vmatprep.subr.mxu0 0.0
    %694 = vmatpush1.msra.mxu0 0.0
    %695 = vmatprep.subr.mxu0 0.0
    %696 = vmatpush1.msra.mxu0 0.0
    %697 = vmatprep.subr.mxu0 0.0
    %698 = vmatpush1.msra.mxu0 0.0
    %699 = vmatprep.subr.mxu0 0.0
    %700 = vmatpush1.msra.mxu0 0.0
    %701 = vmatprep.subr.mxu0 0.0
    %702 = vmatpush1.msra.mxu0 0.0
    %703 = vmatprep.subr.mxu0 0.0
    %704 = vmatpush1.msra.mxu0 0.0
    %705 = vmatprep.subr.mxu0 0.0
    %706 = vmatpush1.msra.mxu0 0.0
    %707 = vmatprep.subr.mxu0 0.0
    %708 = vmatpush1.msra.mxu0 0.0
    %709 = vmatprep.subr.mxu0 0.0
    %710 = vmatpush1.msra.mxu0 0.0
    %711 = vmatprep.subr.mxu0 0.0
    %712 = vmatpush1.msra.mxu0 0.0
    %713 = vmatprep.subr.mxu0 0.0
    %714 = vmatpush1.msra.mxu0 0.0
    %715 = vmatprep.subr.mxu0 0.0
    %716 = vmatpush1.msra.mxu0 0.0
    %717 = vmatprep.mubr.f32.mxu0 0.0
    %718 = vmatmul.mubr.f32.gmra.mrb[0].mxu0 %v652
    %v719 = vpop.f32.mrb[0].mxu0
    %v720 = vadd.f32 0.0, %v719
    %v721 = vpop.f32.mrb[0].mxu0
    %722 = vdwg.mxu0
    %v723 = vmul.f32 %v720, 0.03125
    %v724 = vld [vmem:[%s15] sm:$0x1]
    %vm725 = vcmp.gt.f32.partialorder %v724, 0.0
    %v726 = vsel %vm725, %v723, -1e+30
    %vm727 = vcmask 122880
    %v728 = vsel %vm727, %v726, -inf
    %729 = vmax.xlane.f32.xlu0 %v728
    %v730 = vpop.xlane.xlu0 %729
    %vm731 = vcmp.ge.f32.partialorder %v726, %v730
    %v732 = vsel %vm731, %v205, -1.0
    %v733 = vsel %vm727, %v732, -inf
    %734 = vmax.xlane.f32.xlu0 %v733
    %v735 = vpop.xlane.xlu0 %734
    %vm736 = vcmp.eq.f32.partialorder %v205, %v735
    %v737 = vsel %vm736, 1, 0
    %v738 = vcvt.s32.f32 %v737
    %vm739 = vcmp.gt.f32.partialorder %v738, 0.0
    %v740 = vsel %vm739, -1e+30, %v723
    %v741 = vsel %vm725, %v740, -1e+30
    %v742 = vsel %vm727, %v741, -inf
    %743 = vmax.xlane.f32.xlu0 %v742
    %v744 = vpop.xlane.xlu0 %743
    %vm745 = vcmp.ge.f32.partialorder %v741, %v744
    %v746 = vsel %vm745, %v205, -1.0
    %v747 = vsel %vm727, %v746, -inf
    %748 = vmax.xlane.f32.xlu0 %v747
    %v749 = vpop.xlane.xlu0 %748
    %vm750 = vcmp.eq.f32.partialorder %v205, %v749
    %v751 = vsel %vm750, 1, 0
    %v752 = vcvt.s32.f32 %v751
    %vm753 = vcmp.gt.f32.partialorder %v752, 0.0
    %v754 = vsel %vm753, -1e+30, %v740
    %v755 = vmax.f32 %v730, %v744
    %v756 = vsub.f32 %v730, %v755
    %v757 = vmul.f32 %v756, 1.442695
    %v758 = vpow.pop %v757
    %v759 = vsub.f32 %v744, %v755
    %v760 = vmul.f32 %v759, 1.442695
    %v761 = vpow.pop %v760
    %v762 = vadd.f32 %v758, %v761
    %v763 = vrcp.pop %v762
    %v764 = vmul.f32 %v758, %v763
    %v765 = vmul.f32 %v738, %v764
    %v766 = vadd.f32 %v765, 0.0
    %v767 = vmul.f32 %v761, %v763
    %v768 = vmul.f32 %v752, %v767
    %v769 = vadd.f32 %v766, %v768
    %v770 = vld [vmem:[%s15 + $0x1] sm:$0x1]
    %vm771 = vcmp.gt.f32.partialorder %v770, 0.0
    %v772 = vsel %vm771, %v754, -1e+30
    %v773 = vsel %vm727, %v772, -inf
    %774 = vmax.xlane.f32.xlu0 %v773
    %v775 = vpop.xlane.xlu0 %774
    %vm776 = vcmp.ge.f32.partialorder %v772, %v775
    %v777 = vsel %vm776, %v205, -1.0
    %v778 = vsel %vm727, %v777, -inf
    %779 = vmax.xlane.f32.xlu0 %v778
    %v780 = vpop.xlane.xlu0 %779
    %vm781 = vcmp.eq.f32.partialorder %v205, %v780
    %v782 = vsel %vm781, 1, 0
    %v783 = vcvt.s32.f32 %v782
    %vm784 = vcmp.gt.f32.partialorder %v783, 0.0
    %v785 = vsel %vm784, -1e+30, %v754
    %v786 = vsel %vm771, %v785, -1e+30
    %v787 = vsel %vm727, %v786, -inf
    %788 = vmax.xlane.f32.xlu0 %v787
    %v789 = vpop.xlane.xlu0 %788
    %vm790 = vcmp.ge.f32.partialorder %v786, %v789
    %v791 = vsel %vm790, %v205, -1.0
    %v792 = vsel %vm727, %v791, -inf
    %793 = vmax.xlane.f32.xlu0 %v792
    %v794 = vpop.xlane.xlu0 %793
    %vm795 = vcmp.eq.f32.partialorder %v205, %v794
    %v796 = vsel %vm795, 1, 0
    %v797 = vcvt.s32.f32 %v796
    %v798 = vmax.f32 %v775, %v789
    %v799 = vsub.f32 %v775, %v798
    %v800 = vmul.f32 %v799, 1.442695
    %v801 = vpow.pop %v800
    %v802 = vsub.f32 %v789, %v798
    %v803 = vmul.f32 %v802, 1.442695
    %v804 = vpow.pop %v803
    %v805 = vadd.f32 %v801, %v804
    %v806 = vrcp.pop %v805
    %v807 = vmul.f32 %v801, %v806
    %v808 = vmul.f32 %v783, %v807
    %v809 = vadd.f32 %v769, %v808
    %v810 = vmul.f32 %v804, %v806
    %v811 = vmul.f32 %v797, %v810
    %v812 = vadd.f32 %v809, %v811
    %813 = vrot.lane.b32.xlu0 %v308, 64
    %v814 = vpop.permute.xlu0 %813
    %815 = vrot.lane.b32.xlu0 %v313, 64
    %v816 = vpop.permute.xlu0 %815
    %v820 = vsel %vm69, %v169, 0
    %v823 = vsel %vm69, %v170, 0
    %v826 = vsel %vm69, %v171, 0
    %v829 = vsel %vm69, %v172, 0
    %v832 = vsel %vm69, %v173, 0
    %v835 = vsel %vm69, %v174, 0
    %v838 = vsel %vm69, %v175, 0
    %v841 = vsel %vm69, %v176, 0
    %v844 = vsel %vm69, %v177, 0
    %v847 = vsel %vm69, %v178, 0
    %v850 = vsel %vm69, %v179, 0
    %v853 = vsel %vm69, %v180, 0
    %v856 = vsel %vm69, %v181, 0
    %v859 = vsel %vm69, %v182, 0
    %v862 = vsel %vm69, %v183, 0
    %v865 = vsel %vm69, %v184, 0
    %867 = vmatprep.subr.mxu0 0.0
    %868 = vmatpush1.msra.mxu0 %v814
    %869 = vmatprep.subr.mxu0 0.0
    %870 = vmatpush1.msra.mxu0 %v816
    %871 = vmatprep.subr.mxu0 0.0
    %872 = vmatpush1.msra.mxu0 0.0
    %873 = vmatprep.subr.mxu0 0.0
    %874 = vmatpush1.msra.mxu0 0.0
    %875 = vmatprep.subr.mxu0 0.0
    %876 = vmatpush1.msra.mxu0 0.0
    %877 = vmatprep.subr.mxu0 0.0
    %878 = vmatpush1.msra.mxu0 0.0
    %879 = vmatprep.subr.mxu0 0.0
    %880 = vmatpush1.msra.mxu0 0.0
    %881 = vmatprep.subr.mxu0 0.0
    %882 = vmatpush1.msra.mxu0 0.0
    %883 = vmatprep.subr.mxu0 0.0
    %884 = vmatpush1.msra.mxu0 0.0
    %885 = vmatprep.subr.mxu0 0.0
    %886 = vmatpush1.msra.mxu0 0.0
    %887 = vmatprep.subr.mxu0 0.0
    %888 = vmatpush1.msra.mxu0 0.0
    %889 = vmatprep.subr.mxu0 0.0
    %890 = vmatpush1.msra.mxu0 0.0
    %891 = vmatprep.subr.mxu0 0.0
    %892 = vmatpush1.msra.mxu0 0.0
    %893 = vmatprep.subr.mxu0 0.0
    %894 = vmatpush1.msra.mxu0 0.0
    %895 = vmatprep.subr.mxu0 0.0
    %896 = vmatpush1.msra.mxu0 0.0
    %897 = vmatprep.subr.mxu0 0.0
    %898 = vmatpush1.msra.mxu0 0.0
    %899 = vmatprep.subr.mxu0 0.0
    %900 = vmatpush1.msra.mxu0 0.0
    %901 = vmatprep.subr.mxu0 0.0
    %902 = vmatpush1.msra.mxu0 0.0
    %903 = vmatprep.subr.mxu0 0.0
    %904 = vmatpush1.msra.mxu0 0.0
    %905 = vmatprep.subr.mxu0 0.0
    %906 = vmatpush1.msra.mxu0 0.0
    %907 = vmatprep.subr.mxu0 0.0
    %908 = vmatpush1.msra.mxu0 0.0
    %909 = vmatprep.subr.mxu0 0.0
    %910 = vmatpush1.msra.mxu0 0.0
    %911 = vmatprep.subr.mxu0 0.0
    %912 = vmatpush1.msra.mxu0 0.0
    %913 = vmatprep.subr.mxu0 0.0
    %914 = vmatpush1.msra.mxu0 0.0
    %915 = vmatprep.subr.mxu0 0.0
    %916 = vmatpush1.msra.mxu0 0.0
    %917 = vmatprep.subr.mxu0 0.0
    %918 = vmatpush1.msra.mxu0 0.0
    %919 = vmatprep.subr.mxu0 0.0
    %920 = vmatpush1.msra.mxu0 0.0
    %921 = vmatprep.subr.mxu0 0.0
    %922 = vmatpush1.msra.mxu0 0.0
    %923 = vmatprep.subr.mxu0 0.0
    %924 = vmatpush1.msra.mxu0 0.0
    %925 = vmatprep.subr.mxu0 0.0
    %926 = vmatpush1.msra.mxu0 0.0
    %927 = vmatprep.subr.mxu0 0.0
    %928 = vmatpush1.msra.mxu0 0.0
    %929 = vmatprep.subr.mxu0 0.0
    %930 = vmatpush1.msra.mxu0 0.0
    %931 = vmatprep.mubr.f32.mxu0 0.0
    %932 = vmatmul.mubr.f32.gmra.mrb[0].mxu0 %v820
    %v933 = vpop.f32.mrb[0].mxu0
    %v934 = vadd.f32 0.0, %v933
    %v935 = vpop.f32.mrb[0].mxu0
    %936 = vmatprep.mubr.f32.mxu0 0.0
    %937 = vmatmul.mubr.f32.gmra.mrb[0].mxu0 %v823
    %v938 = vpop.f32.mrb[0].mxu0
    %v939 = vadd.f32 0.0, %v938
    %v940 = vpop.f32.mrb[0].mxu0
    %941 = vmatprep.mubr.f32.mxu0 0.0
    %942 = vmatmul.mubr.f32.gmra.mrb[0].mxu0 %v826
    %v943 = vpop.f32.mrb[0].mxu0
    %v944 = vadd.f32 0.0, %v943
    %v945 = vpop.f32.mrb[0].mxu0
    %946 = vmatprep.mubr.f32.mxu0 0.0
    %947 = vmatmul.mubr.f32.gmra.mrb[0].mxu0 %v829
    %v948 = vpop.f32.mrb[0].mxu0
    %v949 = vadd.f32 0.0, %v948
    %v950 = vpop.f32.mrb[0].mxu0
    %951 = vmatprep.mubr.f32.mxu0 0.0
    %952 = vmatmul.mubr.f32.gmra.mrb[0].mxu0 %v832
    %v953 = vpop.f32.mrb[0].mxu0
    %v954 = vadd.f32 0.0, %v953
    %v955 = vpop.f32.mrb[0].mxu0
    %956 = vmatprep.mubr.f32.mxu0 0.0
    %957 = vmatmul.mubr.f32.gmra.mrb[0].mxu0 %v835
    %v958 = vpop.f32.mrb[0].mxu0
    %v959 = vadd.f32 0.0, %v958
    %v960 = vpop.f32.mrb[0].mxu0
    %961 = vmatprep.mubr.f32.mxu0 0.0
    %962 = vmatmul.mubr.f32.gmra.mrb[0].mxu0 %v838
    %v963 = vpop.f32.mrb[0].mxu0
    %v964 = vadd.f32 0.0, %v963
    %v965 = vpop.f32.mrb[0].mxu0
    %966 = vmatprep.mubr.f32.mxu0 0.0
    %967 = vmatmul.mubr.f32.gmra.mrb[0].mxu0 %v841
    %v968 = vpop.f32.mrb[0].mxu0
    %v969 = vadd.f32 0.0, %v968
    %v970 = vpop.f32.mrb[0].mxu0
    %971 = vmatprep.mubr.f32.mxu0 0.0
    %972 = vmatmul.mubr.f32.gmra.mrb[0].mxu0 %v844
    %v973 = vpop.f32.mrb[0].mxu0
    %v974 = vadd.f32 0.0, %v973
    %v975 = vpop.f32.mrb[0].mxu0
    %976 = vmatprep.mubr.f32.mxu0 0.0
    %977 = vmatmul.mubr.f32.gmra.mrb[0].mxu0 %v847
    %v978 = vpop.f32.mrb[0].mxu0
    %v979 = vadd.f32 0.0, %v978
    %v980 = vpop.f32.mrb[0].mxu0
    %981 = vmatprep.mubr.f32.mxu0 0.0
    %982 = vmatmul.mubr.f32.gmra.mrb[0].mxu0 %v850
    %v983 = vpop.f32.mrb[0].mxu0
    %v984 = vadd.f32 0.0, %v983
    %v985 = vpop.f32.mrb[0].mxu0
    %986 = vmatprep.mubr.f32.mxu0 0.0
    %987 = vmatmul.mubr.f32.gmra.mrb[0].mxu0 %v853
    %v988 = vpop.f32.mrb[0].mxu0
    %v989 = vadd.f32 0.0, %v988
    %v990 = vpop.f32.mrb[0].mxu0
    %991 = vmatprep.mubr.f32.mxu0 0.0
    %992 = vmatmul.mubr.f32.gmra.mrb[0].mxu0 %v856
    %v993 = vpop.f32.mrb[0].mxu0
    %v994 = vadd.f32 0.0, %v993
    %v995 = vpop.f32.mrb[0].mxu0
    %996 = vmatprep.mubr.f32.mxu0 0.0
    %997 = vmatmul.mubr.f32.gmra.mrb[0].mxu0 %v859
    %v998 = vpop.f32.mrb[0].mxu0
    %v999 = vadd.f32 0.0, %v998
    %v1000 = vpop.f32.mrb[0].mxu0
    %1001 = vmatprep.mubr.f32.mxu0 0.0
    %1002 = vmatmul.mubr.f32.gmra.mrb[0].mxu0 %v862
    %v1003 = vpop.f32.mrb[0].mxu0
    %v1004 = vadd.f32 0.0, %v1003
    %v1005 = vpop.f32.mrb[0].mxu0
    %1006 = vmatprep.mubr.f32.mxu0 0.0
    %1007 = vmatmul.mubr.f32.gmra.mrb[0].mxu0 %v865
    %v1008 = vpop.f32.mrb[0].mxu0
    %v1009 = vadd.f32 0.0, %v1008
    %v1010 = vpop.f32.mrb[0].mxu0
    %1011 = vdwg.mxu0
    %v1013 = vsel %vm69, %v812, 0
    %1015 = vmatprep.subr.mxu0 0.0
    %1016 = vmatpush1.msra.mxu0 %v203
    %1017 = vmatprep.subr.mxu0 0.0
    %1018 = vmatpush1.msra.mxu0 %v204
    %1019 = vmatprep.subr.mxu0 0.0
    %1020 = vmatpush1.msra.mxu0 0.0
    %1021 = vmatprep.subr.mxu0 0.0
    %1022 = vmatpush1.msra.mxu0 0.0
    %1023 = vmatprep.subr.mxu0 0.0
    %1024 = vmatpush1.msra.mxu0 0.0
    %1025 = vmatprep.subr.mxu0 0.0
    %1026 = vmatpush1.msra.mxu0 0.0
    %1027 = vmatprep.subr.mxu0 0.0
    %1028 = vmatpush1.msra.mxu0 0.0
    %1029 = vmatprep.subr.mxu0 0.0
    %1030 = vmatpush1.msra.mxu0 0.0
    %1031 = vmatprep.subr.mxu0 0.0
    %1032 = vmatpush1.msra.mxu0 0.0
    %1033 = vmatprep.subr.mxu0 0.0
    %1034 = vmatpush1.msra.mxu0 0.0
    %1035 = vmatprep.subr.mxu0 0.0
    %1036 = vmatpush1.msra.mxu0 0.0
    %1037 = vmatprep.subr.mxu0 0.0
    %1038 = vmatpush1.msra.mxu0 0.0
    %1039 = vmatprep.subr.mxu0 0.0
    %1040 = vmatpush1.msra.mxu0 0.0
    %1041 = vmatprep.subr.mxu0 0.0
    %1042 = vmatpush1.msra.mxu0 0.0
    %1043 = vmatprep.subr.mxu0 0.0
    %1044 = vmatpush1.msra.mxu0 0.0
    %1045 = vmatprep.subr.mxu0 0.0
    %1046 = vmatpush1.msra.mxu0 0.0
    %1047 = vmatprep.subr.mxu0 0.0
    %1048 = vmatpush1.msra.mxu0 0.0
    %1049 = vmatprep.subr.mxu0 0.0
    %1050 = vmatpush1.msra.mxu0 0.0
    %1051 = vmatprep.subr.mxu0 0.0
    %1052 = vmatpush1.msra.mxu0 0.0
    %1053 = vmatprep.subr.mxu0 0.0
    %1054 = vmatpush1.msra.mxu0 0.0
    %1055 = vmatprep.subr.mxu0 0.0
    %1056 = vmatpush1.msra.mxu0 0.0
    %1057 = vmatprep.subr.mxu0 0.0
    %1058 = vmatpush1.msra.mxu0 0.0
    %1059 = vmatprep.subr.mxu0 0.0
    %1060 = vmatpush1.msra.mxu0 0.0
    %1061 = vmatprep.subr.mxu0 0.0
    %1062 = vmatpush1.msra.mxu0 0.0
    %1063 = vmatprep.subr.mxu0 0.0
    %1064 = vmatpush1.msra.mxu0 0.0
    %1065 = vmatprep.subr.mxu0 0.0
    %1066 = vmatpush1.msra.mxu0 0.0
    %1067 = vmatprep.subr.mxu0 0.0
    %1068 = vmatpush1.msra.mxu0 0.0
    %1069 = vmatprep.subr.mxu0 0.0
    %1070 = vmatpush1.msra.mxu0 0.0
    %1071 = vmatprep.subr.mxu0 0.0
    %1072 = vmatpush1.msra.mxu0 0.0
    %1073 = vmatprep.subr.mxu0 0.0
    %1074 = vmatpush1.msra.mxu0 0.0
    %1075 = vmatprep.subr.mxu0 0.0
    %1076 = vmatpush1.msra.mxu0 0.0
    %1077 = vmatprep.subr.mxu0 0.0
    %1078 = vmatpush1.msra.mxu0 0.0
    %1079 = vmatprep.mubr.f32.mxu0 0.0
    %1080 = vmatmul.mubr.f32.gmra.mrb[0].mxu0 %v1013
    %v1081 = vpop.f32.mrb[0].mxu0
    %v1082 = vadd.f32 0.0, %v1081
    %v1083 = vpop.f32.mrb[0].mxu0
    %1084 = vdwg.mxu0
    %v1085 = vlaneseq
    %v1086 = vshrl.u32 %v1085, 7
    %v1087 = vsub.s32 0, %v1086
    %v1088 = vrot.slane %v1082, %v1087
    %v1089 = vmul.f32 %v185, %v1088
    %v1090 = vmul.f32 %v186, %v1088
    %1091 = vmatprep.subr.mxu0 0.0
    %1092 = vmatpush1.msra.mxu0 %v934
    %1093 = vmatprep.subr.mxu0 0.0
    %1094 = vmatpush1.msra.mxu0 %v939
    %1095 = vmatprep.subr.mxu0 0.0
    %1096 = vmatpush1.msra.mxu0 %v944
    %1097 = vmatprep.subr.mxu0 0.0
    %1098 = vmatpush1.msra.mxu0 %v949
    %1099 = vmatprep.subr.mxu0 0.0
    %1100 = vmatpush1.msra.mxu0 %v954
    %1101 = vmatprep.subr.mxu0 0.0
    %1102 = vmatpush1.msra.mxu0 %v959
    %1103 = vmatprep.subr.mxu0 0.0
    %1104 = vmatpush1.msra.mxu0 %v964
    %1105 = vmatprep.subr.mxu0 0.0
    %1106 = vmatpush1.msra.mxu0 %v969
    %1107 = vmatprep.subr.mxu0 0.0
    %1108 = vmatpush1.msra.mxu0 %v974
    %1109 = vmatprep.subr.mxu0 0.0
    %1110 = vmatpush1.msra.mxu0 %v979
    %1111 = vmatprep.subr.mxu0 0.0
    %1112 = vmatpush1.msra.mxu0 %v984
    %1113 = vmatprep.subr.mxu0 0.0
    %1114 = vmatpush1.msra.mxu0 %v989
    %1115 = vmatprep.subr.mxu0 0.0
    %1116 = vmatpush1.msra.mxu0 %v994
    %1117 = vmatprep.subr.mxu0 0.0
    %1118 = vmatpush1.msra.mxu0 %v999
    %1119 = vmatprep.subr.mxu0 0.0
    %1120 = vmatpush1.msra.mxu0 %v1004
    %1121 = vmatprep.subr.mxu0 0.0
    %1122 = vmatpush1.msra.mxu0 %v1009
    %1123 = vmatprep.subr.mxu0 0.0
    %1124 = vmatpush1.msra.mxu0 0.0
    %1125 = vmatprep.subr.mxu0 0.0
    %1126 = vmatpush1.msra.mxu0 0.0
    %1127 = vmatprep.subr.mxu0 0.0
    %1128 = vmatpush1.msra.mxu0 0.0
    %1129 = vmatprep.subr.mxu0 0.0
    %1130 = vmatpush1.msra.mxu0 0.0
    %1131 = vmatprep.subr.mxu0 0.0
    %1132 = vmatpush1.msra.mxu0 0.0
    %1133 = vmatprep.subr.mxu0 0.0
    %1134 = vmatpush1.msra.mxu0 0.0
    %1135 = vmatprep.subr.mxu0 0.0
    %1136 = vmatpush1.msra.mxu0 0.0
    %1137 = vmatprep.subr.mxu0 0.0
    %1138 = vmatpush1.msra.mxu0 0.0
    %1139 = vmatprep.subr.mxu0 0.0
    %1140 = vmatpush1.msra.mxu0 0.0
    %1141 = vmatprep.subr.mxu0 0.0
    %1142 = vmatpush1.msra.mxu0 0.0
    %1143 = vmatprep.subr.mxu0 0.0
    %1144 = vmatpush1.msra.mxu0 0.0
    %1145 = vmatprep.subr.mxu0 0.0
    %1146 = vmatpush1.msra.mxu0 0.0
    %1147 = vmatprep.subr.mxu0 0.0
    %1148 = vmatpush1.msra.mxu0 0.0
    %1149 = vmatprep.subr.mxu0 0.0
    %1150 = vmatpush1.msra.mxu0 0.0
    %1151 = vmatprep.subr.mxu0 0.0
    %1152 = vmatpush1.msra.mxu0 0.0
    %1153 = vmatprep.subr.mxu0 0.0
    %1154 = vmatpush1.msra.mxu0 0.0
    %1155 = vmatprep.mubr.f32.mxu0 0.0
    %1156 = vmatmul.mubr.f32.gmra.mrb[0].mxu0 %v1089
    %v1157 = vpop.f32.mrb[0].mxu0
    %v1158 = vadd.f32 0.0, %v1157
    %v1159 = vpop.f32.mrb[0].mxu0
    %1160 = vmatprep.mubr.f32.mxu0 0.0
    %1161 = vmatmul.mubr.f32.gmra.mrb[0].mxu0 %v1090
    %v1162 = vpop.f32.mrb[0].mxu0
    %v1163 = vadd.f32 0.0, %v1162
    %v1164 = vpop.f32.mrb[0].mxu0
    %1165 = vdwg.mxu0
    %v1167 = vlaneseq
    %v1168 = vshrl.u32 %v1167, 7
    %v1169 = vsub.s32 0, %v1168
    %v1170 = vrot.slane %v215, %v1169
    %v1173 = vsel %vm234, %v1158, 0
    %v1176 = vsel %vm234, %v1163, 0
    %1178 = vmatprep.subr.mxu0 0.0
    %1179 = vmatpush1.msra.mxu0 %v211
    %1180 = vmatprep.subr.mxu0 0.0
    %1181 = vmatpush1.msra.mxu0 %v212
    %1182 = vmatprep.subr.mxu0 0.0
    %1183 = vmatpush1.msra.mxu0 %v213
    %1184 = vmatprep.subr.mxu0 0.0
    %1185 = vmatpush1.msra.mxu0 %v214
    %1186 = vmatprep.subr.mxu0 0.0
    %1187 = vmatpush1.msra.mxu0 0.0
    %1188 = vmatprep.subr.mxu0 0.0
    %1189 = vmatpush1.msra.mxu0 0.0
    %1190 = vmatprep.subr.mxu0 0.0
    %1191 = vmatpush1.msra.mxu0 0.0
    %1192 = vmatprep.subr.mxu0 0.0
    %1193 = vmatpush1.msra.mxu0 0.0
    %1194 = vmatprep.subr.mxu0 0.0
    %1195 = vmatpush1.msra.mxu0 0.0
    %1196 = vmatprep.subr.mxu0 0.0
    %1197 = vmatpush1.msra.mxu0 0.0
    %1198 = vmatprep.subr.mxu0 0.0
    %1199 = vmatpush1.msra.mxu0 0.0
    %1200 = vmatprep.subr.mxu0 0.0
    %1201 = vmatpush1.msra.mxu0 0.0
    %1202 = vmatprep.subr.mxu0 0.0
    %1203 = vmatpush1.msra.mxu0 0.0
    %1204 = vmatprep.subr.mxu0 0.0
    %1205 = vmatpush1.msra.mxu0 0.0
    %1206 = vmatprep.subr.mxu0 0.0
    %1207 = vmatpush1.msra.mxu0 0.0
    %1208 = vmatprep.subr.mxu0 0.0
    %1209 = vmatpush1.msra.mxu0 0.0
    %1210 = vmatprep.subr.mxu0 0.0
    %1211 = vmatpush1.msra.mxu0 0.0
    %1212 = vmatprep.subr.mxu0 0.0
    %1213 = vmatpush1.msra.mxu0 0.0
    %1214 = vmatprep.subr.mxu0 0.0
    %1215 = vmatpush1.msra.mxu0 0.0
    %1216 = vmatprep.subr.mxu0 0.0
    %1217 = vmatpush1.msra.mxu0 0.0
    %1218 = vmatprep.subr.mxu0 0.0
    %1219 = vmatpush1.msra.mxu0 0.0
    %1220 = vmatprep.subr.mxu0 0.0
    %1221 = vmatpush1.msra.mxu0 0.0
    %1222 = vmatprep.subr.mxu0 0.0
    %1223 = vmatpush1.msra.mxu0 0.0
    %1224 = vmatprep.subr.mxu0 0.0
    %1225 = vmatpush1.msra.mxu0 0.0
    %1226 = vmatprep.subr.mxu0 0.0
    %1227 = vmatpush1.msra.mxu0 0.0
    %1228 = vmatprep.subr.mxu0 0.0
    %1229 = vmatpush1.msra.mxu0 0.0
    %1230 = vmatprep.subr.mxu0 0.0
    %1231 = vmatpush1.msra.mxu0 0.0
    %1232 = vmatprep.subr.mxu0 0.0
    %1233 = vmatpush1.msra.mxu0 0.0
    %1234 = vmatprep.subr.mxu0 0.0
    %1235 = vmatpush1.msra.mxu0 0.0
    %1236 = vmatprep.subr.mxu0 0.0
    %1237 = vmatpush1.msra.mxu0 0.0
    %1238 = vmatprep.subr.mxu0 0.0
    %1239 = vmatpush1.msra.mxu0 0.0
    %1240 = vmatprep.subr.mxu0 0.0
    %1241 = vmatpush1.msra.mxu0 0.0
    %1242 = vmatprep.mubr.f32.mxu0 0.0
    %1243 = vmatmul.mubr.f32.gmra.mrb[0].mxu0 %v1173
    %v1244 = vpop.f32.mrb[0].mxu0
    %v1245 = vadd.f32 %v1170, %v1244
    %v1246 = vpop.f32.mrb[0].mxu0
    %1247 = vmatprep.mubr.f32.mxu0 0.0
    %1248 = vmatmul.mubr.f32.gmra.mrb[0].mxu0 %v1176
    %v1249 = vpop.f32.mrb[0].mxu0
    %v1250 = vadd.f32 %v1170, %v1249
    %v1251 = vpop.f32.mrb[0].mxu0
    %1252 = vdwg.mxu0
    %v1253 = vadd.f32 %v1245, %v143
    %v1254 = vadd.f32 %v1250, %v148
    %v1256 = vsel %vm69, %v151, 0
    %v1259 = vsel %vm69, %v152, 0
    %1261 = vmatprep.subr.mxu0 0.0
    %1262 = vmatpush1.msra.mxu0 %v1253
    %1263 = vmatprep.subr.mxu0 0.0
    %1264 = vmatpush1.msra.mxu0 %v1254
    %1265 = vmatprep.subr.mxu0 0.0
    %1266 = vmatpush1.msra.mxu0 0.0
    %1267 = vmatprep.subr.mxu0 0.0
    %1268 = vmatpush1.msra.mxu0 0.0
    %1269 = vmatprep.subr.mxu0 0.0
    %1270 = vmatpush1.msra.mxu0 0.0
    %1271 = vmatprep.subr.mxu0 0.0
    %1272 = vmatpush1.msra.mxu0 0.0
    %1273 = vmatprep.subr.mxu0 0.0
    %1274 = vmatpush1.msra.mxu0 0.0
    %1275 = vmatprep.subr.mxu0 0.0
    %1276 = vmatpush1.msra.mxu0 0.0
    %1277 = vmatprep.subr.mxu0 0.0
    %1278 = vmatpush1.msra.mxu0 0.0
    %1279 = vmatprep.subr.mxu0 0.0
    %1280 = vmatpush1.msra.mxu0 0.0
    %1281 = vmatprep.subr.mxu0 0.0
    %1282 = vmatpush1.msra.mxu0 0.0
    %1283 = vmatprep.subr.mxu0 0.0
    %1284 = vmatpush1.msra.mxu0 0.0
    %1285 = vmatprep.subr.mxu0 0.0
    %1286 = vmatpush1.msra.mxu0 0.0
    %1287 = vmatprep.subr.mxu0 0.0
    %1288 = vmatpush1.msra.mxu0 0.0
    %1289 = vmatprep.subr.mxu0 0.0
    %1290 = vmatpush1.msra.mxu0 0.0
    %1291 = vmatprep.subr.mxu0 0.0
    %1292 = vmatpush1.msra.mxu0 0.0
    %1293 = vmatprep.subr.mxu0 0.0
    %1294 = vmatpush1.msra.mxu0 0.0
    %1295 = vmatprep.subr.mxu0 0.0
    %1296 = vmatpush1.msra.mxu0 0.0
    %1297 = vmatprep.subr.mxu0 0.0
    %1298 = vmatpush1.msra.mxu0 0.0
    %1299 = vmatprep.subr.mxu0 0.0
    %1300 = vmatpush1.msra.mxu0 0.0
    %1301 = vmatprep.subr.mxu0 0.0
    %1302 = vmatpush1.msra.mxu0 0.0
    %1303 = vmatprep.subr.mxu0 0.0
    %1304 = vmatpush1.msra.mxu0 0.0
    %1305 = vmatprep.subr.mxu0 0.0
    %1306 = vmatpush1.msra.mxu0 0.0
    %1307 = vmatprep.subr.mxu0 0.0
    %1308 = vmatpush1.msra.mxu0 0.0
    %1309 = vmatprep.subr.mxu0 0.0
    %1310 = vmatpush1.msra.mxu0 0.0
    %1311 = vmatprep.subr.mxu0 0.0
    %1312 = vmatpush1.msra.mxu0 0.0
    %1313 = vmatprep.subr.mxu0 0.0
    %1314 = vmatpush1.msra.mxu0 0.0
    %1315 = vmatprep.subr.mxu0 0.0
    %1316 = vmatpush1.msra.mxu0 0.0
    %1317 = vmatprep.subr.mxu0 0.0
    %1318 = vmatpush1.msra.mxu0 0.0
    %1319 = vmatprep.subr.mxu0 0.0
    %1320 = vmatpush1.msra.mxu0 0.0
    %1321 = vmatprep.subr.mxu0 0.0
    %1322 = vmatpush1.msra.mxu0 0.0
    %1323 = vmatprep.subr.mxu0 0.0
    %1324 = vmatpush1.msra.mxu0 0.0
    %1325 = vmatprep.mubr.f32.mxu0 0.0
    %1326 = vmatmul.mubr.f32.gmra.mrb[0].mxu0 %v1256
    %v1327 = vpop.f32.mrb[0].mxu0
    %v1328 = vadd.f32 0.0, %v1327
    %v1329 = vpop.f32.mrb[0].mxu0
    %1330 = vmatprep.mubr.f32.mxu0 0.0
    %1331 = vmatmul.mubr.f32.gmra.mrb[0].mxu0 %v1259
    %v1332 = vpop.f32.mrb[0].mxu0
    %v1333 = vadd.f32 0.0, %v1332
    %v1334 = vpop.f32.mrb[0].mxu0
    %1335 = vdwg.mxu0
    %v1337 = vsel %vm234, %v1328, 0
    %v1340 = vsel %vm234, %v1333, 0
    %1342 = vmatprep.subr.mxu0 0.0
    %1343 = vmatpush1.msra.mxu0 %v216
    %1344 = vmatprep.subr.mxu0 0.0
    %1345 = vmatpush1.msra.mxu0 %v217
    %1346 = vmatprep.subr.mxu0 0.0
    %1347 = vmatpush1.msra.mxu0 %v218
    %1348 = vmatprep.subr.mxu0 0.0
    %1349 = vmatpush1.msra.mxu0 %v219
    %1350 = vmatprep.subr.mxu0 0.0
    %1351 = vmatpush1.msra.mxu0 0.0
    %1352 = vmatprep.subr.mxu0 0.0
    %1353 = vmatpush1.msra.mxu0 0.0
    %1354 = vmatprep.subr.mxu0 0.0
    %1355 = vmatpush1.msra.mxu0 0.0
    %1356 = vmatprep.subr.mxu0 0.0
    %1357 = vmatpush1.msra.mxu0 0.0
    %1358 = vmatprep.subr.mxu0 0.0
    %1359 = vmatpush1.msra.mxu0 0.0
    %1360 = vmatprep.subr.mxu0 0.0
    %1361 = vmatpush1.msra.mxu0 0.0
    %1362 = vmatprep.subr.mxu0 0.0
    %1363 = vmatpush1.msra.mxu0 0.0
    %1364 = vmatprep.subr.mxu0 0.0
    %1365 = vmatpush1.msra.mxu0 0.0
    %1366 = vmatprep.subr.mxu0 0.0
    %1367 = vmatpush1.msra.mxu0 0.0
    %1368 = vmatprep.subr.mxu0 0.0
    %1369 = vmatpush1.msra.mxu0 0.0
    %1370 = vmatprep.subr.mxu0 0.0
    %1371 = vmatpush1.msra.mxu0 0.0
    %1372 = vmatprep.subr.mxu0 0.0
    %1373 = vmatpush1.msra.mxu0 0.0
    %1374 = vmatprep.subr.mxu0 0.0
    %1375 = vmatpush1.msra.mxu0 0.0
    %1376 = vmatprep.subr.mxu0 0.0
    %1377 = vmatpush1.msra.mxu0 0.0
    %1378 = vmatprep.subr.mxu0 0.0
    %1379 = vmatpush1.msra.mxu0 0.0
    %1380 = vmatprep.subr.mxu0 0.0
    %1381 = vmatpush1.msra.mxu0 0.0
    %1382 = vmatprep.subr.mxu0 0.0
    %1383 = vmatpush1.msra.mxu0 0.0
    %1384 = vmatprep.subr.mxu0 0.0
    %1385 = vmatpush1.msra.mxu0 0.0
    %1386 = vmatprep.subr.mxu0 0.0
    %1387 = vmatpush1.msra.mxu0 0.0
    %1388 = vmatprep.subr.mxu0 0.0
    %1389 = vmatpush1.msra.mxu0 0.0
    %1390 = vmatprep.subr.mxu0 0.0
    %1391 = vmatpush1.msra.mxu0 0.0
    %1392 = vmatprep.subr.mxu0 0.0
    %1393 = vmatpush1.msra.mxu0 0.0
    %1394 = vmatprep.subr.mxu0 0.0
    %1395 = vmatpush1.msra.mxu0 0.0
    %1396 = vmatprep.subr.mxu0 0.0
    %1397 = vmatpush1.msra.mxu0 0.0
    %1398 = vmatprep.subr.mxu0 0.0
    %1399 = vmatpush1.msra.mxu0 0.0
    %1400 = vmatprep.subr.mxu0 0.0
    %1401 = vmatpush1.msra.mxu0 0.0
    %1402 = vmatprep.subr.mxu0 0.0
    %1403 = vmatpush1.msra.mxu0 0.0
    %1404 = vmatprep.subr.mxu0 0.0
    %1405 = vmatpush1.msra.mxu0 0.0
    %1406 = vmatprep.mubr.f32.mxu0 0.0
    %1407 = vmatmul.mubr.f32.gmra.mrb[0].mxu0 %v1337
    %v1408 = vpop.f32.mrb[0].mxu0
    %v1409 = vadd.f32 0.0, %v1408
    %v1410 = vpop.f32.mrb[0].mxu0
    %1411 = vmatprep.mubr.f32.mxu0 0.0
    %1412 = vmatmul.mubr.f32.gmra.mrb[0].mxu0 %v1340
    %v1413 = vpop.f32.mrb[0].mxu0
    %v1414 = vadd.f32 0.0, %v1413
    %v1415 = vpop.f32.mrb[0].mxu0
    %1416 = vdwg.mxu0
    %v1417 = vmul.f32 %v1409, 0.70710677
    %v1418 = vmul.f32 %v1414, 0.70710677
    %v1419 = vand.u32 2147483647, %v1417
    %v1420 = vand.u32 2147483647, %v1418
    %v1421 = vmul.f32 %v1419, 0.3275911
    %v1422 = vmul.f32 %v1420, 0.3275911
    %v1423 = vadd.f32 %v1421, 1.0
    %v1424 = vadd.f32 %v1422, 1.0
    %v1425 = vrcp.pop %v1423
    %v1426 = vrcp.pop %v1424
    %v1427 = vmul.f32 %v1425, 1.0614054
    %v1428 = vmul.f32 %v1426, 1.0614054
    %v1429 = vadd.f32 %v1427, -1.4531521
    %v1430 = vadd.f32 %v1428, -1.4531521
    %v1431 = vmul.f32 %v1429, %v1425
    %v1432 = vmul.f32 %v1430, %v1426
    %v1433 = vadd.f32 %v1431, 1.4214138
    %v1434 = vadd.f32 %v1432, 1.4214138
    %v1435 = vmul.f32 %v1433, %v1425
    %v1436 = vmul.f32 %v1434, %v1426
    %v1437 = vadd.f32 %v1435, -0.28449672
    %v1438 = vadd.f32 %v1436, -0.28449672
    %v1439 = vmul.f32 %v1437, %v1425
    %v1440 = vmul.f32 %v1438, %v1426
    %v1441 = vadd.f32 %v1439, 0.2548296
    %v1442 = vadd.f32 %v1440, 0.2548296
    %v1443 = vmul.f32 %v1441, %v1425
    %v1444 = vmul.f32 %v1442, %v1426
    %v1445 = vsub.f32 0.0, %v1419
    %v1446 = vsub.f32 0.0, %v1420
    %v1447 = vmul.f32 %v1445, %v1419
    %v1448 = vmul.f32 %v1446, %v1420
    %v1449 = vmul.f32 %v1447, 1.442695
    %v1450 = vpow.pop %v1449
    %v1451 = vmul.f32 %v1448, 1.442695
    %v1452 = vpow.pop %v1451
    %v1453 = vmul.f32 %v1443, %v1450
    %v1454 = vmul.f32 %v1444, %v1452
    %v1455 = vsub.f32 1.0, %v1453
    %v1456 = vsub.f32 1.0, %v1454
    %vm1457 = vcmp.ge.f32.partialorder %v1417, 0.0
    %vm1458 = vcmp.ge.f32.partialorder %v1418, 0.0
    %v1459 = vsub.f32 0.0, %v1455
    %v1460 = vsub.f32 0.0, %v1456
    %v1461 = vsel %vm1457, %v1455, %v1459
    %v1462 = vsel %vm1458, %v1456, %v1460
    %v1463 = vmul.f32 %v1409, 0.5
    %v1464 = vmul.f32 %v1414, 0.5
    %v1465 = vadd.f32 %v1461, 1.0
    %v1466 = vadd.f32 %v1462, 1.0
    %v1467 = vmul.f32 %v1463, %v1465
    %v1468 = vmul.f32 %v1464, %v1466
    %vm1469 = vcmask 523264
    %v1471 = vsel %vm1469, %v1467, 0
    %v1474 = vsel %vm1469, %v1468, 0
    %1476 = vmatprep.subr.mxu0 0.0
    %1477 = vmatpush1.msra.mxu0 %v220
    %1478 = vmatprep.subr.mxu0 0.0
    %1479 = vmatpush1.msra.mxu0 %v221
    %1480 = vmatprep.subr.mxu0 0.0
    %1481 = vmatpush1.msra.mxu0 %v222
    %1482 = vmatprep.subr.mxu0 0.0
    %1483 = vmatpush1.msra.mxu0 %v223
    %1484 = vmatprep.subr.mxu0 0.0
    %1485 = vmatpush1.msra.mxu0 %v224
    %1486 = vmatprep.subr.mxu0 0.0
    %1487 = vmatpush1.msra.mxu0 %v225
    %1488 = vmatprep.subr.mxu0 0.0
    %1489 = vmatpush1.msra.mxu0 %v226
    %1490 = vmatprep.subr.mxu0 0.0
    %1491 = vmatpush1.msra.mxu0 %v227
    %1492 = vmatprep.subr.mxu0 0.0
    %1493 = vmatpush1.msra.mxu0 0.0
    %1494 = vmatprep.subr.mxu0 0.0
    %1495 = vmatpush1.msra.mxu0 0.0
    %1496 = vmatprep.subr.mxu0 0.0
    %1497 = vmatpush1.msra.mxu0 0.0
    %1498 = vmatprep.subr.mxu0 0.0
    %1499 = vmatpush1.msra.mxu0 0.0
    %1500 = vmatprep.subr.mxu0 0.0
    %1501 = vmatpush1.msra.mxu0 0.0
    %1502 = vmatprep.subr.mxu0 0.0
    %1503 = vmatpush1.msra.mxu0 0.0
    %1504 = vmatprep.subr.mxu0 0.0
    %1505 = vmatpush1.msra.mxu0 0.0
    %1506 = vmatprep.subr.mxu0 0.0
    %1507 = vmatpush1.msra.mxu0 0.0
    %1508 = vmatprep.subr.mxu0 0.0
    %1509 = vmatpush1.msra.mxu0 0.0
    %1510 = vmatprep.subr.mxu0 0.0
    %1511 = vmatpush1.msra.mxu0 0.0
    %1512 = vmatprep.subr.mxu0 0.0
    %1513 = vmatpush1.msra.mxu0 0.0
    %1514 = vmatprep.subr.mxu0 0.0
    %1515 = vmatpush1.msra.mxu0 0.0
    %1516 = vmatprep.subr.mxu0 0.0
    %1517 = vmatpush1.msra.mxu0 0.0
    %1518 = vmatprep.subr.mxu0 0.0
    %1519 = vmatpush1.msra.mxu0 0.0
    %1520 = vmatprep.subr.mxu0 0.0
    %1521 = vmatpush1.msra.mxu0 0.0
    %1522 = vmatprep.subr.mxu0 0.0
    %1523 = vmatpush1.msra.mxu0 0.0
    %1524 = vmatprep.subr.mxu0 0.0
    %1525 = vmatpush1.msra.mxu0 0.0
    %1526 = vmatprep.subr.mxu0 0.0
    %1527 = vmatpush1.msra.mxu0 0.0
    %1528 = vmatprep.subr.mxu0 0.0
    %1529 = vmatpush1.msra.mxu0 0.0
    %1530 = vmatprep.subr.mxu0 0.0
    %1531 = vmatpush1.msra.mxu0 0.0
    %1532 = vmatprep.subr.mxu0 0.0
    %1533 = vmatpush1.msra.mxu0 0.0
    %1534 = vmatprep.subr.mxu0 0.0
    %1535 = vmatpush1.msra.mxu0 0.0
    %1536 = vmatprep.subr.mxu0 0.0
    %1537 = vmatpush1.msra.mxu0 0.0
    %1538 = vmatprep.subr.mxu0 0.0
    %1539 = vmatpush1.msra.mxu0 0.0
    %1540 = vmatprep.mubr.f32.mxu0 0.0
    %1541 = vmatmul.mubr.f32.gmra.mrb[0].mxu0 %v1471
    %v1542 = vpop.f32.mrb[0].mxu0
    %v1543 = vadd.f32 0.0, %v1542
    %v1544 = vpop.f32.mrb[0].mxu0
    %1545 = vmatprep.mubr.f32.mxu0 0.0
    %1546 = vmatmul.mubr.f32.gmra.mrb[0].mxu0 %v1474
    %v1547 = vpop.f32.mrb[0].mxu0
    %v1548 = vadd.f32 0.0, %v1547
    %v1549 = vpop.f32.mrb[0].mxu0
    %1550 = vdwg.mxu0
    %v1551 = vadd.f32 %v1328, %v1543
    %v1552 = vadd.f32 %v1333, %v1548
    %1553 = vmatprep.subr.mxu0 0.0
    %1554 = vmatpush1.msra.mxu0 %v1551
    %1555 = vmatprep.subr.mxu0 0.0
    %1556 = vmatpush1.msra.mxu0 %v1552
    %1557 = vmatprep.subr.mxu0 0.0
    %1558 = vmatpush1.msra.mxu0 0.0
    %1559 = vmatprep.subr.mxu0 0.0
    %1560 = vmatpush1.msra.mxu0 0.0
    %1561 = vmatprep.subr.mxu0 0.0
    %1562 = vmatpush1.msra.mxu0 0.0
    %1563 = vmatprep.subr.mxu0 0.0
    %1564 = vmatpush1.msra.mxu0 0.0
    %1565 = vmatprep.subr.mxu0 0.0
    %1566 = vmatpush1.msra.mxu0 0.0
    %1567 = vmatprep.subr.mxu0 0.0
    %1568 = vmatpush1.msra.mxu0 0.0
    %1569 = vmatprep.subr.mxu0 0.0
    %1570 = vmatpush1.msra.mxu0 0.0
    %1571 = vmatprep.subr.mxu0 0.0
    %1572 = vmatpush1.msra.mxu0 0.0
    %1573 = vmatprep.subr.mxu0 0.0
    %1574 = vmatpush1.msra.mxu0 0.0
    %1575 = vmatprep.subr.mxu0 0.0
    %1576 = vmatpush1.msra.mxu0 0.0
    %1577 = vmatprep.subr.mxu0 0.0
    %1578 = vmatpush1.msra.mxu0 0.0
    %1579 = vmatprep.subr.mxu0 0.0
    %1580 = vmatpush1.msra.mxu0 0.0
    %1581 = vmatprep.subr.mxu0 0.0
    %1582 = vmatpush1.msra.mxu0 0.0
    %1583 = vmatprep.subr.mxu0 0.0
    %1584 = vmatpush1.msra.mxu0 0.0
    %1585 = vmatprep.subr.mxu0 0.0
    %1586 = vmatpush1.msra.mxu0 0.0
    %1587 = vmatprep.subr.mxu0 0.0
    %1588 = vmatpush1.msra.mxu0 0.0
    %1589 = vmatprep.subr.mxu0 0.0
    %1590 = vmatpush1.msra.mxu0 0.0
    %1591 = vmatprep.subr.mxu0 0.0
    %1592 = vmatpush1.msra.mxu0 0.0
    %1593 = vmatprep.subr.mxu0 0.0
    %1594 = vmatpush1.msra.mxu0 0.0
    %1595 = vmatprep.subr.mxu0 0.0
    %1596 = vmatpush1.msra.mxu0 0.0
    %1597 = vmatprep.subr.mxu0 0.0
    %1598 = vmatpush1.msra.mxu0 0.0
    %1599 = vmatprep.subr.mxu0 0.0
    %1600 = vmatpush1.msra.mxu0 0.0
    %1601 = vmatprep.subr.mxu0 0.0
    %1602 = vmatpush1.msra.mxu0 0.0
    %1603 = vmatprep.subr.mxu0 0.0
    %1604 = vmatpush1.msra.mxu0 0.0
    %1605 = vmatprep.subr.mxu0 0.0
    %1606 = vmatpush1.msra.mxu0 0.0
    %1607 = vmatprep.subr.mxu0 0.0
    %1608 = vmatpush1.msra.mxu0 0.0
    %1609 = vmatprep.subr.mxu0 0.0
    %1610 = vmatpush1.msra.mxu0 0.0
    %1611 = vmatprep.subr.mxu0 0.0
    %1612 = vmatpush1.msra.mxu0 0.0
    %1613 = vmatprep.subr.mxu0 0.0
    %1614 = vmatpush1.msra.mxu0 0.0
    %1615 = vmatprep.subr.mxu0 0.0
    %1616 = vmatpush1.msra.mxu0 0.0
    %1617 = vmatprep.mubr.f32.mxu0 0.0
    %1618 = vmatmul.mubr.f32.gmra.mrb[0].mxu0 %v1256
    %v1619 = vpop.f32.mrb[0].mxu0
    %v1620 = vadd.f32 0.0, %v1619
    %v1621 = vpop.f32.mrb[0].mxu0
    %1622 = vmatprep.mubr.f32.mxu0 0.0
    %1623 = vmatmul.mubr.f32.gmra.mrb[0].mxu0 %v1259
    %v1624 = vpop.f32.mrb[0].mxu0
    %v1625 = vadd.f32 0.0, %v1624
    %v1626 = vpop.f32.mrb[0].mxu0
    %1627 = vdwg.mxu0
    %s1628 = scalar_lea.vmem %s3, 32
    %v1629 = vld [vmem:[%s1628] sm:$0xff]
    %v1630 = vld [vmem:[%s1628 + $0x8] sm:$0xff]
    %v1631 = vld [vmem:[%s1628 + $0x10] sm:$0xff]
    %v1632 = vld [vmem:[%s1628 + $0x18] sm:$0xff]
    %s1633 = scalar_lea.vmem %s4, 1
    %v1634 = vld [vmem:[%s1633] sm:$0x1]
    %s1635 = scalar_lea.vmem %s5, 32
    %v1636 = vld [vmem:[%s1635] sm:$0xff]
    %v1637 = vld [vmem:[%s1635 + $0x8] sm:$0xff]
    %v1638 = vld [vmem:[%s1635 + $0x10] sm:$0xff]
    %v1639 = vld [vmem:[%s1635 + $0x18] sm:$0xff]
    %s1640 = scalar_lea.vmem %s6, 1
    %v1641 = vld [vmem:[%s1640] sm:$0x1]
    %s1642 = scalar_lea.vmem %s7, 32
    %v1643 = vld [vmem:[%s1642] sm:$0xff]
    %v1644 = vld [vmem:[%s1642 + $0x8] sm:$0xff]
    %v1645 = vld [vmem:[%s1642 + $0x10] sm:$0xff]
    %v1646 = vld [vmem:[%s1642 + $0x18] sm:$0xff]
    %s1647 = scalar_lea.vmem %s8, 64
    %v1648 = vld [vmem:[%s1647] sm:$0xff]
    %v1649 = vld [vmem:[%s1647 + $0x8] sm:$0xff]
    %v1650 = vld [vmem:[%s1647 + $0x10] sm:$0xff]
    %v1651 = vld [vmem:[%s1647 + $0x18] sm:$0xff]
    %v1652 = vld [vmem:[%s1647 + $0x20] sm:$0xff]
    %v1653 = vld [vmem:[%s1647 + $0x28] sm:$0xff]
    %v1654 = vld [vmem:[%s1647 + $0x30] sm:$0xff]
    %v1655 = vld [vmem:[%s1647 + $0x38] sm:$0xff]
    %v1657 = vlaneseq
    %v1658 = vshrl.u32 %v1657, 7
    %v1659 = vsub.s32 0, %v1658
    %v1660 = vrot.slane %v1634, %v1659
    %v1663 = vsel %vm234, %v1620, 0
    %v1666 = vsel %vm234, %v1625, 0
    %1668 = vmatprep.subr.mxu0 0.0
    %1669 = vmatpush1.msra.mxu0 %v1629
    %1670 = vmatprep.subr.mxu0 0.0
    %1671 = vmatpush1.msra.mxu0 %v1630
    %1672 = vmatprep.subr.mxu0 0.0
    %1673 = vmatpush1.msra.mxu0 %v1631
    %1674 = vmatprep.subr.mxu0 0.0
    %1675 = vmatpush1.msra.mxu0 %v1632
    %1676 = vmatprep.subr.mxu0 0.0
    %1677 = vmatpush1.msra.mxu0 0.0
    %1678 = vmatprep.subr.mxu0 0.0
    %1679 = vmatpush1.msra.mxu0 0.0
    %1680 = vmatprep.subr.mxu0 0.0
    %1681 = vmatpush1.msra.mxu0 0.0
    %1682 = vmatprep.subr.mxu0 0.0
    %1683 = vmatpush1.msra.mxu0 0.0
    %1684 = vmatprep.subr.mxu0 0.0
    %1685 = vmatpush1.msra.mxu0 0.0
    %1686 = vmatprep.subr.mxu0 0.0
    %1687 = vmatpush1.msra.mxu0 0.0
    %1688 = vmatprep.subr.mxu0 0.0
    %1689 = vmatpush1.msra.mxu0 0.0
    %1690 = vmatprep.subr.mxu0 0.0
    %1691 = vmatpush1.msra.mxu0 0.0
    %1692 = vmatprep.subr.mxu0 0.0
    %1693 = vmatpush1.msra.mxu0 0.0
    %1694 = vmatprep.subr.mxu0 0.0
    %1695 = vmatpush1.msra.mxu0 0.0
    %1696 = vmatprep.subr.mxu0 0.0
    %1697 = vmatpush1.msra.mxu0 0.0
    %1698 = vmatprep.subr.mxu0 0.0
    %1699 = vmatpush1.msra.mxu0 0.0
    %1700 = vmatprep.subr.mxu0 0.0
    %1701 = vmatpush1.msra.mxu0 0.0
    %1702 = vmatprep.subr.mxu0 0.0
    %1703 = vmatpush1.msra.mxu0 0.0
    %1704 = vmatprep.subr.mxu0 0.0
    %1705 = vmatpush1.msra.mxu0 0.0
    %1706 = vmatprep.subr.mxu0 0.0
    %1707 = vmatpush1.msra.mxu0 0.0
    %1708 = vmatprep.subr.mxu0 0.0
    %1709 = vmatpush1.msra.mxu0 0.0
    %1710 = vmatprep.subr.mxu0 0.0
    %1711 = vmatpush1.msra.mxu0 0.0
    %1712 = vmatprep.subr.mxu0 0.0
    %1713 = vmatpush1.msra.mxu0 0.0
    %1714 = vmatprep.subr.mxu0 0.0
    %1715 = vmatpush1.msra.mxu0 0.0
    %1716 = vmatprep.subr.mxu0 0.0
    %1717 = vmatpush1.msra.mxu0 0.0
    %1718 = vmatprep.subr.mxu0 0.0
    %1719 = vmatpush1.msra.mxu0 0.0
    %1720 = vmatprep.subr.mxu0 0.0
    %1721 = vmatpush1.msra.mxu0 0.0
    %1722 = vmatprep.subr.mxu0 0.0
    %1723 = vmatpush1.msra.mxu0 0.0
    %1724 = vmatprep.subr.mxu0 0.0
    %1725 = vmatpush1.msra.mxu0 0.0
    %1726 = vmatprep.subr.mxu0 0.0
    %1727 = vmatpush1.msra.mxu0 0.0
    %1728 = vmatprep.subr.mxu0 0.0
    %1729 = vmatpush1.msra.mxu0 0.0
    %1730 = vmatprep.subr.mxu0 0.0
    %1731 = vmatpush1.msra.mxu0 0.0
    %1732 = vmatprep.mubr.f32.mxu0 0.0
    %1733 = vmatmul.mubr.f32.gmra.mrb[0].mxu0 %v1663
    %v1734 = vpop.f32.mrb[0].mxu0
    %v1735 = vadd.f32 %v1660, %v1734
    %v1736 = vpop.f32.mrb[0].mxu0
    %1737 = vmatprep.mubr.f32.mxu0 0.0
    %1738 = vmatmul.mubr.f32.gmra.mrb[0].mxu0 %v1666
    %v1739 = vpop.f32.mrb[0].mxu0
    %v1740 = vadd.f32 %v1660, %v1739
    %v1741 = vpop.f32.mrb[0].mxu0
    %1742 = vdwg.mxu0
    %1745 = vrot.lane.b32.xlu0 %v1735, 96
    %v1746 = vpop.permute.xlu0 %1745
    %1747 = vrot.lane.b32.xlu0 %v1740, 96
    %v1748 = vpop.permute.xlu0 %1747
    %1751 = vmatprep.subr.mxu0 0.0
    %1752 = vmatpush1.msra.mxu0 %v1746
    %1753 = vmatprep.subr.mxu0 0.0
    %1754 = vmatpush1.msra.mxu0 %v1748
    %1755 = vmatprep.subr.mxu0 0.0
    %1756 = vmatpush1.msra.mxu0 0.0
    %1757 = vmatprep.subr.mxu0 0.0
    %1758 = vmatpush1.msra.mxu0 0.0
    %1759 = vmatprep.subr.mxu0 0.0
    %1760 = vmatpush1.msra.mxu0 0.0
    %1761 = vmatprep.subr.mxu0 0.0
    %1762 = vmatpush1.msra.mxu0 0.0
    %1763 = vmatprep.subr.mxu0 0.0
    %1764 = vmatpush1.msra.mxu0 0.0
    %1765 = vmatprep.subr.mxu0 0.0
    %1766 = vmatpush1.msra.mxu0 0.0
    %1767 = vmatprep.subr.mxu0 0.0
    %1768 = vmatpush1.msra.mxu0 0.0
    %1769 = vmatprep.subr.mxu0 0.0
    %1770 = vmatpush1.msra.mxu0 0.0
    %1771 = vmatprep.subr.mxu0 0.0
    %1772 = vmatpush1.msra.mxu0 0.0
    %1773 = vmatprep.subr.mxu0 0.0
    %1774 = vmatpush1.msra.mxu0 0.0
    %1775 = vmatprep.subr.mxu0 0.0
    %1776 = vmatpush1.msra.mxu0 0.0
    %1777 = vmatprep.subr.mxu0 0.0
    %1778 = vmatpush1.msra.mxu0 0.0
    %1779 = vmatprep.subr.mxu0 0.0
    %1780 = vmatpush1.msra.mxu0 0.0
    %1781 = vmatprep.subr.mxu0 0.0
    %1782 = vmatpush1.msra.mxu0 0.0
    %1783 = vmatprep.subr.mxu0 0.0
    %1784 = vmatpush1.msra.mxu0 0.0
    %1785 = vmatprep.subr.mxu0 0.0
    %1786 = vmatpush1.msra.mxu0 0.0
    %1787 = vmatprep.subr.mxu0 0.0
    %1788 = vmatpush1.msra.mxu0 0.0
    %1789 = vmatprep.subr.mxu0 0.0
    %1790 = vmatpush1.msra.mxu0 0.0
    %1791 = vmatprep.subr.mxu0 0.0
    %1792 = vmatpush1.msra.mxu0 0.0
    %1793 = vmatprep.subr.mxu0 0.0
    %1794 = vmatpush1.msra.mxu0 0.0
    %1795 = vmatprep.subr.mxu0 0.0
    %1796 = vmatpush1.msra.mxu0 0.0
    %1797 = vmatprep.subr.mxu0 0.0
    %1798 = vmatpush1.msra.mxu0 0.0
    %1799 = vmatprep.subr.mxu0 0.0
    %1800 = vmatpush1.msra.mxu0 0.0
    %1801 = vmatprep.subr.mxu0 0.0
    %1802 = vmatpush1.msra.mxu0 0.0
    %1803 = vmatprep.subr.mxu0 0.0
    %1804 = vmatpush1.msra.mxu0 0.0
    %1805 = vmatprep.subr.mxu0 0.0
    %1806 = vmatpush1.msra.mxu0 0.0
    %1807 = vmatprep.subr.mxu0 0.0
    %1808 = vmatpush1.msra.mxu0 0.0
    %1809 = vmatprep.subr.mxu0 0.0
    %1810 = vmatpush1.msra.mxu0 0.0
    %1811 = vmatprep.subr.mxu0 0.0
    %1812 = vmatpush1.msra.mxu0 0.0
    %1813 = vmatprep.subr.mxu0 0.0
    %1814 = vmatpush1.msra.mxu0 0.0
    %1815 = vmatprep.mubr.f32.mxu0 0.0
    %1816 = vmatmul.mubr.f32.gmra.mrb[0].mxu0 %v325
    %v1817 = vpop.f32.mrb[0].mxu0
    %v1818 = vadd.f32 0.0, %v1817
    %v1819 = vpop.f32.mrb[0].mxu0
    %1820 = vmatprep.mubr.f32.mxu0 0.0
    %1821 = vmatmul.mubr.f32.gmra.mrb[0].mxu0 %v328
    %v1822 = vpop.f32.mrb[0].mxu0
    %v1823 = vadd.f32 0.0, %v1822
    %v1824 = vpop.f32.mrb[0].mxu0
    %1825 = vmatprep.mubr.f32.mxu0 0.0
    %1826 = vmatmul.mubr.f32.gmra.mrb[0].mxu0 %v331
    %v1827 = vpop.f32.mrb[0].mxu0
    %v1828 = vadd.f32 0.0, %v1827
    %v1829 = vpop.f32.mrb[0].mxu0
    %1830 = vmatprep.mubr.f32.mxu0 0.0
    %1831 = vmatmul.mubr.f32.gmra.mrb[0].mxu0 %v334
    %v1832 = vpop.f32.mrb[0].mxu0
    %v1833 = vadd.f32 0.0, %v1832
    %v1834 = vpop.f32.mrb[0].mxu0
    %1835 = vmatprep.mubr.f32.mxu0 0.0
    %1836 = vmatmul.mubr.f32.gmra.mrb[0].mxu0 %v337
    %v1837 = vpop.f32.mrb[0].mxu0
    %v1838 = vadd.f32 0.0, %v1837
    %v1839 = vpop.f32.mrb[0].mxu0
    %1840 = vmatprep.mubr.f32.mxu0 0.0
    %1841 = vmatmul.mubr.f32.gmra.mrb[0].mxu0 %v340
    %v1842 = vpop.f32.mrb[0].mxu0
    %v1843 = vadd.f32 0.0, %v1842
    %v1844 = vpop.f32.mrb[0].mxu0
    %1845 = vmatprep.mubr.f32.mxu0 0.0
    %1846 = vmatmul.mubr.f32.gmra.mrb[0].mxu0 %v343
    %v1847 = vpop.f32.mrb[0].mxu0
    %v1848 = vadd.f32 0.0, %v1847
    %v1849 = vpop.f32.mrb[0].mxu0
    %1850 = vmatprep.mubr.f32.mxu0 0.0
    %1851 = vmatmul.mubr.f32.gmra.mrb[0].mxu0 %v346
    %v1852 = vpop.f32.mrb[0].mxu0
    %v1853 = vadd.f32 0.0, %v1852
    %v1854 = vpop.f32.mrb[0].mxu0
    %1855 = vmatprep.mubr.f32.mxu0 0.0
    %1856 = vmatmul.mubr.f32.gmra.mrb[0].mxu0 %v349
    %v1857 = vpop.f32.mrb[0].mxu0
    %v1858 = vadd.f32 0.0, %v1857
    %v1859 = vpop.f32.mrb[0].mxu0
    %1860 = vmatprep.mubr.f32.mxu0 0.0
    %1861 = vmatmul.mubr.f32.gmra.mrb[0].mxu0 %v352
    %v1862 = vpop.f32.mrb[0].mxu0
    %v1863 = vadd.f32 0.0, %v1862
    %v1864 = vpop.f32.mrb[0].mxu0
    %1865 = vmatprep.mubr.f32.mxu0 0.0
    %1866 = vmatmul.mubr.f32.gmra.mrb[0].mxu0 %v355
    %v1867 = vpop.f32.mrb[0].mxu0
    %v1868 = vadd.f32 0.0, %v1867
    %v1869 = vpop.f32.mrb[0].mxu0
    %1870 = vmatprep.mubr.f32.mxu0 0.0
    %1871 = vmatmul.mubr.f32.gmra.mrb[0].mxu0 %v358
    %v1872 = vpop.f32.mrb[0].mxu0
    %v1873 = vadd.f32 0.0, %v1872
    %v1874 = vpop.f32.mrb[0].mxu0
    %1875 = vmatprep.mubr.f32.mxu0 0.0
    %1876 = vmatmul.mubr.f32.gmra.mrb[0].mxu0 %v361
    %v1877 = vpop.f32.mrb[0].mxu0
    %v1878 = vadd.f32 0.0, %v1877
    %v1879 = vpop.f32.mrb[0].mxu0
    %1880 = vmatprep.mubr.f32.mxu0 0.0
    %1881 = vmatmul.mubr.f32.gmra.mrb[0].mxu0 %v364
    %v1882 = vpop.f32.mrb[0].mxu0
    %v1883 = vadd.f32 0.0, %v1882
    %v1884 = vpop.f32.mrb[0].mxu0
    %1885 = vmatprep.mubr.f32.mxu0 0.0
    %1886 = vmatmul.mubr.f32.gmra.mrb[0].mxu0 %v367
    %v1887 = vpop.f32.mrb[0].mxu0
    %v1888 = vadd.f32 0.0, %v1887
    %v1889 = vpop.f32.mrb[0].mxu0
    %1890 = vmatprep.mubr.f32.mxu0 0.0
    %1891 = vmatmul.mubr.f32.gmra.mrb[0].mxu0 %v370
    %v1892 = vpop.f32.mrb[0].mxu0
    %v1893 = vadd.f32 0.0, %v1892
    %v1894 = vpop.f32.mrb[0].mxu0
    %1895 = vdwg.mxu0
    %v1896 = vsel %vm234, %v1735, 0
    %v1898 = vsel %vm234, %v1740, 0
    %v1901 = vsel %vm234, %v1818, 0
    %v1904 = vsel %vm234, %v1823, 0
    %v1907 = vsel %vm234, %v1828, 0
    %v1910 = vsel %vm234, %v1833, 0
    %v1913 = vsel %vm234, %v1838, 0
    %v1916 = vsel %vm234, %v1843, 0
    %v1919 = vsel %vm234, %v1848, 0
    %v1922 = vsel %vm234, %v1853, 0
    %v1925 = vsel %vm234, %v1858, 0
    %v1928 = vsel %vm234, %v1863, 0
    %v1931 = vsel %vm234, %v1868, 0
    %v1934 = vsel %vm234, %v1873, 0
    %v1937 = vsel %vm234, %v1878, 0
    %v1940 = vsel %vm234, %v1883, 0
    %v1943 = vsel %vm234, %v1888, 0
    %v1946 = vsel %vm234, %v1893, 0
    %1948 = vmatprep.subr.mxu0 0.0
    %1949 = vmatpush1.xpose.msra.mxu0 %v1901
    %1950 = vmatprep.subr.mxu0 0.0
    %1951 = vmatpush1.xpose.msra.mxu0 %v1904
    %1952 = vmatprep.subr.mxu0 0.0
    %1953 = vmatpush1.xpose.msra.mxu0 %v1907
    %1954 = vmatprep.subr.mxu0 0.0
    %1955 = vmatpush1.xpose.msra.mxu0 %v1910
    %1956 = vmatprep.subr.mxu0 0.0
    %1957 = vmatpush1.xpose.msra.mxu0 %v1913
    %1958 = vmatprep.subr.mxu0 0.0
    %1959 = vmatpush1.xpose.msra.mxu0 %v1916
    %1960 = vmatprep.subr.mxu0 0.0
    %1961 = vmatpush1.xpose.msra.mxu0 %v1919
    %1962 = vmatprep.subr.mxu0 0.0
    %1963 = vmatpush1.xpose.msra.mxu0 %v1922
    %1964 = vmatprep.subr.mxu0 0.0
    %1965 = vmatpush1.xpose.msra.mxu0 %v1925
    %1966 = vmatprep.subr.mxu0 0.0
    %1967 = vmatpush1.xpose.msra.mxu0 %v1928
    %1968 = vmatprep.subr.mxu0 0.0
    %1969 = vmatpush1.xpose.msra.mxu0 %v1931
    %1970 = vmatprep.subr.mxu0 0.0
    %1971 = vmatpush1.xpose.msra.mxu0 %v1934
    %1972 = vmatprep.subr.mxu0 0.0
    %1973 = vmatpush1.xpose.msra.mxu0 %v1937
    %1974 = vmatprep.subr.mxu0 0.0
    %1975 = vmatpush1.xpose.msra.mxu0 %v1940
    %1976 = vmatprep.subr.mxu0 0.0
    %1977 = vmatpush1.xpose.msra.mxu0 %v1943
    %1978 = vmatprep.subr.mxu0 0.0
    %1979 = vmatpush1.xpose.msra.mxu0 %v1946
    %1980 = vmatprep.subr.mxu0 0.0
    %1981 = vmatpush1.xpose.msra.mxu0 0.0
    %1982 = vmatprep.subr.mxu0 0.0
    %1983 = vmatpush1.xpose.msra.mxu0 0.0
    %1984 = vmatprep.subr.mxu0 0.0
    %1985 = vmatpush1.xpose.msra.mxu0 0.0
    %1986 = vmatprep.subr.mxu0 0.0
    %1987 = vmatpush1.xpose.msra.mxu0 0.0
    %1988 = vmatprep.subr.mxu0 0.0
    %1989 = vmatpush1.xpose.msra.mxu0 0.0
    %1990 = vmatprep.subr.mxu0 0.0
    %1991 = vmatpush1.xpose.msra.mxu0 0.0
    %1992 = vmatprep.subr.mxu0 0.0
    %1993 = vmatpush1.xpose.msra.mxu0 0.0
    %1994 = vmatprep.subr.mxu0 0.0
    %1995 = vmatpush1.xpose.msra.mxu0 0.0
    %1996 = vmatprep.subr.mxu0 0.0
    %1997 = vmatpush1.xpose.msra.mxu0 0.0
    %1998 = vmatprep.subr.mxu0 0.0
    %1999 = vmatpush1.xpose.msra.mxu0 0.0
    %2000 = vmatprep.subr.mxu0 0.0
    %2001 = vmatpush1.xpose.msra.mxu0 0.0
    %2002 = vmatprep.subr.mxu0 0.0
    %2003 = vmatpush1.xpose.msra.mxu0 0.0
    %2004 = vmatprep.subr.mxu0 0.0
    %2005 = vmatpush1.xpose.msra.mxu0 0.0
    %2006 = vmatprep.subr.mxu0 0.0
    %2007 = vmatpush1.xpose.msra.mxu0 0.0
    %2008 = vmatprep.subr.mxu0 0.0
    %2009 = vmatpush1.xpose.msra.mxu0 0.0
    %2010 = vmatprep.subr.mxu0 0.0
    %2011 = vmatpush1.xpose.msra.mxu0 0.0
    %2012 = vmatprep.mubr.f32.mxu0 0.0
    %2013 = vmatmul.mubr.f32.gmra.mrb[0].mxu0 %v1896
    %v2014 = vpop.f32.mrb[0].mxu0
    %v2015 = vadd.f32 0.0, %v2014
    %v2016 = vpop.f32.mrb[0].mxu0
    %2017 = vmatprep.mubr.f32.mxu0 0.0
    %2018 = vmatmul.mubr.f32.gmra.mrb[0].mxu0 %v1898
    %v2019 = vpop.f32.mrb[0].mxu0
    %v2020 = vadd.f32 0.0, %v2019
    %v2021 = vpop.f32.mrb[0].mxu0
    %2022 = vdwg.mxu0
    %v2023 = vmul.f32 %v2015, %v185
    %v2024 = vmul.f32 %v2020, %v186
    %v2025 = vadd.f32 %v2023, %v2024
    %v2026 = vrot.slane %v2025, 4
    %v2027 = vadd.f32 %v2025, %v2026
    %v2028 = vrot.slane %v2027, 2
    %v2029 = vadd.f32 %v2027, %v2028
    %v2030 = vrot.slane %v2029, 1
    %v2031 = vadd.f32 %v2029, %v2030
    %2032 = vmatprep.subr.mxu0 0.0
    %2033 = vmatpush1.msra.mxu0 %v187
    %2034 = vmatprep.subr.mxu0 0.0
    %2035 = vmatpush1.msra.mxu0 %v188
    %2036 = vmatprep.subr.mxu0 0.0
    %2037 = vmatpush1.msra.mxu0 %v189
    %2038 = vmatprep.subr.mxu0 0.0
    %2039 = vmatpush1.msra.mxu0 %v190
    %2040 = vmatprep.subr.mxu0 0.0
    %2041 = vmatpush1.msra.mxu0 %v191
    %2042 = vmatprep.subr.mxu0 0.0
    %2043 = vmatpush1.msra.mxu0 %v192
    %2044 = vmatprep.subr.mxu0 0.0
    %2045 = vmatpush1.msra.mxu0 %v193
    %2046 = vmatprep.subr.mxu0 0.0
    %2047 = vmatpush1.msra.mxu0 %v194
    %2048 = vmatprep.subr.mxu0 0.0
    %2049 = vmatpush1.msra.mxu0 %v195
    %2050 = vmatprep.subr.mxu0 0.0
    %2051 = vmatpush1.msra.mxu0 %v196
    %2052 = vmatprep.subr.mxu0 0.0
    %2053 = vmatpush1.msra.mxu0 %v197
    %2054 = vmatprep.subr.mxu0 0.0
    %2055 = vmatpush1.msra.mxu0 %v198
    %2056 = vmatprep.subr.mxu0 0.0
    %2057 = vmatpush1.msra.mxu0 %v199
    %2058 = vmatprep.subr.mxu0 0.0
    %2059 = vmatpush1.msra.mxu0 %v200
    %2060 = vmatprep.subr.mxu0 0.0
    %2061 = vmatpush1.msra.mxu0 %v201
    %2062 = vmatprep.subr.mxu0 0.0
    %2063 = vmatpush1.msra.mxu0 %v202
    %2064 = vmatprep.subr.mxu0 0.0
    %2065 = vmatpush1.msra.mxu0 0.0
    %2066 = vmatprep.subr.mxu0 0.0
    %2067 = vmatpush1.msra.mxu0 0.0
    %2068 = vmatprep.subr.mxu0 0.0
    %2069 = vmatpush1.msra.mxu0 0.0
    %2070 = vmatprep.subr.mxu0 0.0
    %2071 = vmatpush1.msra.mxu0 0.0
    %2072 = vmatprep.subr.mxu0 0.0
    %2073 = vmatpush1.msra.mxu0 0.0
    %2074 = vmatprep.subr.mxu0 0.0
    %2075 = vmatpush1.msra.mxu0 0.0
    %2076 = vmatprep.subr.mxu0 0.0
    %2077 = vmatpush1.msra.mxu0 0.0
    %2078 = vmatprep.subr.mxu0 0.0
    %2079 = vmatpush1.msra.mxu0 0.0
    %2080 = vmatprep.subr.mxu0 0.0
    %2081 = vmatpush1.msra.mxu0 0.0
    %2082 = vmatprep.subr.mxu0 0.0
    %2083 = vmatpush1.msra.mxu0 0.0
    %2084 = vmatprep.subr.mxu0 0.0
    %2085 = vmatpush1.msra.mxu0 0.0
    %2086 = vmatprep.subr.mxu0 0.0
    %2087 = vmatpush1.msra.mxu0 0.0
    %2088 = vmatprep.subr.mxu0 0.0
    %2089 = vmatpush1.msra.mxu0 0.0
    %2090 = vmatprep.subr.mxu0 0.0
    %2091 = vmatpush1.msra.mxu0 0.0
    %2092 = vmatprep.subr.mxu0 0.0
    %2093 = vmatpush1.msra.mxu0 0.0
    %2094 = vmatprep.subr.mxu0 0.0
    %2095 = vmatpush1.msra.mxu0 0.0
    %2096 = vmatprep.mubr.f32.mxu0 0.0
    %2097 = vmatmul.mubr.f32.gmra.mrb[0].mxu0 %v2031
    %v2098 = vpop.f32.mrb[0].mxu0
    %v2099 = vadd.f32 0.0, %v2098
    %v2100 = vpop.f32.mrb[0].mxu0
    %2101 = vdwg.mxu0
    %v2102 = vmul.f32 %v2099, 0.03125
    %v2103 = vsel %vm725, %v2102, -1e+30
    %v2104 = vsel %vm727, %v2103, -inf
    %2105 = vmax.xlane.f32.xlu0 %v2104
    %v2106 = vpop.xlane.xlu0 %2105
    %vm2107 = vcmp.ge.f32.partialorder %v2103, %v2106
    %v2108 = vsel %vm2107, %v205, -1.0
    %v2109 = vsel %vm727, %v2108, -inf
    %2110 = vmax.xlane.f32.xlu0 %v2109
    %v2111 = vpop.xlane.xlu0 %2110
    %vm2112 = vcmp.eq.f32.partialorder %v205, %v2111
    %v2113 = vsel %vm2112, 1, 0
    %v2114 = vcvt.s32.f32 %v2113
    %vm2115 = vcmp.gt.f32.partialorder %v2114, 0.0
    %v2116 = vsel %vm2115, -1e+30, %v2102
    %v2117 = vsel %vm725, %v2116, -1e+30
    %v2118 = vsel %vm727, %v2117, -inf
    %2119 = vmax.xlane.f32.xlu0 %v2118
    %v2120 = vpop.xlane.xlu0 %2119
    %vm2121 = vcmp.ge.f32.partialorder %v2117, %v2120
    %v2122 = vsel %vm2121, %v205, -1.0
    %v2123 = vsel %vm727, %v2122, -inf
    %2124 = vmax.xlane.f32.xlu0 %v2123
    %v2125 = vpop.xlane.xlu0 %2124
    %vm2126 = vcmp.eq.f32.partialorder %v205, %v2125
    %v2127 = vsel %vm2126, 1, 0
    %v2128 = vcvt.s32.f32 %v2127
    %vm2129 = vcmp.gt.f32.partialorder %v2128, 0.0
    %v2130 = vsel %vm2129, -1e+30, %v2116
    %v2131 = vmax.f32 %v2106, %v2120
    %v2132 = vsub.f32 %v2106, %v2131
    %v2133 = vmul.f32 %v2132, 1.442695
    %v2134 = vpow.pop %v2133
    %v2135 = vsub.f32 %v2120, %v2131
    %v2136 = vmul.f32 %v2135, 1.442695
    %v2137 = vpow.pop %v2136
    %v2138 = vadd.f32 %v2134, %v2137
    %v2139 = vrcp.pop %v2138
    %v2140 = vmul.f32 %v2134, %v2139
    %v2141 = vmul.f32 %v2114, %v2140
    %v2142 = vadd.f32 %v2141, 0.0
    %v2143 = vmul.f32 %v2137, %v2139
    %v2144 = vmul.f32 %v2128, %v2143
    %v2145 = vadd.f32 %v2142, %v2144
    %v2146 = vsel %vm771, %v2130, -1e+30
    %v2147 = vsel %vm727, %v2146, -inf
    %2148 = vmax.xlane.f32.xlu0 %v2147
    %v2149 = vpop.xlane.xlu0 %2148
    %vm2150 = vcmp.ge.f32.partialorder %v2146, %v2149
    %v2151 = vsel %vm2150, %v205, -1.0
    %v2152 = vsel %vm727, %v2151, -inf
    %2153 = vmax.xlane.f32.xlu0 %v2152
    %v2154 = vpop.xlane.xlu0 %2153
    %vm2155 = vcmp.eq.f32.partialorder %v205, %v2154
    %v2156 = vsel %vm2155, 1, 0
    %v2157 = vcvt.s32.f32 %v2156
    %vm2158 = vcmp.gt.f32.partialorder %v2157, 0.0
    %v2159 = vsel %vm2158, -1e+30, %v2130
    %v2160 = vsel %vm771, %v2159, -1e+30
    %v2161 = vsel %vm727, %v2160, -inf
    %2162 = vmax.xlane.f32.xlu0 %v2161
    %v2163 = vpop.xlane.xlu0 %2162
    %vm2164 = vcmp.ge.f32.partialorder %v2160, %v2163
    %v2165 = vsel %vm2164, %v205, -1.0
    %v2166 = vsel %vm727, %v2165, -inf
    %2167 = vmax.xlane.f32.xlu0 %v2166
    %v2168 = vpop.xlane.xlu0 %2167
    %vm2169 = vcmp.eq.f32.partialorder %v205, %v2168
    %v2170 = vsel %vm2169, 1, 0
    %v2171 = vcvt.s32.f32 %v2170
    %v2172 = vmax.f32 %v2149, %v2163
    %v2173 = vsub.f32 %v2149, %v2172
    %v2174 = vmul.f32 %v2173, 1.442695
    %v2175 = vpow.pop %v2174
    %v2176 = vsub.f32 %v2163, %v2172
    %v2177 = vmul.f32 %v2176, 1.442695
    %v2178 = vpow.pop %v2177
    %v2179 = vadd.f32 %v2175, %v2178
    %v2180 = vrcp.pop %v2179
    %v2181 = vmul.f32 %v2175, %v2180
    %v2182 = vmul.f32 %v2157, %v2181
    %v2183 = vadd.f32 %v2145, %v2182
    %v2184 = vmul.f32 %v2178, %v2180
    %v2185 = vmul.f32 %v2171, %v2184
    %v2186 = vadd.f32 %v2183, %v2185
    %2187 = vrot.lane.b32.xlu0 %v1735, 64
    %v2188 = vpop.permute.xlu0 %2187
    %2189 = vrot.lane.b32.xlu0 %v1740, 64
    %v2190 = vpop.permute.xlu0 %2189
    %2193 = vmatprep.subr.mxu0 0.0
    %2194 = vmatpush1.msra.mxu0 %v2188
    %2195 = vmatprep.subr.mxu0 0.0
    %2196 = vmatpush1.msra.mxu0 %v2190
    %2197 = vmatprep.subr.mxu0 0.0
    %2198 = vmatpush1.msra.mxu0 0.0
    %2199 = vmatprep.subr.mxu0 0.0
    %2200 = vmatpush1.msra.mxu0 0.0
    %2201 = vmatprep.subr.mxu0 0.0
    %2202 = vmatpush1.msra.mxu0 0.0
    %2203 = vmatprep.subr.mxu0 0.0
    %2204 = vmatpush1.msra.mxu0 0.0
    %2205 = vmatprep.subr.mxu0 0.0
    %2206 = vmatpush1.msra.mxu0 0.0
    %2207 = vmatprep.subr.mxu0 0.0
    %2208 = vmatpush1.msra.mxu0 0.0
    %2209 = vmatprep.subr.mxu0 0.0
    %2210 = vmatpush1.msra.mxu0 0.0
    %2211 = vmatprep.subr.mxu0 0.0
    %2212 = vmatpush1.msra.mxu0 0.0
    %2213 = vmatprep.subr.mxu0 0.0
    %2214 = vmatpush1.msra.mxu0 0.0
    %2215 = vmatprep.subr.mxu0 0.0
    %2216 = vmatpush1.msra.mxu0 0.0
    %2217 = vmatprep.subr.mxu0 0.0
    %2218 = vmatpush1.msra.mxu0 0.0
    %2219 = vmatprep.subr.mxu0 0.0
    %2220 = vmatpush1.msra.mxu0 0.0
    %2221 = vmatprep.subr.mxu0 0.0
    %2222 = vmatpush1.msra.mxu0 0.0
    %2223 = vmatprep.subr.mxu0 0.0
    %2224 = vmatpush1.msra.mxu0 0.0
    %2225 = vmatprep.subr.mxu0 0.0
    %2226 = vmatpush1.msra.mxu0 0.0
    %2227 = vmatprep.subr.mxu0 0.0
    %2228 = vmatpush1.msra.mxu0 0.0
    %2229 = vmatprep.subr.mxu0 0.0
    %2230 = vmatpush1.msra.mxu0 0.0
    %2231 = vmatprep.subr.mxu0 0.0
    %2232 = vmatpush1.msra.mxu0 0.0
    %2233 = vmatprep.subr.mxu0 0.0
    %2234 = vmatpush1.msra.mxu0 0.0
    %2235 = vmatprep.subr.mxu0 0.0
    %2236 = vmatpush1.msra.mxu0 0.0
    %2237 = vmatprep.subr.mxu0 0.0
    %2238 = vmatpush1.msra.mxu0 0.0
    %2239 = vmatprep.subr.mxu0 0.0
    %2240 = vmatpush1.msra.mxu0 0.0
    %2241 = vmatprep.subr.mxu0 0.0
    %2242 = vmatpush1.msra.mxu0 0.0
    %2243 = vmatprep.subr.mxu0 0.0
    %2244 = vmatpush1.msra.mxu0 0.0
    %2245 = vmatprep.subr.mxu0 0.0
    %2246 = vmatpush1.msra.mxu0 0.0
    %2247 = vmatprep.subr.mxu0 0.0
    %2248 = vmatpush1.msra.mxu0 0.0
    %2249 = vmatprep.subr.mxu0 0.0
    %2250 = vmatpush1.msra.mxu0 0.0
    %2251 = vmatprep.subr.mxu0 0.0
    %2252 = vmatpush1.msra.mxu0 0.0
    %2253 = vmatprep.subr.mxu0 0.0
    %2254 = vmatpush1.msra.mxu0 0.0
    %2255 = vmatprep.subr.mxu0 0.0
    %2256 = vmatpush1.msra.mxu0 0.0
    %2257 = vmatprep.mubr.f32.mxu0 0.0
    %2258 = vmatmul.mubr.f32.gmra.mrb[0].mxu0 %v820
    %v2259 = vpop.f32.mrb[0].mxu0
    %v2260 = vadd.f32 0.0, %v2259
    %v2261 = vpop.f32.mrb[0].mxu0
    %2262 = vmatprep.mubr.f32.mxu0 0.0
    %2263 = vmatmul.mubr.f32.gmra.mrb[0].mxu0 %v823
    %v2264 = vpop.f32.mrb[0].mxu0
    %v2265 = vadd.f32 0.0, %v2264
    %v2266 = vpop.f32.mrb[0].mxu0
    %2267 = vmatprep.mubr.f32.mxu0 0.0
    %2268 = vmatmul.mubr.f32.gmra.mrb[0].mxu0 %v826
    %v2269 = vpop.f32.mrb[0].mxu0
    %v2270 = vadd.f32 0.0, %v2269
    %v2271 = vpop.f32.mrb[0].mxu0
    %2272 = vmatprep.mubr.f32.mxu0 0.0
    %2273 = vmatmul.mubr.f32.gmra.mrb[0].mxu0 %v829
    %v2274 = vpop.f32.mrb[0].mxu0
    %v2275 = vadd.f32 0.0, %v2274
    %v2276 = vpop.f32.mrb[0].mxu0
    %2277 = vmatprep.mubr.f32.mxu0 0.0
    %2278 = vmatmul.mubr.f32.gmra.mrb[0].mxu0 %v832
    %v2279 = vpop.f32.mrb[0].mxu0
    %v2280 = vadd.f32 0.0, %v2279
    %v2281 = vpop.f32.mrb[0].mxu0
    %2282 = vmatprep.mubr.f32.mxu0 0.0
    %2283 = vmatmul.mubr.f32.gmra.mrb[0].mxu0 %v835
    %v2284 = vpop.f32.mrb[0].mxu0
    %v2285 = vadd.f32 0.0, %v2284
    %v2286 = vpop.f32.mrb[0].mxu0
    %2287 = vmatprep.mubr.f32.mxu0 0.0
    %2288 = vmatmul.mubr.f32.gmra.mrb[0].mxu0 %v838
    %v2289 = vpop.f32.mrb[0].mxu0
    %v2290 = vadd.f32 0.0, %v2289
    %v2291 = vpop.f32.mrb[0].mxu0
    %2292 = vmatprep.mubr.f32.mxu0 0.0
    %2293 = vmatmul.mubr.f32.gmra.mrb[0].mxu0 %v841
    %v2294 = vpop.f32.mrb[0].mxu0
    %v2295 = vadd.f32 0.0, %v2294
    %v2296 = vpop.f32.mrb[0].mxu0
    %2297 = vmatprep.mubr.f32.mxu0 0.0
    %2298 = vmatmul.mubr.f32.gmra.mrb[0].mxu0 %v844
    %v2299 = vpop.f32.mrb[0].mxu0
    %v2300 = vadd.f32 0.0, %v2299
    %v2301 = vpop.f32.mrb[0].mxu0
    %2302 = vmatprep.mubr.f32.mxu0 0.0
    %2303 = vmatmul.mubr.f32.gmra.mrb[0].mxu0 %v847
    %v2304 = vpop.f32.mrb[0].mxu0
    %v2305 = vadd.f32 0.0, %v2304
    %v2306 = vpop.f32.mrb[0].mxu0
    %2307 = vmatprep.mubr.f32.mxu0 0.0
    %2308 = vmatmul.mubr.f32.gmra.mrb[0].mxu0 %v850
    %v2309 = vpop.f32.mrb[0].mxu0
    %v2310 = vadd.f32 0.0, %v2309
    %v2311 = vpop.f32.mrb[0].mxu0
    %2312 = vmatprep.mubr.f32.mxu0 0.0
    %2313 = vmatmul.mubr.f32.gmra.mrb[0].mxu0 %v853
    %v2314 = vpop.f32.mrb[0].mxu0
    %v2315 = vadd.f32 0.0, %v2314
    %v2316 = vpop.f32.mrb[0].mxu0
    %2317 = vmatprep.mubr.f32.mxu0 0.0
    %2318 = vmatmul.mubr.f32.gmra.mrb[0].mxu0 %v856
    %v2319 = vpop.f32.mrb[0].mxu0
    %v2320 = vadd.f32 0.0, %v2319
    %v2321 = vpop.f32.mrb[0].mxu0
    %2322 = vmatprep.mubr.f32.mxu0 0.0
    %2323 = vmatmul.mubr.f32.gmra.mrb[0].mxu0 %v859
    %v2324 = vpop.f32.mrb[0].mxu0
    %v2325 = vadd.f32 0.0, %v2324
    %v2326 = vpop.f32.mrb[0].mxu0
    %2327 = vmatprep.mubr.f32.mxu0 0.0
    %2328 = vmatmul.mubr.f32.gmra.mrb[0].mxu0 %v862
    %v2329 = vpop.f32.mrb[0].mxu0
    %v2330 = vadd.f32 0.0, %v2329
    %v2331 = vpop.f32.mrb[0].mxu0
    %2332 = vmatprep.mubr.f32.mxu0 0.0
    %2333 = vmatmul.mubr.f32.gmra.mrb[0].mxu0 %v865
    %v2334 = vpop.f32.mrb[0].mxu0
    %v2335 = vadd.f32 0.0, %v2334
    %v2336 = vpop.f32.mrb[0].mxu0
    %2337 = vdwg.mxu0
    %v2339 = vsel %vm69, %v2186, 0
    %2341 = vmatprep.subr.mxu0 0.0
    %2342 = vmatpush1.msra.mxu0 %v203
    %2343 = vmatprep.subr.mxu0 0.0
    %2344 = vmatpush1.msra.mxu0 %v204
    %2345 = vmatprep.subr.mxu0 0.0
    %2346 = vmatpush1.msra.mxu0 0.0
    %2347 = vmatprep.subr.mxu0 0.0
    %2348 = vmatpush1.msra.mxu0 0.0
    %2349 = vmatprep.subr.mxu0 0.0
    %2350 = vmatpush1.msra.mxu0 0.0
    %2351 = vmatprep.subr.mxu0 0.0
    %2352 = vmatpush1.msra.mxu0 0.0
    %2353 = vmatprep.subr.mxu0 0.0
    %2354 = vmatpush1.msra.mxu0 0.0
    %2355 = vmatprep.subr.mxu0 0.0
    %2356 = vmatpush1.msra.mxu0 0.0
    %2357 = vmatprep.subr.mxu0 0.0
    %2358 = vmatpush1.msra.mxu0 0.0
    %2359 = vmatprep.subr.mxu0 0.0
    %2360 = vmatpush1.msra.mxu0 0.0
    %2361 = vmatprep.subr.mxu0 0.0
    %2362 = vmatpush1.msra.mxu0 0.0
    %2363 = vmatprep.subr.mxu0 0.0
    %2364 = vmatpush1.msra.mxu0 0.0
    %2365 = vmatprep.subr.mxu0 0.0
    %2366 = vmatpush1.msra.mxu0 0.0
    %2367 = vmatprep.subr.mxu0 0.0
    %2368 = vmatpush1.msra.mxu0 0.0
    %2369 = vmatprep.subr.mxu0 0.0
    %2370 = vmatpush1.msra.mxu0 0.0
    %2371 = vmatprep.subr.mxu0 0.0
    %2372 = vmatpush1.msra.mxu0 0.0
    %2373 = vmatprep.subr.mxu0 0.0
    %2374 = vmatpush1.msra.mxu0 0.0
    %2375 = vmatprep.subr.mxu0 0.0
    %2376 = vmatpush1.msra.mxu0 0.0
    %2377 = vmatprep.subr.mxu0 0.0
    %2378 = vmatpush1.msra.mxu0 0.0
    %2379 = vmatprep.subr.mxu0 0.0
    %2380 = vmatpush1.msra.mxu0 0.0
    %2381 = vmatprep.subr.mxu0 0.0
    %2382 = vmatpush1.msra.mxu0 0.0
    %2383 = vmatprep.subr.mxu0 0.0
    %2384 = vmatpush1.msra.mxu0 0.0
    %2385 = vmatprep.subr.mxu0 0.0
    %2386 = vmatpush1.msra.mxu0 0.0
    %2387 = vmatprep.subr.mxu0 0.0
    %2388 = vmatpush1.msra.mxu0 0.0
    %2389 = vmatprep.subr.mxu0 0.0
    %2390 = vmatpush1.msra.mxu0 0.0
    %2391 = vmatprep.subr.mxu0 0.0
    %2392 = vmatpush1.msra.mxu0 0.0
    %2393 = vmatprep.subr.mxu0 0.0
    %2394 = vmatpush1.msra.mxu0 0.0
    %2395 = vmatprep.subr.mxu0 0.0
    %2396 = vmatpush1.msra.mxu0 0.0
    %2397 = vmatprep.subr.mxu0 0.0
    %2398 = vmatpush1.msra.mxu0 0.0
    %2399 = vmatprep.subr.mxu0 0.0
    %2400 = vmatpush1.msra.mxu0 0.0
    %2401 = vmatprep.subr.mxu0 0.0
    %2402 = vmatpush1.msra.mxu0 0.0
    %2403 = vmatprep.subr.mxu0 0.0
    %2404 = vmatpush1.msra.mxu0 0.0
    %2405 = vmatprep.mubr.f32.mxu0 0.0
    %2406 = vmatmul.mubr.f32.gmra.mrb[0].mxu0 %v2339
    %v2407 = vpop.f32.mrb[0].mxu0
    %v2408 = vadd.f32 0.0, %v2407
    %v2409 = vpop.f32.mrb[0].mxu0
    %2410 = vdwg.mxu0
    %v2411 = vlaneseq
    %v2412 = vshrl.u32 %v2411, 7
    %v2413 = vsub.s32 0, %v2412
    %v2414 = vrot.slane %v2408, %v2413
    %v2415 = vmul.f32 %v185, %v2414
    %v2416 = vmul.f32 %v186, %v2414
    %2417 = vmatprep.subr.mxu0 0.0
    %2418 = vmatpush1.msra.mxu0 %v2260
    %2419 = vmatprep.subr.mxu0 0.0
    %2420 = vmatpush1.msra.mxu0 %v2265
    %2421 = vmatprep.subr.mxu0 0.0
    %2422 = vmatpush1.msra.mxu0 %v2270
    %2423 = vmatprep.subr.mxu0 0.0
    %2424 = vmatpush1.msra.mxu0 %v2275
    %2425 = vmatprep.subr.mxu0 0.0
    %2426 = vmatpush1.msra.mxu0 %v2280
    %2427 = vmatprep.subr.mxu0 0.0
    %2428 = vmatpush1.msra.mxu0 %v2285
    %2429 = vmatprep.subr.mxu0 0.0
    %2430 = vmatpush1.msra.mxu0 %v2290
    %2431 = vmatprep.subr.mxu0 0.0
    %2432 = vmatpush1.msra.mxu0 %v2295
    %2433 = vmatprep.subr.mxu0 0.0
    %2434 = vmatpush1.msra.mxu0 %v2300
    %2435 = vmatprep.subr.mxu0 0.0
    %2436 = vmatpush1.msra.mxu0 %v2305
    %2437 = vmatprep.subr.mxu0 0.0
    %2438 = vmatpush1.msra.mxu0 %v2310
    %2439 = vmatprep.subr.mxu0 0.0
    %2440 = vmatpush1.msra.mxu0 %v2315
    %2441 = vmatprep.subr.mxu0 0.0
    %2442 = vmatpush1.msra.mxu0 %v2320
    %2443 = vmatprep.subr.mxu0 0.0
    %2444 = vmatpush1.msra.mxu0 %v2325
    %2445 = vmatprep.subr.mxu0 0.0
    %2446 = vmatpush1.msra.mxu0 %v2330
    %2447 = vmatprep.subr.mxu0 0.0
    %2448 = vmatpush1.msra.mxu0 %v2335
    %2449 = vmatprep.subr.mxu0 0.0
    %2450 = vmatpush1.msra.mxu0 0.0
    %2451 = vmatprep.subr.mxu0 0.0
    %2452 = vmatpush1.msra.mxu0 0.0
    %2453 = vmatprep.subr.mxu0 0.0
    %2454 = vmatpush1.msra.mxu0 0.0
    %2455 = vmatprep.subr.mxu0 0.0
    %2456 = vmatpush1.msra.mxu0 0.0
    %2457 = vmatprep.subr.mxu0 0.0
    %2458 = vmatpush1.msra.mxu0 0.0
    %2459 = vmatprep.subr.mxu0 0.0
    %2460 = vmatpush1.msra.mxu0 0.0
    %2461 = vmatprep.subr.mxu0 0.0
    %2462 = vmatpush1.msra.mxu0 0.0
    %2463 = vmatprep.subr.mxu0 0.0
    %2464 = vmatpush1.msra.mxu0 0.0
    %2465 = vmatprep.subr.mxu0 0.0
    %2466 = vmatpush1.msra.mxu0 0.0
    %2467 = vmatprep.subr.mxu0 0.0
    %2468 = vmatpush1.msra.mxu0 0.0
    %2469 = vmatprep.subr.mxu0 0.0
    %2470 = vmatpush1.msra.mxu0 0.0
    %2471 = vmatprep.subr.mxu0 0.0
    %2472 = vmatpush1.msra.mxu0 0.0
    %2473 = vmatprep.subr.mxu0 0.0
    %2474 = vmatpush1.msra.mxu0 0.0
    %2475 = vmatprep.subr.mxu0 0.0
    %2476 = vmatpush1.msra.mxu0 0.0
    %2477 = vmatprep.subr.mxu0 0.0
    %2478 = vmatpush1.msra.mxu0 0.0
    %2479 = vmatprep.subr.mxu0 0.0
    %2480 = vmatpush1.msra.mxu0 0.0
    %2481 = vmatprep.mubr.f32.mxu0 0.0
    %2482 = vmatmul.mubr.f32.gmra.mrb[0].mxu0 %v2415
    %v2483 = vpop.f32.mrb[0].mxu0
    %v2484 = vadd.f32 0.0, %v2483
    %v2485 = vpop.f32.mrb[0].mxu0
    %2486 = vmatprep.mubr.f32.mxu0 0.0
    %2487 = vmatmul.mubr.f32.gmra.mrb[0].mxu0 %v2416
    %v2488 = vpop.f32.mrb[0].mxu0
    %v2489 = vadd.f32 0.0, %v2488
    %v2490 = vpop.f32.mrb[0].mxu0
    %2491 = vdwg.mxu0
    %v2493 = vlaneseq
    %v2494 = vshrl.u32 %v2493, 7
    %v2495 = vsub.s32 0, %v2494
    %v2496 = vrot.slane %v1641, %v2495
    %v2499 = vsel %vm234, %v2484, 0
    %v2502 = vsel %vm234, %v2489, 0
    %2504 = vmatprep.subr.mxu0 0.0
    %2505 = vmatpush1.msra.mxu0 %v1636
    %2506 = vmatprep.subr.mxu0 0.0
    %2507 = vmatpush1.msra.mxu0 %v1637
    %2508 = vmatprep.subr.mxu0 0.0
    %2509 = vmatpush1.msra.mxu0 %v1638
    %2510 = vmatprep.subr.mxu0 0.0
    %2511 = vmatpush1.msra.mxu0 %v1639
    %2512 = vmatprep.subr.mxu0 0.0
    %2513 = vmatpush1.msra.mxu0 0.0
    %2514 = vmatprep.subr.mxu0 0.0
    %2515 = vmatpush1.msra.mxu0 0.0
    %2516 = vmatprep.subr.mxu0 0.0
    %2517 = vmatpush1.msra.mxu0 0.0
    %2518 = vmatprep.subr.mxu0 0.0
    %2519 = vmatpush1.msra.mxu0 0.0
    %2520 = vmatprep.subr.mxu0 0.0
    %2521 = vmatpush1.msra.mxu0 0.0
    %2522 = vmatprep.subr.mxu0 0.0
    %2523 = vmatpush1.msra.mxu0 0.0
    %2524 = vmatprep.subr.mxu0 0.0
    %2525 = vmatpush1.msra.mxu0 0.0
    %2526 = vmatprep.subr.mxu0 0.0
    %2527 = vmatpush1.msra.mxu0 0.0
    %2528 = vmatprep.subr.mxu0 0.0
    %2529 = vmatpush1.msra.mxu0 0.0
    %2530 = vmatprep.subr.mxu0 0.0
    %2531 = vmatpush1.msra.mxu0 0.0
    %2532 = vmatprep.subr.mxu0 0.0
    %2533 = vmatpush1.msra.mxu0 0.0
    %2534 = vmatprep.subr.mxu0 0.0
    %2535 = vmatpush1.msra.mxu0 0.0
    %2536 = vmatprep.subr.mxu0 0.0
    %2537 = vmatpush1.msra.mxu0 0.0
    %2538 = vmatprep.subr.mxu0 0.0
    %2539 = vmatpush1.msra.mxu0 0.0
    %2540 = vmatprep.subr.mxu0 0.0
    %2541 = vmatpush1.msra.mxu0 0.0
    %2542 = vmatprep.subr.mxu0 0.0
    %2543 = vmatpush1.msra.mxu0 0.0
    %2544 = vmatprep.subr.mxu0 0.0
    %2545 = vmatpush1.msra.mxu0 0.0
    %2546 = vmatprep.subr.mxu0 0.0
    %2547 = vmatpush1.msra.mxu0 0.0
    %2548 = vmatprep.subr.mxu0 0.0
    %2549 = vmatpush1.msra.mxu0 0.0
    %2550 = vmatprep.subr.mxu0 0.0
    %2551 = vmatpush1.msra.mxu0 0.0
    %2552 = vmatprep.subr.mxu0 0.0
    %2553 = vmatpush1.msra.mxu0 0.0
    %2554 = vmatprep.subr.mxu0 0.0
    %2555 = vmatpush1.msra.mxu0 0.0
    %2556 = vmatprep.subr.mxu0 0.0
    %2557 = vmatpush1.msra.mxu0 0.0
    %2558 = vmatprep.subr.mxu0 0.0
    %2559 = vmatpush1.msra.mxu0 0.0
    %2560 = vmatprep.subr.mxu0 0.0
    %2561 = vmatpush1.msra.mxu0 0.0
    %2562 = vmatprep.subr.mxu0 0.0
    %2563 = vmatpush1.msra.mxu0 0.0
    %2564 = vmatprep.subr.mxu0 0.0
    %2565 = vmatpush1.msra.mxu0 0.0
    %2566 = vmatprep.subr.mxu0 0.0
    %2567 = vmatpush1.msra.mxu0 0.0
    %2568 = vmatprep.mubr.f32.mxu0 0.0
    %2569 = vmatmul.mubr.f32.gmra.mrb[0].mxu0 %v2499
    %v2570 = vpop.f32.mrb[0].mxu0
    %v2571 = vadd.f32 %v2496, %v2570
    %v2572 = vpop.f32.mrb[0].mxu0
    %2573 = vmatprep.mubr.f32.mxu0 0.0
    %2574 = vmatmul.mubr.f32.gmra.mrb[0].mxu0 %v2502
    %v2575 = vpop.f32.mrb[0].mxu0
    %v2576 = vadd.f32 %v2496, %v2575
    %v2577 = vpop.f32.mrb[0].mxu0
    %2578 = vdwg.mxu0
    %v2579 = vadd.f32 %v2571, %v1620
    %v2580 = vadd.f32 %v2576, %v1625
    %2581 = vmatprep.subr.mxu0 0.0
    %2582 = vmatpush1.msra.mxu0 %v2579
    %2583 = vmatprep.subr.mxu0 0.0
    %2584 = vmatpush1.msra.mxu0 %v2580
    %2585 = vmatprep.subr.mxu0 0.0
    %2586 = vmatpush1.msra.mxu0 0.0
    %2587 = vmatprep.subr.mxu0 0.0
    %2588 = vmatpush1.msra.mxu0 0.0
    %2589 = vmatprep.subr.mxu0 0.0
    %2590 = vmatpush1.msra.mxu0 0.0
    %2591 = vmatprep.subr.mxu0 0.0
    %2592 = vmatpush1.msra.mxu0 0.0
    %2593 = vmatprep.subr.mxu0 0.0
    %2594 = vmatpush1.msra.mxu0 0.0
    %2595 = vmatprep.subr.mxu0 0.0
    %2596 = vmatpush1.msra.mxu0 0.0
    %2597 = vmatprep.subr.mxu0 0.0
    %2598 = vmatpush1.msra.mxu0 0.0
    %2599 = vmatprep.subr.mxu0 0.0
    %2600 = vmatpush1.msra.mxu0 0.0
    %2601 = vmatprep.subr.mxu0 0.0
    %2602 = vmatpush1.msra.mxu0 0.0
    %2603 = vmatprep.subr.mxu0 0.0
    %2604 = vmatpush1.msra.mxu0 0.0
    %2605 = vmatprep.subr.mxu0 0.0
    %2606 = vmatpush1.msra.mxu0 0.0
    %2607 = vmatprep.subr.mxu0 0.0
    %2608 = vmatpush1.msra.mxu0 0.0
    %2609 = vmatprep.subr.mxu0 0.0
    %2610 = vmatpush1.msra.mxu0 0.0
    %2611 = vmatprep.subr.mxu0 0.0
    %2612 = vmatpush1.msra.mxu0 0.0
    %2613 = vmatprep.subr.mxu0 0.0
    %2614 = vmatpush1.msra.mxu0 0.0
    %2615 = vmatprep.subr.mxu0 0.0
    %2616 = vmatpush1.msra.mxu0 0.0
    %2617 = vmatprep.subr.mxu0 0.0
    %2618 = vmatpush1.msra.mxu0 0.0
    %2619 = vmatprep.subr.mxu0 0.0
    %2620 = vmatpush1.msra.mxu0 0.0
    %2621 = vmatprep.subr.mxu0 0.0
    %2622 = vmatpush1.msra.mxu0 0.0
    %2623 = vmatprep.subr.mxu0 0.0
    %2624 = vmatpush1.msra.mxu0 0.0
    %2625 = vmatprep.subr.mxu0 0.0
    %2626 = vmatpush1.msra.mxu0 0.0
    %2627 = vmatprep.subr.mxu0 0.0
    %2628 = vmatpush1.msra.mxu0 0.0
    %2629 = vmatprep.subr.mxu0 0.0
    %2630 = vmatpush1.msra.mxu0 0.0
    %2631 = vmatprep.subr.mxu0 0.0
    %2632 = vmatpush1.msra.mxu0 0.0
    %2633 = vmatprep.subr.mxu0 0.0
    %2634 = vmatpush1.msra.mxu0 0.0
    %2635 = vmatprep.subr.mxu0 0.0
    %2636 = vmatpush1.msra.mxu0 0.0
    %2637 = vmatprep.subr.mxu0 0.0
    %2638 = vmatpush1.msra.mxu0 0.0
    %2639 = vmatprep.subr.mxu0 0.0
    %2640 = vmatpush1.msra.mxu0 0.0
    %2641 = vmatprep.subr.mxu0 0.0
    %2642 = vmatpush1.msra.mxu0 0.0
    %2643 = vmatprep.subr.mxu0 0.0
    %2644 = vmatpush1.msra.mxu0 0.0
    %2645 = vmatprep.mubr.f32.mxu0 0.0
    %2646 = vmatmul.mubr.f32.gmra.mrb[0].mxu0 %v1256
    %v2647 = vpop.f32.mrb[0].mxu0
    %v2648 = vadd.f32 0.0, %v2647
    %v2649 = vpop.f32.mrb[0].mxu0
    %2650 = vmatprep.mubr.f32.mxu0 0.0
    %2651 = vmatmul.mubr.f32.gmra.mrb[0].mxu0 %v1259
    %v2652 = vpop.f32.mrb[0].mxu0
    %v2653 = vadd.f32 0.0, %v2652
    %v2654 = vpop.f32.mrb[0].mxu0
    %2655 = vdwg.mxu0
    %v2657 = vsel %vm234, %v2648, 0
    %v2660 = vsel %vm234, %v2653, 0
    %2662 = vmatprep.subr.mxu0 0.0
    %2663 = vmatpush1.msra.mxu0 %v1643
    %2664 = vmatprep.subr.mxu0 0.0
    %2665 = vmatpush1.msra.mxu0 %v1644
    %2666 = vmatprep.subr.mxu0 0.0
    %2667 = vmatpush1.msra.mxu0 %v1645
    %2668 = vmatprep.subr.mxu0 0.0
    %2669 = vmatpush1.msra.mxu0 %v1646
    %2670 = vmatprep.subr.mxu0 0.0
    %2671 = vmatpush1.msra.mxu0 0.0
    %2672 = vmatprep.subr.mxu0 0.0
    %2673 = vmatpush1.msra.mxu0 0.0
    %2674 = vmatprep.subr.mxu0 0.0
    %2675 = vmatpush1.msra.mxu0 0.0
    %2676 = vmatprep.subr.mxu0 0.0
    %2677 = vmatpush1.msra.mxu0 0.0
    %2678 = vmatprep.subr.mxu0 0.0
    %2679 = vmatpush1.msra.mxu0 0.0
    %2680 = vmatprep.subr.mxu0 0.0
    %2681 = vmatpush1.msra.mxu0 0.0
    %2682 = vmatprep.subr.mxu0 0.0
    %2683 = vmatpush1.msra.mxu0 0.0
    %2684 = vmatprep.subr.mxu0 0.0
    %2685 = vmatpush1.msra.mxu0 0.0
    %2686 = vmatprep.subr.mxu0 0.0
    %2687 = vmatpush1.msra.mxu0 0.0
    %2688 = vmatprep.subr.mxu0 0.0
    %2689 = vmatpush1.msra.mxu0 0.0
    %2690 = vmatprep.subr.mxu0 0.0
    %2691 = vmatpush1.msra.mxu0 0.0
    %2692 = vmatprep.subr.mxu0 0.0
    %2693 = vmatpush1.msra.mxu0 0.0
    %2694 = vmatprep.subr.mxu0 0.0
    %2695 = vmatpush1.msra.mxu0 0.0
    %2696 = vmatprep.subr.mxu0 0.0
    %2697 = vmatpush1.msra.mxu0 0.0
    %2698 = vmatprep.subr.mxu0 0.0
    %2699 = vmatpush1.msra.mxu0 0.0
    %2700 = vmatprep.subr.mxu0 0.0
    %2701 = vmatpush1.msra.mxu0 0.0
    %2702 = vmatprep.subr.mxu0 0.0
    %2703 = vmatpush1.msra.mxu0 0.0
    %2704 = vmatprep.subr.mxu0 0.0
    %2705 = vmatpush1.msra.mxu0 0.0
    %2706 = vmatprep.subr.mxu0 0.0
    %2707 = vmatpush1.msra.mxu0 0.0
    %2708 = vmatprep.subr.mxu0 0.0
    %2709 = vmatpush1.msra.mxu0 0.0
    %2710 = vmatprep.subr.mxu0 0.0
    %2711 = vmatpush1.msra.mxu0 0.0
    %2712 = vmatprep.subr.mxu0 0.0
    %2713 = vmatpush1.msra.mxu0 0.0
    %2714 = vmatprep.subr.mxu0 0.0
    %2715 = vmatpush1.msra.mxu0 0.0
    %2716 = vmatprep.subr.mxu0 0.0
    %2717 = vmatpush1.msra.mxu0 0.0
    %2718 = vmatprep.subr.mxu0 0.0
    %2719 = vmatpush1.msra.mxu0 0.0
    %2720 = vmatprep.subr.mxu0 0.0
    %2721 = vmatpush1.msra.mxu0 0.0
    %2722 = vmatprep.subr.mxu0 0.0
    %2723 = vmatpush1.msra.mxu0 0.0
    %2724 = vmatprep.subr.mxu0 0.0
    %2725 = vmatpush1.msra.mxu0 0.0
    %2726 = vmatprep.mubr.f32.mxu0 0.0
    %2727 = vmatmul.mubr.f32.gmra.mrb[0].mxu0 %v2657
    %v2728 = vpop.f32.mrb[0].mxu0
    %v2729 = vadd.f32 0.0, %v2728
    %v2730 = vpop.f32.mrb[0].mxu0
    %2731 = vmatprep.mubr.f32.mxu0 0.0
    %2732 = vmatmul.mubr.f32.gmra.mrb[0].mxu0 %v2660
    %v2733 = vpop.f32.mrb[0].mxu0
    %v2734 = vadd.f32 0.0, %v2733
    %v2735 = vpop.f32.mrb[0].mxu0
    %2736 = vdwg.mxu0
    %v2737 = vmul.f32 %v2729, 0.70710677
    %v2738 = vmul.f32 %v2734, 0.70710677
    %v2739 = vand.u32 2147483647, %v2737
    %v2740 = vand.u32 2147483647, %v2738
    %v2741 = vmul.f32 %v2739, 0.3275911
    %v2742 = vmul.f32 %v2740, 0.3275911
    %v2743 = vadd.f32 %v2741, 1.0
    %v2744 = vadd.f32 %v2742, 1.0
    %v2745 = vrcp.pop %v2743
    %v2746 = vrcp.pop %v2744
    %v2747 = vmul.f32 %v2745, 1.0614054
    %v2748 = vmul.f32 %v2746, 1.0614054
    %v2749 = vadd.f32 %v2747, -1.4531521
    %v2750 = vadd.f32 %v2748, -1.4531521
    %v2751 = vmul.f32 %v2749, %v2745
    %v2752 = vmul.f32 %v2750, %v2746
    %v2753 = vadd.f32 %v2751, 1.4214138
    %v2754 = vadd.f32 %v2752, 1.4214138
    %v2755 = vmul.f32 %v2753, %v2745
    %v2756 = vmul.f32 %v2754, %v2746
    %v2757 = vadd.f32 %v2755, -0.28449672
    %v2758 = vadd.f32 %v2756, -0.28449672
    %v2759 = vmul.f32 %v2757, %v2745
    %v2760 = vmul.f32 %v2758, %v2746
    %v2761 = vadd.f32 %v2759, 0.2548296
    %v2762 = vadd.f32 %v2760, 0.2548296
    %v2763 = vmul.f32 %v2761, %v2745
    %v2764 = vmul.f32 %v2762, %v2746
    %v2765 = vsub.f32 0.0, %v2739
    %v2766 = vsub.f32 0.0, %v2740
    %v2767 = vmul.f32 %v2765, %v2739
    %v2768 = vmul.f32 %v2766, %v2740
    %v2769 = vmul.f32 %v2767, 1.442695
    %v2770 = vpow.pop %v2769
    %v2771 = vmul.f32 %v2768, 1.442695
    %v2772 = vpow.pop %v2771
    %v2773 = vmul.f32 %v2763, %v2770
    %v2774 = vmul.f32 %v2764, %v2772
    %v2775 = vsub.f32 1.0, %v2773
    %v2776 = vsub.f32 1.0, %v2774
    %vm2777 = vcmp.ge.f32.partialorder %v2737, 0.0
    %vm2778 = vcmp.ge.f32.partialorder %v2738, 0.0
    %v2779 = vsub.f32 0.0, %v2775
    %v2780 = vsub.f32 0.0, %v2776
    %v2781 = vsel %vm2777, %v2775, %v2779
    %v2782 = vsel %vm2778, %v2776, %v2780
    %v2783 = vmul.f32 %v2729, 0.5
    %v2784 = vmul.f32 %v2734, 0.5
    %v2785 = vadd.f32 %v2781, 1.0
    %v2786 = vadd.f32 %v2782, 1.0
    %v2787 = vmul.f32 %v2783, %v2785
    %v2788 = vmul.f32 %v2784, %v2786
    %v2790 = vsel %vm1469, %v2787, 0
    %v2793 = vsel %vm1469, %v2788, 0
    %2795 = vmatprep.subr.mxu0 0.0
    %2796 = vmatpush1.msra.mxu0 %v1648
    %2797 = vmatprep.subr.mxu0 0.0
    %2798 = vmatpush1.msra.mxu0 %v1649
    %2799 = vmatprep.subr.mxu0 0.0
    %2800 = vmatpush1.msra.mxu0 %v1650
    %2801 = vmatprep.subr.mxu0 0.0
    %2802 = vmatpush1.msra.mxu0 %v1651
    %2803 = vmatprep.subr.mxu0 0.0
    %2804 = vmatpush1.msra.mxu0 %v1652
    %2805 = vmatprep.subr.mxu0 0.0
    %2806 = vmatpush1.msra.mxu0 %v1653
    %2807 = vmatprep.subr.mxu0 0.0
    %2808 = vmatpush1.msra.mxu0 %v1654
    %2809 = vmatprep.subr.mxu0 0.0
    %2810 = vmatpush1.msra.mxu0 %v1655
    %2811 = vmatprep.subr.mxu0 0.0
    %2812 = vmatpush1.msra.mxu0 0.0
    %2813 = vmatprep.subr.mxu0 0.0
    %2814 = vmatpush1.msra.mxu0 0.0
    %2815 = vmatprep.subr.mxu0 0.0
    %2816 = vmatpush1.msra.mxu0 0.0
    %2817 = vmatprep.subr.mxu0 0.0
    %2818 = vmatpush1.msra.mxu0 0.0
    %2819 = vmatprep.subr.mxu0 0.0
    %2820 = vmatpush1.msra.mxu0 0.0
    %2821 = vmatprep.subr.mxu0 0.0
    %2822 = vmatpush1.msra.mxu0 0.0
    %2823 = vmatprep.subr.mxu0 0.0
    %2824 = vmatpush1.msra.mxu0 0.0
    %2825 = vmatprep.subr.mxu0 0.0
    %2826 = vmatpush1.msra.mxu0 0.0
    %2827 = vmatprep.subr.mxu0 0.0
    %2828 = vmatpush1.msra.mxu0 0.0
    %2829 = vmatprep.subr.mxu0 0.0
    %2830 = vmatpush1.msra.mxu0 0.0
    %2831 = vmatprep.subr.mxu0 0.0
    %2832 = vmatpush1.msra.mxu0 0.0
    %2833 = vmatprep.subr.mxu0 0.0
    %2834 = vmatpush1.msra.mxu0 0.0
    %2835 = vmatprep.subr.mxu0 0.0
    %2836 = vmatpush1.msra.mxu0 0.0
    %2837 = vmatprep.subr.mxu0 0.0
    %2838 = vmatpush1.msra.mxu0 0.0
    %2839 = vmatprep.subr.mxu0 0.0
    %2840 = vmatpush1.msra.mxu0 0.0
    %2841 = vmatprep.subr.mxu0 0.0
    %2842 = vmatpush1.msra.mxu0 0.0
    %2843 = vmatprep.subr.mxu0 0.0
    %2844 = vmatpush1.msra.mxu0 0.0
    %2845 = vmatprep.subr.mxu0 0.0
    %2846 = vmatpush1.msra.mxu0 0.0
    %2847 = vmatprep.subr.mxu0 0.0
    %2848 = vmatpush1.msra.mxu0 0.0
    %2849 = vmatprep.subr.mxu0 0.0
    %2850 = vmatpush1.msra.mxu0 0.0
    %2851 = vmatprep.subr.mxu0 0.0
    %2852 = vmatpush1.msra.mxu0 0.0
    %2853 = vmatprep.subr.mxu0 0.0
    %2854 = vmatpush1.msra.mxu0 0.0
    %2855 = vmatprep.subr.mxu0 0.0
    %2856 = vmatpush1.msra.mxu0 0.0
    %2857 = vmatprep.subr.mxu0 0.0
    %2858 = vmatpush1.msra.mxu0 0.0
    %2859 = vmatprep.mubr.f32.mxu0 0.0
    %2860 = vmatmul.mubr.f32.gmra.mrb[0].mxu0 %v2790
    %v2861 = vpop.f32.mrb[0].mxu0
    %v2862 = vadd.f32 0.0, %v2861
    %v2863 = vpop.f32.mrb[0].mxu0
    %2864 = vmatprep.mubr.f32.mxu0 0.0
    %2865 = vmatmul.mubr.f32.gmra.mrb[0].mxu0 %v2793
    %v2866 = vpop.f32.mrb[0].mxu0
    %v2867 = vadd.f32 0.0, %v2866
    %v2868 = vpop.f32.mrb[0].mxu0
    %2869 = vdwg.mxu0
    %v2870 = vadd.f32 %v2648, %v2862
    %v2871 = vadd.f32 %v2653, %v2867
    %2872 = vmatprep.subr.mxu0 0.0
    %2873 = vmatpush1.msra.mxu0 %v2870
    %2874 = vmatprep.subr.mxu0 0.0
    %2875 = vmatpush1.msra.mxu0 %v2871
    %2876 = vmatprep.subr.mxu0 0.0
    %2877 = vmatpush1.msra.mxu0 0.0
    %2878 = vmatprep.subr.mxu0 0.0
    %2879 = vmatpush1.msra.mxu0 0.0
    %2880 = vmatprep.subr.mxu0 0.0
    %2881 = vmatpush1.msra.mxu0 0.0
    %2882 = vmatprep.subr.mxu0 0.0
    %2883 = vmatpush1.msra.mxu0 0.0
    %2884 = vmatprep.subr.mxu0 0.0
    %2885 = vmatpush1.msra.mxu0 0.0
    %2886 = vmatprep.subr.mxu0 0.0
    %2887 = vmatpush1.msra.mxu0 0.0
    %2888 = vmatprep.subr.mxu0 0.0
    %2889 = vmatpush1.msra.mxu0 0.0
    %2890 = vmatprep.subr.mxu0 0.0
    %2891 = vmatpush1.msra.mxu0 0.0
    %2892 = vmatprep.subr.mxu0 0.0
    %2893 = vmatpush1.msra.mxu0 0.0
    %2894 = vmatprep.subr.mxu0 0.0
    %2895 = vmatpush1.msra.mxu0 0.0
    %2896 = vmatprep.subr.mxu0 0.0
    %2897 = vmatpush1.msra.mxu0 0.0
    %2898 = vmatprep.subr.mxu0 0.0
    %2899 = vmatpush1.msra.mxu0 0.0
    %2900 = vmatprep.subr.mxu0 0.0
    %2901 = vmatpush1.msra.mxu0 0.0
    %2902 = vmatprep.subr.mxu0 0.0
    %2903 = vmatpush1.msra.mxu0 0.0
    %2904 = vmatprep.subr.mxu0 0.0
    %2905 = vmatpush1.msra.mxu0 0.0
    %2906 = vmatprep.subr.mxu0 0.0
    %2907 = vmatpush1.msra.mxu0 0.0
    %2908 = vmatprep.subr.mxu0 0.0
    %2909 = vmatpush1.msra.mxu0 0.0
    %2910 = vmatprep.subr.mxu0 0.0
    %2911 = vmatpush1.msra.mxu0 0.0
    %2912 = vmatprep.subr.mxu0 0.0
    %2913 = vmatpush1.msra.mxu0 0.0
    %2914 = vmatprep.subr.mxu0 0.0
    %2915 = vmatpush1.msra.mxu0 0.0
    %2916 = vmatprep.subr.mxu0 0.0
    %2917 = vmatpush1.msra.mxu0 0.0
    %2918 = vmatprep.subr.mxu0 0.0
    %2919 = vmatpush1.msra.mxu0 0.0
    %2920 = vmatprep.subr.mxu0 0.0
    %2921 = vmatpush1.msra.mxu0 0.0
    %2922 = vmatprep.subr.mxu0 0.0
    %2923 = vmatpush1.msra.mxu0 0.0
    %2924 = vmatprep.subr.mxu0 0.0
    %2925 = vmatpush1.msra.mxu0 0.0
    %2926 = vmatprep.subr.mxu0 0.0
    %2927 = vmatpush1.msra.mxu0 0.0
    %2928 = vmatprep.subr.mxu0 0.0
    %2929 = vmatpush1.msra.mxu0 0.0
    %2930 = vmatprep.subr.mxu0 0.0
    %2931 = vmatpush1.msra.mxu0 0.0
    %2932 = vmatprep.subr.mxu0 0.0
    %2933 = vmatpush1.msra.mxu0 0.0
    %2934 = vmatprep.subr.mxu0 0.0
    %2935 = vmatpush1.msra.mxu0 0.0
    %2936 = vmatprep.mubr.f32.mxu0 0.0
    %2937 = vmatmul.mubr.f32.gmra.mrb[0].mxu0 %v1256
    %v2938 = vpop.f32.mrb[0].mxu0
    %v2939 = vadd.f32 0.0, %v2938
    %v2940 = vpop.f32.mrb[0].mxu0
    %2941 = vmatprep.mubr.f32.mxu0 0.0
    %2942 = vmatmul.mubr.f32.gmra.mrb[0].mxu0 %v1259
    %v2943 = vpop.f32.mrb[0].mxu0
    %v2944 = vadd.f32 0.0, %v2943
    %v2945 = vpop.f32.mrb[0].mxu0
    %2946 = vdwg.mxu0
    %v2947 = vsel %vm234, %v2939, 0.0
    %2948 = vadd.xlane.f32.xlu0 %v2947
    %v2949 = vpop.xlane.xlu0 %2948
    %v2950 = vsel %vm234, %v2944, 0.0
    %2951 = vadd.xlane.f32.xlu0 %v2950
    %v2952 = vpop.xlane.xlu0 %2951
    %v2953 = vrcp.pop 32.0
    %v2954 = vmul.f32 %v2949, %v2953
    %v2955 = vmul.f32 %v2952, %v2953
    %v2956 = vsub.f32 %v2939, %v2954
    %v2957 = vsub.f32 %v2944, %v2955
    %v2958 = vmul.f32 %v2956, %v2956
    %v2959 = vmul.f32 %v2957, %v2957
    %v2960 = vsel %vm234, %v2958, 0.0
    %2961 = vadd.xlane.f32.xlu0 %v2960
    %v2962 = vpop.xlane.xlu0 %2961
    %v2963 = vsel %vm234, %v2959, 0.0
    %2964 = vadd.xlane.f32.xlu0 %v2963
    %v2965 = vpop.xlane.xlu0 %2964
    %v2966 = vmul.f32 %v2962, %v2953
    %v2967 = vmul.f32 %v2965, %v2953
    %v2968 = vadd.f32 %v2966, 1e-05
    %v2969 = vadd.f32 %v2967, 1e-05
    %v2970 = vrsqrt.pop %v2968
    %v2971 = vrsqrt.pop %v2969
    %v2972 = vmul.f32 %v2956, %v2970
    %v2973 = vmul.f32 %v2957, %v2971
    %v2974 = vld [vmem:[%s17] sm:$0x1]
    %v2976 = vlaneseq
    %v2977 = vshrl.u32 %v2976, 7
    %v2978 = vsub.s32 0, %v2977
    %v2979 = vrot.slane %v2974, %v2978
    %v2981 = vmul.f32 %v2972, %v2979
    %v2982 = vmul.f32 %v2973, %v2979
    %v2983 = vld [vmem:[%s18] sm:$0x1]
    %v2985 = vlaneseq
    %v2986 = vshrl.u32 %v2985, 7
    %v2987 = vsub.s32 0, %v2986
    %v2988 = vrot.slane %v2983, %v2987
    %v2990 = vadd.f32 %v2981, %v2988
    %v2991 = vadd.f32 %v2982, %v2988
    %2992 = vst.msk [vmem:[#allocation2] sm:$0xff] %vm234, %v2990
    %2993 = vst.msk [vmem:[#allocation2 + $0x8] sm:$0xff] %vm234, %v2991
    // Predicated region
    $region78: #{encoder_forward.1} parent=1 // pred_check
      _
    $region79: #{encoder_forward.1} parent=1 // pred_check_branch
      %2995 = sbr.rel (0) target = $region81
    $region80: #{encoder_forward.1} parent=1 // pred_region
      %s2997 = ssub.s32 256, 256
      %2998 = vsyncadd [#allocation3], %s2997
      %s2999 = sshll.u32 [#allocation2], 4
      %s3000 = int_to_ptr.vmem [resolvable:$true] %s2999
      %3005 = dma.vmem_to_hbm [thread:$0]  %s3000, 256, %s19, [#allocation3], 128, 128, 8
    $region81: #{encoder_forward.1} parent=1 // pred_fallthru
      _
    // Predicated region
    $region82: #{encoder_forward.1} parent=1 // pred_check
      _
    $region83: #{encoder_forward.1} parent=1 // pred_check_branch
      %3007 = sbr.rel (0) target = $region85
    $region84: #{encoder_forward.1} parent=1 // pred_region
      %3008 = dma.done [#allocation3], 256
    $region85: #{encoder_forward.1} parent=1 // pred_fallthru
      _
    %3009 = vsyncpa [#allocation3], 1

</llo_original>
